<compile_context>
chip_gen: v7x
topology: tpu7x:2x2x1
jax: 0.10.0
libtpu: 0.0.40
codegen_flags: <defaults>
</compile_context>

<pallas_src>
import functools

import jax
import jax.numpy as jnp
from jax.experimental import pallas as pl
from jax.experimental.pallas import tpu as pltpu


def _round_up(v, m):
    return (v + m - 1) // m * m


# ---------------------------------------------------------------------------
# Pallas kernels
# ---------------------------------------------------------------------------
def _pconv_gemm_kernel(x_ref, w_ref, ratio_ref, m_ref, y_ref, st_ref, acc_ref):
    """Fused partial-conv GEMM tile.

    x:(TM,TK) bf16 im2col of (input*mask)   w:(TK,Cp) bf16
    ratio,m:(TM,1) f32 (partial-conv ratio / RN fg mask per output pixel)
    y:(TM,Cp) f32 = (x@w)*ratio             st:(8,Cp) per-tile RN partial sums
    acc: f32 VMEM accumulator across the K grid axis.
    """
    kk = pl.program_id(1)

    @pl.when(kk == 0)
    def _():
        acc_ref[...] = jnp.zeros_like(acc_ref)

    acc_ref[...] += jnp.dot(x_ref[...], w_ref[...],
                            preferred_element_type=jnp.float32)

    @pl.when(kk == pl.num_programs(1) - 1)
    def _():
        y = acc_ref[...] * ratio_ref[...]          # partial-conv re-normalization
        y_ref[...] = y.astype(y_ref.dtype)

        m = m_ref[...]                             # (TM, 1)
        ym = y * m                                 # foreground region y*m
        yb = y - ym                                # background region y*(1-m)
        s0 = jnp.sum(ym, axis=0, keepdims=True)            # sum fg
        s1 = jnp.sum(ym * ym, axis=0, keepdims=True)        # sumsq fg
        s2 = jnp.sum(yb, axis=0, keepdims=True)             # sum bg
        s3 = jnp.sum(yb * yb, axis=0, keepdims=True)        # sumsq bg
        s4 = jnp.sum(m * ym, axis=0, keepdims=True)         # cross fg (m^2*y)
        s5 = jnp.sum((1.0 - m) * yb, axis=0, keepdims=True)  # cross bg
        z = jnp.zeros_like(s0)
        st_ref[...] = jnp.concatenate([s0, s1, s2, s3, s4, s5, z, z], axis=0)


def _rn_act_kernel(y_ref, m_ref, p_ref, o_ref, *, act):
    """RN_B normalize + learned fg/bg affine + activation.

    p rows: [a_f, mu_f, a_b, mu_b, 1+gamma_f, 1+gamma_b, beta_f+beta_b, 0]
    rn  = m*a_f*(y-mu_f) + (1-m)*a_b*(y-mu_b)
    out = rn*(m*(1+g_f) + (1-m)*(1+g_b)) + beta_f + beta_b
    """
    y = y_ref[...]
    m = m_ref[...]
    a_f, mu_f = p_ref[0:1, :], p_ref[1:2, :]
    a_b, mu_b = p_ref[2:3, :], p_ref[3:4, :]
    g_f, g_b = p_ref[4:5, :], p_ref[5:6, :]
    beta = p_ref[6:7, :]

    one_m = 1.0 - m
    rn = m * (a_f * (y - mu_f)) + one_m * (a_b * (y - mu_b))
    out = rn * (m * g_f + one_m * g_b) + beta

    if act == "ReLU":
        out = jnp.maximum(out, 0.0)
    elif act == "LeakyReLU":
        out = jnp.where(out >= 0.0, out, 0.2 * out)
    elif act == "Tanh":
        out = jnp.tanh(out)
    o_ref[...] = out.astype(o_ref.dtype)


# ---------------------------------------------------------------------------
# Plain-JAX glue: im2col patch extraction
# ---------------------------------------------------------------------------
def _im2col(x, k, stride, pad):
    """x: (N, H, W, C) -> ((N*Ho*Wo, k*k*C), (N, Ho, Wo)). Row order (kh,kw,c)."""
    N, H, W, C = x.shape
    xp = jnp.pad(x, ((0, 0), (pad, pad), (pad, pad), (0, 0)))
    Ho = (H + 2 * pad - k) // stride + 1
    Wo = (W + 2 * pad - k) // stride + 1
    cols = []
    for kh in range(k):
        for kw in range(k):
            cols.append(
                xp[:, kh:kh + stride * Ho:stride, kw:kw + stride * Wo:stride, :])
    patches = jnp.stack(cols, axis=3)              # (N, Ho, Wo, k*k, C)
    return patches.reshape(N * Ho * Wo, k * k * C), (N, Ho, Wo)


# ---------------------------------------------------------------------------
# PConvLayer forward
# ---------------------------------------------------------------------------
def pconv_layer_forward(x, mask, params, *, kernel_size, stride, padding,
                        act="ReLU", use_norm=True, eps=1e-5):
    """x: (N,Cin,H,W), mask: (N,1,H,W).  Returns (out NCHW, updated_mask NCHW)."""
    N, Cin, H, W = x.shape
    Cout = params["w"].shape[0]
    k = kernel_size

    x_nhwc = jnp.transpose(x, (0, 2, 3, 1))
    m_nhwc = jnp.transpose(mask, (0, 2, 3, 1))                 # (N,H,W,1)

    # ---- partial-conv mask bookkeeping (1 channel, tiny, plain JAX) -------
    mcols, (_, Ho, Wo) = _im2col(m_nhwc, k, stride, padding)
    update_sum = jnp.sum(mcols, axis=1)                        # (M,)
    winsize = float(k * k)
    mask_ratio = winsize / (update_sum + 1e-8)
    update_mask = jnp.clip(update_sum, 0.0, 1.0)
    mask_ratio = mask_ratio * update_mask

    # ---- im2col of the masked input ---------------------------------------
    cols, _ = _im2col(x_nhwc * m_nhwc, k, stride, padding)     # (M, K)
    M, K = cols.shape

    # ---- RN mask = nearest-resize of the ORIGINAL mask to output res ------
    ih = jnp.clip(jnp.floor(jnp.arange(Ho) * (H / Ho)).astype(jnp.int32), 0, H - 1)
    iw = jnp.clip(jnp.floor(jnp.arange(Wo) * (W / Wo)).astype(jnp.int32), 0, W - 1)
    m_rn = mask[:, 0][:, ih][:, :, iw].reshape(M, 1)           # (M,1)

    # ---- tiling / padding (lane-dense channels, row tiles, K tiles) -------
    if M >= 2048:
        TM = 512
    elif M >= 512:
        TM = 256
    else:
        TM = _round_up(M, 8)
    Mp = _round_up(M, TM)
    Cp = _round_up(Cout, 128)
    Kp = _round_up(K, 128)
    if Kp > 1024:
        Kp = _round_up(K, 512)
        TK = 512
    else:
        TK = Kp
    nm, nk = Mp // TM, Kp // TK

    cols_p = jnp.pad(cols.astype(jnp.bfloat16), ((0, Mp - M), (0, Kp - K)))
    w_mat = jnp.transpose(params["w"], (2, 3, 1, 0)).reshape(K, Cout)
    w_p = jnp.pad(w_mat.astype(jnp.bfloat16), ((0, Kp - K), (0, Cp - Cout)))
    ratio_p = jnp.pad(mask_ratio.reshape(M, 1), ((0, Mp - M), (0, 0)))
    mrow_p = jnp.pad(m_rn, ((0, Mp - M), (0, 0)))

    cparams = pltpu.CompilerParams(
        dimension_semantics=("parallel", "arbitrary"),
        vmem_limit_bytes=32 * 1024 * 1024)

    y, stats = pl.pallas_call(
        _pconv_gemm_kernel,
        out_shape=(jax.ShapeDtypeStruct((Mp, Cp), jnp.float32),
                   jax.ShapeDtypeStruct((nm * 8, Cp), jnp.float32)),
        grid_spec=pltpu.PrefetchScalarGridSpec(
            num_scalar_prefetch=0,
            grid=(nm, nk),
            in_specs=[
                pl.BlockSpec((TM, TK), lambda i, kk: (i, kk)),
                pl.BlockSpec((TK, Cp), lambda i, kk: (kk, 0)),
                pl.BlockSpec((TM, 1), lambda i, kk: (i, 0)),
                pl.BlockSpec((TM, 1), lambda i, kk: (i, 0)),
            ],
            out_specs=[
                pl.BlockSpec((TM, Cp), lambda i, kk: (i, 0)),
                pl.BlockSpec((8, Cp), lambda i, kk: (i, 0)),
            ],
            scratch_shapes=[pltpu.VMEM((TM, Cp), jnp.float32)],
        ),
        compiler_params=cparams,
    )(cols_p, w_p, ratio_p, mrow_p)

    # ---- per-channel region statistics -> normalization coefficients ------
    s = jnp.sum(stats.reshape(nm, 8, Cp), axis=0)
    sum_f, sq_f, sum_b, sq_b, cr_f, cr_b = s[0], s[1], s[2], s[3], s[4], s[5]
    m_flat = m_rn[:, 0]
    T = float(M)
    S_f = jnp.sum(m_flat)
    S_b = T - S_f
    Sm2 = jnp.sum(m_flat * m_flat)
    Sb2 = jnp.sum((1.0 - m_flat) ** 2)
    S_f = jnp.where(S_f == 0, 1.0, S_f)            # Sr[Sr==0] = 1
    S_b = jnp.where(S_b == 0, 1.0, S_b)
    mu_f = sum_f / S_f
    mu_b = sum_b / S_b
    var_f = jnp.maximum(sq_f - 2.0 * mu_f * cr_f + mu_f * mu_f * Sm2, 0.0) / T
    var_b = jnp.maximum(sq_b - 2.0 * mu_b * cr_b + mu_b * mu_b * Sb2, 0.0) / T
    a_f = jnp.sqrt(S_f / T) * jax.lax.rsqrt(var_f + eps)
    a_b = jnp.sqrt(S_b / T) * jax.lax.rsqrt(var_b + eps)

    zero = jnp.zeros((Cp,), jnp.float32)
    one = jnp.ones((Cp,), jnp.float32)
    if use_norm:
        gf = jnp.pad(params["fg_gamma"].astype(jnp.float32), (0, Cp - Cout))
        gb = jnp.pad(params["bg_gamma"].astype(jnp.float32), (0, Cp - Cout))
        bf = jnp.pad(params["fg_beta"].astype(jnp.float32), (0, Cp - Cout))
        bb = jnp.pad(params["bg_beta"].astype(jnp.float32), (0, Cp - Cout))
        rows = [a_f, mu_f, a_b, mu_b, 1.0 + gf, 1.0 + gb, bf + bb, zero]
    else:
        rows = [one, zero, one, zero, one, one, zero, zero]   # identity -> act(y)
    P = jnp.stack(rows, axis=0)                                # (8, Cp)

    # ---- fused normalize + affine + activation -----------------------------
    out = pl.pallas_call(
        functools.partial(_rn_act_kernel, act=act),
        out_shape=jax.ShapeDtypeStruct((Mp, Cp), jnp.float32),
        grid_spec=pltpu.PrefetchScalarGridSpec(
            num_scalar_prefetch=0,
            grid=(nm,),
            in_specs=[
                pl.BlockSpec((TM, Cp), lambda i: (i, 0)),
                pl.BlockSpec((TM, 1), lambda i: (i, 0)),
                pl.BlockSpec((8, Cp), lambda i: (0, 0)),
            ],
            out_specs=pl.BlockSpec((TM, Cp), lambda i: (i, 0)),
        ),
        compiler_params=pltpu.CompilerParams(
            dimension_semantics=("parallel",),
            vmem_limit_bytes=32 * 1024 * 1024),
    )(y, mrow_p, P)

    x_out = out[:M, :Cout].reshape(N, Ho, Wo, Cout)
    x_out = jnp.transpose(x_out, (0, 3, 1, 2))                 # NCHW
    mask_update = update_mask.reshape(N, 1, Ho, Wo)
    return x_out, mask_update


# ---------------------------------------------------------------------------
# Pure-JAX reference (mirrors the PyTorch math; bf16-rounded GEMM operands)
# ---------------------------------------------------------------------------
def _reference_pconv_layer(x, mask, params, *, kernel_size, stride, padding,
                           act, use_norm, eps=1e-5):
    N, Cin, H, W = x.shape
    Cout = params["w"].shape[0]
    k = kernel_size
    x_nhwc = jnp.transpose(x, (0, 2, 3, 1))
    m_nhwc = jnp.transpose(mask, (0, 2, 3, 1))

    mcols, (_, Ho, Wo) = _im2col(m_nhwc, k, stride, padding)
    update_sum = jnp.sum(mcols, axis=1).reshape(N, 1, Ho, Wo)
    ratio = (k * k) / (update_sum + 1e-8)
    update_mask = jnp.clip(update_sum, 0.0, 1.0)
    ratio = ratio * update_mask

    cols, _ = _im2col(x_nhwc * m_nhwc, k, stride, padding)
    w_mat = jnp.transpose(params["w"], (2, 3, 1, 0)).reshape(k * k * Cin, Cout)
    raw = jnp.dot(cols.astype(jnp.bfloat16), w_mat.astype(jnp.bfloat16),
                  preferred_element_type=jnp.float32)
    y = jnp.transpose(raw.reshape(N, Ho, Wo, Cout), (0, 3, 1, 2)) * ratio

    if use_norm:
        ih = jnp.clip(jnp.floor(jnp.arange(Ho) * (H / Ho)).astype(jnp.int32), 0, H - 1)
        iw = jnp.clip(jnp.floor(jnp.arange(Wo) * (W / Wo)).astype(jnp.int32), 0, W - 1)
        m = mask[:, :, ih][:, :, :, iw]                        # (N,1,Ho,Wo)
        T = N * Ho * Wo

        def rn(region, rmask):
            s = jnp.sum(region, axis=(0, 2, 3))
            Sr = jnp.sum(rmask)
            Sr = jnp.where(Sr == 0, 1.0, Sr)
            mu = s / Sr
            filled = region + (1.0 - rmask) * mu[None, :, None, None]
            mean = jnp.mean(filled, axis=(0, 2, 3), keepdims=True)
            var = jnp.mean((filled - mean) ** 2, axis=(0, 2, 3), keepdims=True)
            return (filled - mean) * jax.lax.rsqrt(var + eps) * jnp.sqrt(Sr / T)

        rn_x = rn(y * m, m) + rn(y * (1.0 - m), 1.0 - m)
        gf = params["fg_gamma"][None, :, None, None]
        bf = params["fg_beta"][None, :, None, None]
        gb = params["bg_gamma"][None, :, None, None]
        bb = params["bg_beta"][None, :, None, None]
        y = (rn_x * m) * (1.0 + gf) + bf + (rn_x * (1.0 - m)) * (1.0 + gb) + bb

    if act == "ReLU":
        y = jnp.maximum(y, 0.0)
    elif act == "LeakyReLU":
        y = jnp.where(y >= 0.0, y, 0.2 * y)
    elif act == "Tanh":
        y = jnp.tanh(y)
    return y, update_mask


# ---------------------------------------------------------------------------
# Deterministic parameter init (shapes follow the module's __init__)
# ---------------------------------------------------------------------------
def init_pconv_params(key, in_ch, out_ch, k):
    kw, kg1, kb1, kg2, kb2 = jax.random.split(key, 5)
    return {
        "w": jax.random.normal(kw, (out_ch, in_ch, k, k), jnp.float32) * 0.1,
        "fg_gamma": 0.1 * jax.random.normal(kg1, (out_ch,), jnp.float32),
        "fg_beta": 0.1 * jax.random.normal(kb1, (out_ch,), jnp.float32),
        "bg_gamma": 0.1 * jax.random.normal(kg2, (out_ch,), jnp.float32),
        "bg_beta": 0.1 * jax.random.normal(kb2, (out_ch,), jnp.float32),
    }


if __name__ == "__main__":
    N, Cin, H, W = 2, 4, 16, 16
    Cout, KSIZE, STRIDE, PAD = 32, 3, 1, 1

    key = jax.random.PRNGKey(0)
    kx, kp = jax.random.split(key)
    x = jax.random.normal(kx, (N, Cin, H, W), jnp.float32)
    mask = jnp.ones((N, 1, H, W), jnp.float32)
    mask = mask.at[:, :, 4:10, 5:12].set(0.0)      # rectangular hole (binary mask)
    params = init_pconv_params(kp, Cin, Cout, KSIZE)

    fwd = jax.jit(functools.partial(
        pconv_layer_forward, kernel_size=KSIZE, stride=STRIDE, padding=PAD,
        act="LeakyReLU", use_norm=True))
    y, mask_up = fwd(x, mask, params)
    y, mask_up = jax.block_until_ready((y, mask_up))

    assert y.shape == (N, Cout, H, W), y.shape
    assert mask_up.shape == (N, 1, H, W), mask_up.shape

    y_ref, mask_up_ref = _reference_pconv_layer(
        x, mask, params, kernel_size=KSIZE, stride=STRIDE, padding=PAD,
        act="LeakyReLU", use_norm=True)
    assert bool(jnp.allclose(mask_up, mask_up_ref, atol=1e-6))
    assert bool(jnp.allclose(y, y_ref, rtol=2e-3, atol=2e-3)), \
        float(jnp.max(jnp.abs(y - y_ref)))

    print("KERNEL_OK")
</pallas_src>

<mosaic_0001>
module attributes {stable_mosaic.version = 11 : i64} {
  func.func @_pconv_gemm_kernel(%arg0: i32, %arg1: i32, %arg2: memref<256x128xbf16, #tpu.memory_space<vmem>>, %arg3: memref<128x128xbf16, #tpu.memory_space<vmem>>, %arg4: memref<256x1xf32, #tpu.memory_space<vmem>>, %arg5: memref<256x1xf32, #tpu.memory_space<vmem>>, %arg6: memref<256x128xf32, #tpu.memory_space<vmem>>, %arg7: memref<8x128xf32, #tpu.memory_space<vmem>>, %arg8: memref<256x128xf32, #tpu.memory_space<vmem>>) attributes {dimension_semantics = [#tpu.dimension_semantics<parallel>, #tpu.dimension_semantics<arbitrary>], iteration_bounds = array<i64: 2, 1>, scalar_prefetch = 0 : i64, scratch_operands = 1 : i64, tpu.core_type = #tpu.core_type<tc>, window_params = [{transform_indices = @transform_0, window_bounds = array<i64: 256, 128>}, {transform_indices = @transform_1, window_bounds = array<i64: 128, 128>}, {transform_indices = @transform_2, window_bounds = array<i64: 256, 1>}, {transform_indices = @transform_3, window_bounds = array<i64: 256, 1>}, {transform_indices = @transform_4, window_bounds = array<i64: 256, 128>}, {transform_indices = @transform_5, window_bounds = array<i64: 8, 128>}]} {
    %c0_i32 = arith.constant 0 : i32
    %0 = arith.cmpi eq, %arg1, %c0_i32 : i32
    %1 = arith.extui %0 : i1 to i32
    %c0_i32_0 = arith.constant 0 : i32
    %2 = arith.cmpi ne, %1, %c0_i32_0 : i32
    scf.if %2 {
      %cst_10 = arith.constant 0.000000e+00 : f32
      %12 = vector.broadcast %cst_10 : f32 to vector<256x128xf32>
      %c0_11 = arith.constant 0 : index
      %c0_12 = arith.constant 0 : index
      %13 = vector.load %arg8[%c0_11, %c0_12] : memref<256x128xf32, #tpu.memory_space<vmem>>, vector<256x128xf32>
      tpu.vector_store %arg8[%c0_11, %c0_12], %12 {strides = array<i32>} : memref<256x128xf32, #tpu.memory_space<vmem>>, vector<256x128xf32>,
    } else {
    }
    %c0 = arith.constant 0 : index
    %c0_1 = arith.constant 0 : index
    %3 = vector.load %arg8[%c0, %c0_1] : memref<256x128xf32, #tpu.memory_space<vmem>>, vector<256x128xf32>
    %c0_2 = arith.constant 0 : index
    %c0_3 = arith.constant 0 : index
    %4 = vector.load %arg2[%c0_2, %c0_3] : memref<256x128xbf16, #tpu.memory_space<vmem>>, vector<256x128xbf16>
    %c0_4 = arith.constant 0 : index
    %c0_5 = arith.constant 0 : index
    %5 = vector.load %arg3[%c0_4, %c0_5] : memref<128x128xbf16, #tpu.memory_space<vmem>>, vector<128x128xbf16>
    %cst = arith.constant dense<0.000000e+00> : vector<256x128xf32>
    %6 = tpu.matmul %4, %5, %cst {dimension_numbers = #tpu.dot_dimension_numbers<[1], [0], [0], [1], [0, 0, 1, 1], [], []>} : vector<256x128xbf16>, vector<128x128xbf16>, vector<256x128xf32> -> vector<256x128xf32>
    %7 = arith.addf %3, %6 : vector<256x128xf32>
    %c0_6 = arith.constant 0 : index
    %c0_7 = arith.constant 0 : index
    %8 = vector.load %arg8[%c0_6, %c0_7] : memref<256x128xf32, #tpu.memory_space<vmem>>, vector<256x128xf32>
    tpu.vector_store %arg8[%c0_6, %c0_7], %7 {strides = array<i32>} : memref<256x128xf32, #tpu.memory_space<vmem>>, vector<256x128xf32>,
    %c0_i32_8 = arith.constant 0 : i32
    %9 = arith.cmpi eq, %arg1, %c0_i32_8 : i32
    %10 = arith.extui %9 : i1 to i32
    %c0_i32_9 = arith.constant 0 : i32
    %11 = arith.cmpi ne, %10, %c0_i32_9 : i32
    scf.if %11 {
      %c0_10 = arith.constant 0 : index
      %c0_11 = arith.constant 0 : index
      %12 = vector.load %arg8[%c0_10, %c0_11] : memref<256x128xf32, #tpu.memory_space<vmem>>, vector<256x128xf32>
      %c0_12 = arith.constant 0 : index
      %c0_13 = arith.constant 0 : index
      %13 = vector.load %arg4[%c0_12, %c0_13] : memref<256x1xf32, #tpu.memory_space<vmem>>, vector<256x1xf32>
      %14 = vector.broadcast %13 : vector<256x1xf32> to vector<256x128xf32>
      %15 = arith.mulf %12, %14 : vector<256x128xf32>
      %c0_14 = arith.constant 0 : index
      %c0_15 = arith.constant 0 : index
      %16 = vector.load %arg6[%c0_14, %c0_15] : memref<256x128xf32, #tpu.memory_space<vmem>>, vector<256x128xf32>
      tpu.vector_store %arg6[%c0_14, %c0_15], %15 {strides = array<i32>} : memref<256x128xf32, #tpu.memory_space<vmem>>, vector<256x128xf32>,
      %c0_16 = arith.constant 0 : index
      %c0_17 = arith.constant 0 : index
      %17 = vector.load %arg5[%c0_16, %c0_17] : memref<256x1xf32, #tpu.memory_space<vmem>>, vector<256x1xf32>
      %18 = vector.broadcast %17 : vector<256x1xf32> to vector<256x128xf32>
      %19 = arith.mulf %15, %18 : vector<256x128xf32>
      %20 = arith.subf %15, %19 : vector<256x128xf32>
      %cst_18 = arith.constant dense<0.000000e+00> : vector<128xf32>
      %21 = vector.multi_reduction <add>, %19, %cst_18 [0] : vector<256x128xf32> to vector<128xf32>
      %22 = vector.shape_cast %21 : vector<128xf32> to vector<1x128xf32>
      %23 = arith.mulf %19, %19 : vector<256x128xf32>
      %cst_19 = arith.constant dense<0.000000e+00> : vector<128xf32>
      %24 = vector.multi_reduction <add>, %23, %cst_19 [0] : vector<256x128xf32> to vector<128xf32>
      %25 = vector.shape_cast %24 : vector<128xf32> to vector<1x128xf32>
      %cst_20 = arith.constant dense<0.000000e+00> : vector<128xf32>
      %26 = vector.multi_reduction <add>, %20, %cst_20 [0] : vector<256x128xf32> to vector<128xf32>
      %27 = vector.shape_cast %26 : vector<128xf32> to vector<1x128xf32>
      %28 = arith.mulf %20, %20 : vector<256x128xf32>
      %cst_21 = arith.constant dense<0.000000e+00> : vector<128xf32>
      %29 = vector.multi_reduction <add>, %28, %cst_21 [0] : vector<256x128xf32> to vector<128xf32>
      %30 = vector.shape_cast %29 : vector<128xf32> to vector<1x128xf32>
      %31 = vector.broadcast %17 : vector<256x1xf32> to vector<256x128xf32>
      %32 = arith.mulf %31, %19 : vector<256x128xf32>
      %cst_22 = arith.constant dense<0.000000e+00> : vector<128xf32>
      %33 = vector.multi_reduction <add>, %32, %cst_22 [0] : vector<256x128xf32> to vector<128xf32>
      %34 = vector.shape_cast %33 : vector<128xf32> to vector<1x128xf32>
      %cst_23 = arith.constant 1.000000e+00 : f32
      %35 = vector.broadcast %cst_23 : f32 to vector<256x1xf32>
      %36 = arith.subf %35, %17 : vector<256x1xf32>
      %37 = vector.broadcast %36 : vector<256x1xf32> to vector<256x128xf32>
      %38 = arith.mulf %37, %20 : vector<256x128xf32>
      %cst_24 = arith.constant dense<0.000000e+00> : vector<128xf32>
      %39 = vector.multi_reduction <add>, %38, %cst_24 [0] : vector<256x128xf32> to vector<128xf32>
      %40 = vector.shape_cast %39 : vector<128xf32> to vector<1x128xf32>
      %cst_25 = arith.constant 0.000000e+00 : f32
      %41 = vector.broadcast %cst_25 : f32 to vector<1x128xf32>
      %42 = tpu.concatenate %22, %25, %27, %30, %34, %40, %41, %41 in 0 : vector<1x128xf32>, vector<1x128xf32>, vector<1x128xf32>, vector<1x128xf32>, vector<1x128xf32>, vector<1x128xf32>, vector<1x128xf32>, vector<1x128xf32> -> vector<8x128xf32>
      %c0_26 = arith.constant 0 : index
      %c0_27 = arith.constant 0 : index
      %43 = vector.load %arg7[%c0_26, %c0_27] : memref<8x128xf32, #tpu.memory_space<vmem>>, vector<8x128xf32>
      tpu.vector_store %arg7[%c0_26, %c0_27], %42 {strides = array<i32>} : memref<8x128xf32, #tpu.memory_space<vmem>>, vector<8x128xf32>,
    } else {
    }
    return
  }
  func.func @transform_0(%arg0: i32, %arg1: i32) -> (i32, i32) {
    %c0_i32 = arith.constant 0 : i32
    return %arg0, %arg1 : i32, i32
  }
  func.func @transform_1(%arg0: i32, %arg1: i32) -> (i32, i32) {
    %c0_i32 = arith.constant 0 : i32
    %c0_i32_0 = arith.constant 0 : i32
    return %arg1, %c0_i32 : i32, i32
  }
  func.func @transform_2(%arg0: i32, %arg1: i32) -> (i32, i32) {
    %c0_i32 = arith.constant 0 : i32
    %c0_i32_0 = arith.constant 0 : i32
    return %arg0, %c0_i32 : i32, i32
  }
  func.func @transform_3(%arg0: i32, %arg1: i32) -> (i32, i32) {
    %c0_i32 = arith.constant 0 : i32
    %c0_i32_0 = arith.constant 0 : i32
    return %arg0, %c0_i32 : i32, i32
  }
  func.func @transform_4(%arg0: i32, %arg1: i32) -> (i32, i32) {
    %c0_i32 = arith.constant 0 : i32
    %c0_i32_0 = arith.constant 0 : i32
    return %arg0, %c0_i32 : i32, i32
  }
  func.func @transform_5(%arg0: i32, %arg1: i32) -> (i32, i32) {
    %c0_i32 = arith.constant 0 : i32
    %c0_i32_0 = arith.constant 0 : i32
    return %arg0, %c0_i32 : i32, i32
  }
}

module attributes {stable_mosaic.version = 11 : i64} {
  func.func @_rn_act_kernel(%arg0: i32, %arg1: memref<256x128xf32, #tpu.memory_space<vmem>>, %arg2: memref<256x1xf32, #tpu.memory_space<vmem>>, %arg3: memref<8x128xf32, #tpu.memory_space<vmem>>, %arg4: memref<256x128xf32, #tpu.memory_space<vmem>>) attributes {dimension_semantics = [#tpu.dimension_semantics<parallel>], iteration_bounds = array<i64: 2>, scalar_prefetch = 0 : i64, scratch_operands = 0 : i64, tpu.core_type = #tpu.core_type<tc>, window_params = [{transform_indices = @transform_0, window_bounds = array<i64: 256, 128>}, {transform_indices = @transform_1, window_bounds = array<i64: 256, 1>}, {pipeline_mode = #tpu.pipeline_mode<synchronous>, transform_indices = @transform_2, window_bounds = array<i64: 8, 128>}, {transform_indices = @transform_3, window_bounds = array<i64: 256, 128>}]} {
    %c0 = arith.constant 0 : index
    %c0_0 = arith.constant 0 : index
    %0 = vector.load %arg1[%c0, %c0_0] : memref<256x128xf32, #tpu.memory_space<vmem>>, vector<256x128xf32>
    %c0_1 = arith.constant 0 : index
    %c0_2 = arith.constant 0 : index
    %1 = vector.load %arg2[%c0_1, %c0_2] : memref<256x1xf32, #tpu.memory_space<vmem>>, vector<256x1xf32>
    %c0_3 = arith.constant 0 : index
    %c0_4 = arith.constant 0 : index
    %2 = vector.load %arg3[%c0_3, %c0_4] : memref<8x128xf32, #tpu.memory_space<vmem>>, vector<1x128xf32>
    %c1 = arith.constant 1 : index
    %c0_5 = arith.constant 0 : index
    %3 = vector.load %arg3[%c1, %c0_5] : memref<8x128xf32, #tpu.memory_space<vmem>>, vector<1x128xf32>
    %c2 = arith.constant 2 : index
    %c0_6 = arith.constant 0 : index
    %4 = vector.load %arg3[%c2, %c0_6] : memref<8x128xf32, #tpu.memory_space<vmem>>, vector<1x128xf32>
    %c3 = arith.constant 3 : index
    %c0_7 = arith.constant 0 : index
    %5 = vector.load %arg3[%c3, %c0_7] : memref<8x128xf32, #tpu.memory_space<vmem>>, vector<1x128xf32>
    %c4 = arith.constant 4 : index
    %c0_8 = arith.constant 0 : index
    %6 = vector.load %arg3[%c4, %c0_8] : memref<8x128xf32, #tpu.memory_space<vmem>>, vector<1x128xf32>
    %c5 = arith.constant 5 : index
    %c0_9 = arith.constant 0 : index
    %7 = vector.load %arg3[%c5, %c0_9] : memref<8x128xf32, #tpu.memory_space<vmem>>, vector<1x128xf32>
    %c6 = arith.constant 6 : index
    %c0_10 = arith.constant 0 : index
    %8 = vector.load %arg3[%c6, %c0_10] : memref<8x128xf32, #tpu.memory_space<vmem>>, vector<1x128xf32>
    %cst = arith.constant 1.000000e+00 : f32
    %9 = vector.broadcast %cst : f32 to vector<256x1xf32>
    %10 = arith.subf %9, %1 : vector<256x1xf32>
    %11 = vector.broadcast %3 : vector<1x128xf32> to vector<256x128xf32>
    %12 = arith.subf %0, %11 : vector<256x128xf32>
    %13 = vector.broadcast %2 : vector<1x128xf32> to vector<256x128xf32>
    %14 = arith.mulf %13, %12 : vector<256x128xf32>
    %15 = vector.broadcast %1 : vector<256x1xf32> to vector<256x128xf32>
    %16 = arith.mulf %15, %14 : vector<256x128xf32>
    %17 = vector.broadcast %5 : vector<1x128xf32> to vector<256x128xf32>
    %18 = arith.subf %0, %17 : vector<256x128xf32>
    %19 = vector.broadcast %4 : vector<1x128xf32> to vector<256x128xf32>
    %20 = arith.mulf %19, %18 : vector<256x128xf32>
    %21 = vector.broadcast %10 : vector<256x1xf32> to vector<256x128xf32>
    %22 = arith.mulf %21, %20 : vector<256x128xf32>
    %23 = arith.addf %16, %22 : vector<256x128xf32>
    %24 = vector.broadcast %1 : vector<256x1xf32> to vector<256x128xf32>
    %25 = vector.broadcast %6 : vector<1x128xf32> to vector<256x128xf32>
    %26 = arith.mulf %24, %25 : vector<256x128xf32>
    %27 = vector.broadcast %10 : vector<256x1xf32> to vector<256x128xf32>
    %28 = vector.broadcast %7 : vector<1x128xf32> to vector<256x128xf32>
    %29 = arith.mulf %27, %28 : vector<256x128xf32>
    %30 = arith.addf %26, %29 : vector<256x128xf32>
    %31 = arith.mulf %23, %30 : vector<256x128xf32>
    %32 = vector.broadcast %8 : vector<1x128xf32> to vector<256x128xf32>
    %33 = arith.addf %31, %32 : vector<256x128xf32>
    %cst_11 = arith.constant 0.000000e+00 : f32
    %34 = vector.broadcast %cst_11 : f32 to vector<256x128xf32>
    %35 = arith.cmpf oge, %33, %34 : vector<256x128xf32>
    %cst_12 = arith.constant 2.000000e-01 : f32
    %36 = vector.broadcast %cst_12 : f32 to vector<256x128xf32>
    %37 = arith.mulf %36, %33 : vector<256x128xf32>
    %38 = arith.select %35, %33, %37 : vector<256x128xi1>, vector<256x128xf32>
    %c0_13 = arith.constant 0 : index
    %c0_14 = arith.constant 0 : index
    %39 = vector.load %arg4[%c0_13, %c0_14] : memref<256x128xf32, #tpu.memory_space<vmem>>, vector<256x128xf32>
    tpu.vector_store %arg4[%c0_13, %c0_14], %38 {strides = array<i32>} : memref<256x128xf32, #tpu.memory_space<vmem>>, vector<256x128xf32>,
    return
  }
  func.func @transform_0(%arg0: i32) -> (i32, i32) {
    %c0_i32 = arith.constant 0 : i32
    %c0_i32_0 = arith.constant 0 : i32
    return %arg0, %c0_i32 : i32, i32
  }
  func.func @transform_1(%arg0: i32) -> (i32, i32) {
    %c0_i32 = arith.constant 0 : i32
    %c0_i32_0 = arith.constant 0 : i32
    return %arg0, %c0_i32 : i32, i32
  }
  func.func @transform_2(%arg0: i32) -> (i32, i32) {
    %c0_i32 = arith.constant 0 : i32
    %c0_i32_0 = arith.constant 0 : i32
    %c0_i32_1 = arith.constant 0 : i32
    return %c0_i32, %c0_i32_0 : i32, i32
  }
  func.func @transform_3(%arg0: i32) -> (i32, i32) {
    %c0_i32 = arith.constant 0 : i32
    %c0_i32_0 = arith.constant 0 : i32
    return %arg0, %c0_i32 : i32, i32
  }
}

</mosaic_0001>

<llo_original>
// kernel: pconv_layer_forward.3
$region0: #{pconv_layer_forward.3}
  #allocation0 [shape = 'u32[]', space=smem, size = 0x4, offset = 0x4, fixed_abs, tag = 'smem constant byte address 0x4 - core index']
  #allocation1 [shape = 'u32[144,128]{1,0:T(1,128)}', space=vmem, size = 0x12000, scoped, tag = 'internal scratch']
  %s0 = inlined_call_operand.vmem [shape: f32[512,128], index: 0, kind: input, shape index: {}]
  %s1 = inlined_call_operand.vmem [shape: f32[512,1], index: 1, kind: input, shape index: {}]
  %s2 = inlined_call_operand.vmem [shape: f32[8,128], index: 2, kind: input, shape index: {}]
  %s3 = inlined_call_operand.hbm [shape: f32[512,128], index: 3, kind: output, shape index: {}]
  %s4 = sld [smem:[#allocation0]]
  $region45: #{pconv_layer_forward.3} parent=0
    _
  %s6 = ssub.s32 1, %s4
  %s7 = scalar_select 0, %s6, %s4
  $region1: #{pconv_layer_forward.3} parent=0
    #allocation2 [shape = 'u8[262144]{0}', space=vmem, size = 0x40000, scoped, tag = 'output window, operand 0']
    #allocation3 [shape = 's32[2]{0}', space=sflag, size = 0x8, scoped, tag = 'scoped memory for pconv_layer_forward.3']
    %8 = vsyncpa [#allocation3], 0
    %s9 = scalar_lea.sflag [#allocation3], 1
    %10 = vsyncpa %s9, 0
    loop: start=0, step=1, limit=4
    $region2: #{pconv_layer_forward.3} parent=1 // loop_pre_header
      _
    $region3: #{pconv_layer_forward.3} parent=1 // loop_header
      %s12 = sphi 0, %s16
      %p13 = scmp.ge.s32.totalorder %s12, 4
      %s22 = sphi 0, %s24
      %s25 = sphi 0, %s22
      %s26 = sphi 0, %s25
      %s42 = sphi 0, %s26
      %s48 = sphi 0, %s50
      %s51 = sphi 0, %s48
      %s52 = sphi 0, %s51
      %s68 = sphi 0, %s52
      %s72 = sphi 0, %s72
      %s74 = sphi 0, %s72
      %s75 = sphi 0, %s74
      %s89 = sphi 0, %s75
      %s95 = sphi 0, %s97
      %s98 = sphi 0, %s95
      %s99 = sphi 0, %s98
      %s115 = sphi 0, %s99
    $region4: #{pconv_layer_forward.3} parent=1 // loop_header_branch
      %15 = sbr.rel (%p13) target = $region8
    $region5: #{pconv_layer_forward.3} parent=1 // loop_body
      %s17 = ssub.s32 %s12, 1
      %s18 = ssub.s32 %s12, 2
      %s19 = sadd.s32 %s12, 1
      %s20 = ssub.s32 %s12, %s19
      %p21 = scmp.eq.s32.totalorder %s20, 0
      %s23 = sadd.s32 %s22, 1
      %s24 = scalar_select %p21, %s22, %s23
      %p27 = pneg %p21
      %p28 = scmp.eq.s32.totalorder %s12, 1
      %p29 = por %p27, %p28
      %p30 = scmp.ne.s32.totalorder %s22, %s25
      %p31 = scmp.eq.s32.totalorder %s12, 0
      %p32 = por %p30, %p31
      %p33 = scmp.ne.s32.totalorder %s22, %s25
      %p34 = scmp.eq.s32.totalorder %s17, 1
      %p35 = por %p33, %p34
      %p36 = scmp.ne.s32.totalorder %s25, %s26
      %p37 = scmp.eq.s32.totalorder %s17, 0
      %p38 = por %p36, %p37
      %p39 = scmp.ne.s32.totalorder %s25, %s26
      %p40 = scmp.eq.s32.totalorder %s18, 1
      %p41 = por %p39, %p40
      %p43 = scmp.ne.s32.totalorder %s26, %s42
      %p44 = scmp.eq.s32.totalorder %s18, 0
      %p45 = por %p43, %p44
      %s46 = ssub.s32 %s12, %s19
      %p47 = scmp.eq.s32.totalorder %s46, 0
      %s49 = sadd.s32 %s48, 1
      %s50 = scalar_select %p47, %s48, %s49
      %p53 = pneg %p47
      %p54 = scmp.eq.s32.totalorder %s12, 1
      %p55 = por %p53, %p54
      %p56 = scmp.ne.s32.totalorder %s48, %s51
      %p57 = scmp.eq.s32.totalorder %s12, 0
      %p58 = por %p56, %p57
      %p59 = scmp.ne.s32.totalorder %s48, %s51
      %p60 = scmp.eq.s32.totalorder %s17, 1
      %p61 = por %p59, %p60
      %p62 = scmp.ne.s32.totalorder %s51, %s52
      %p63 = scmp.eq.s32.totalorder %s17, 0
      %p64 = por %p62, %p63
      %p65 = scmp.ne.s32.totalorder %s51, %s52
      %p66 = scmp.eq.s32.totalorder %s18, 1
      %p67 = por %p65, %p66
      %p69 = scmp.ne.s32.totalorder %s52, %s68
      %p70 = scmp.eq.s32.totalorder %s18, 0
      %p71 = por %p69, %p70
      %s73 = sadd.s32 %s72, 1
      %p76 = scmp.eq.s32.totalorder %s12, 1
      %p77 = scmp.ne.s32.totalorder %s72, %s74
      %p78 = scmp.eq.s32.totalorder %s12, 0
      %p79 = por %p77, %p78
      %p80 = scmp.ne.s32.totalorder %s72, %s74
      %p81 = scmp.eq.s32.totalorder %s17, 1
      %p82 = por %p80, %p81
      %p83 = scmp.ne.s32.totalorder %s74, %s75
      %p84 = scmp.eq.s32.totalorder %s17, 0
      %p85 = por %p83, %p84
      %p86 = scmp.ne.s32.totalorder %s74, %s75
      %p87 = scmp.eq.s32.totalorder %s18, 1
      %p88 = por %p86, %p87
      %p90 = scmp.ne.s32.totalorder %s75, %s89
      %p91 = scmp.eq.s32.totalorder %s18, 0
      %p92 = por %p90, %p91
      %s93 = ssub.s32 %s12, %s19
      %p94 = scmp.eq.s32.totalorder %s93, 0
      %s96 = sadd.s32 %s95, 1
      %s97 = scalar_select %p94, %s95, %s96
      %p100 = pneg %p94
      %p101 = scmp.eq.s32.totalorder %s12, 1
      %p102 = por %p100, %p101
      %p103 = scmp.ne.s32.totalorder %s95, %s98
      %p104 = scmp.eq.s32.totalorder %s12, 0
      %p105 = por %p103, %p104
      %p106 = scmp.ne.s32.totalorder %s95, %s98
      %p107 = scmp.eq.s32.totalorder %s17, 1
      %p108 = por %p106, %p107
      %p109 = scmp.ne.s32.totalorder %s98, %s99
      %p110 = scmp.eq.s32.totalorder %s17, 0
      %p111 = por %p109, %p110
      %p112 = scmp.ne.s32.totalorder %s98, %s99
      %p113 = scmp.eq.s32.totalorder %s18, 1
      %p114 = por %p112, %p113
      %p116 = scmp.ne.s32.totalorder %s99, %s115
      %p117 = scmp.eq.s32.totalorder %s18, 0
      %p118 = por %p116, %p117
      %p119 = scmp.le.s32.totalorder 1, %s12
      %p120 = scmp.lt.s32.totalorder %s12, 3
      %p121 = pnand %p119, %p120
      %p122 = pneg %p121
      // Predicated region
      $region9: #{pconv_layer_forward.3} parent=5 // pred_check
        _
      $region10: #{pconv_layer_forward.3} parent=5 // pred_check_branch
        %124 = sbr.rel (%p121) target = $region12
      $region11: #{pconv_layer_forward.3} parent=5 // pred_region
        %s125 = ssub.s32 %s12, 1
        // Predicated region
        $region13: #{pconv_layer_forward.3} parent=11 // pred_check
          %p126 = pneg %p85
        $region14: #{pconv_layer_forward.3} parent=11 // pred_check_branch
          %128 = sbr.rel (%p126) target = $region16
        $region15: #{pconv_layer_forward.3} parent=11 // pred_region
          _
        $region16: #{pconv_layer_forward.3} parent=11 // pred_fallthru
          _
      $region12: #{pconv_layer_forward.3} parent=5 // pred_fallthru
        _
      %p129 = scmp.lt.s32.totalorder %s12, 2
      // Predicated region
      $region17: #{pconv_layer_forward.3} parent=5 // pred_check
        %p130 = pneg %p129
      $region18: #{pconv_layer_forward.3} parent=5 // pred_check_branch
        %132 = sbr.rel (%p130) target = $region20
      $region19: #{pconv_layer_forward.3} parent=5 // pred_region
        // Predicated region
        $region21: #{pconv_layer_forward.3} parent=19 // pred_check
          %p133 = pneg %p32
        $region22: #{pconv_layer_forward.3} parent=19 // pred_check_branch
          %135 = sbr.rel (%p133) target = $region24
        $region23: #{pconv_layer_forward.3} parent=19 // pred_region
          %s136 = smul.u32 32, %s12
          %p137 = scmp.lt.s32.totalorder %s136, 63
          %s138 = scalar_select %p137, %s136, 63
          %s139 = smul.addr %s138, 8
          %s140 = scalar_lea.vmem %s0, %s139
          %s141 = smul.u32 32, %s12
        $region24: #{pconv_layer_forward.3} parent=19 // pred_fallthru
          _
        // Predicated region
        $region25: #{pconv_layer_forward.3} parent=19 // pred_check
          %p142 = pneg %p58
        $region26: #{pconv_layer_forward.3} parent=19 // pred_check_branch
          %144 = sbr.rel (%p142) target = $region28
        $region27: #{pconv_layer_forward.3} parent=19 // pred_region
          %s145 = smul.u32 32, %s12
          %p146 = scmp.lt.s32.totalorder %s145, 63
          %s147 = scalar_select %p146, %s145, 63
          %s148 = smul.addr %s147, 8
          %s149 = scalar_lea.vmem %s1, %s148
          %s150 = smul.u32 32, %s12
        $region28: #{pconv_layer_forward.3} parent=19 // pred_fallthru
          _
      $region20: #{pconv_layer_forward.3} parent=5 // pred_fallthru
        _
      %p151 = scmp.le.s32.totalorder 1, %s12
      %p152 = scmp.lt.s32.totalorder %s12, 3
      %p153 = pnand %p151, %p152
      %p154 = pneg %p153
      // Predicated region
      $region29: #{pconv_layer_forward.3} parent=5 // pred_check
        _
      $region30: #{pconv_layer_forward.3} parent=5 // pred_check_branch
        %156 = sbr.rel (%p153) target = $region32
      $region31: #{pconv_layer_forward.3} parent=5 // pred_region
        %s157 = ssub.s32 %s12, 1
        %s158 = smul.u32 32, %s17
        %p159 = scmp.lt.s32.totalorder %s158, 63
        %s160 = scalar_select %p159, %s158, 63
        %s161 = smul.addr %s160, 8
        %s162 = scalar_lea.vmem %s0, %s161
        %p163 = pneg %p38
        %p164 = pneg %p35
        %s165 = smul.u32 32, %s17
        %p166 = scmp.lt.s32.totalorder %s165, 63
        %s167 = scalar_select %p166, %s165, 63
        %s168 = smul.addr %s167, 8
        %s169 = scalar_lea.vmem %s1, %s168
        %p170 = pneg %p64
        %p171 = pneg %p61
        %p172 = pneg %p85
        %p173 = pneg %p82
        %p174 = pneg %p111
        %p175 = pneg %p108
        %s176 = sand.u32 %s98, 1
        %s177 = scalar_lea.sflag [#allocation3], %s176
        %s178 = sand.u32 %s98, 1
        %s179 = smul.addr %s178, 256
        %s180 = scalar_lea.vmem [#allocation2], %s179
        %s181 = smul.u32 32, %s17
        %p182 = scmp.lt.s32.totalorder %s181, 63
        %s183 = scalar_select %p182, %s181, 63
        %s184 = smul.addr %s183, 8
        %s185 = scalar_lea.vmem %s0, %s184
        %s186 = smul.u32 32, %s17
        %s187 = smul.u32 32, %s17
        %p188 = scmp.lt.s32.totalorder %s187, 63
        %s189 = scalar_select %p188, %s187, 63
        %s190 = smul.addr %s189, 8
        %s191 = scalar_lea.vmem %s1, %s190
        %s192 = smul.u32 32, %s17
        %s193 = smul.u32 32, %s17
        %v194 = vld [vmem:[%s185] sm:$0xff]
        %v195 = vld [vmem:[%s185 + $0x8] sm:$0xff]
        %v196 = vld [vmem:[%s185 + $0x10] sm:$0xff]
        %v197 = vld [vmem:[%s185 + $0x18] sm:$0xff]
        %v198 = vld [vmem:[%s185 + $0x20] sm:$0xff]
        %v199 = vld [vmem:[%s185 + $0x28] sm:$0xff]
        %v200 = vld [vmem:[%s185 + $0x30] sm:$0xff]
        %v201 = vld [vmem:[%s185 + $0x38] sm:$0xff]
        %v202 = vld [vmem:[%s185 + $0x40] sm:$0xff]
        %v203 = vld [vmem:[%s185 + $0x48] sm:$0xff]
        %v204 = vld [vmem:[%s185 + $0x50] sm:$0xff]
        %v205 = vld [vmem:[%s185 + $0x58] sm:$0xff]
        %v206 = vld [vmem:[%s185 + $0x60] sm:$0xff]
        %v207 = vld [vmem:[%s185 + $0x68] sm:$0xff]
        %v208 = vld [vmem:[%s185 + $0x70] sm:$0xff]
        %v209 = vld [vmem:[%s185 + $0x78] sm:$0xff]
        %v210 = vld [vmem:[%s185 + $0x80] sm:$0xff]
        %v211 = vld [vmem:[%s185 + $0x88] sm:$0xff]
        %v212 = vld [vmem:[%s185 + $0x90] sm:$0xff]
        %v213 = vld [vmem:[%s185 + $0x98] sm:$0xff]
        %v214 = vld [vmem:[%s185 + $0xa0] sm:$0xff]
        %v215 = vld [vmem:[%s185 + $0xa8] sm:$0xff]
        %v216 = vld [vmem:[%s185 + $0xb0] sm:$0xff]
        %v217 = vld [vmem:[%s185 + $0xb8] sm:$0xff]
        %v218 = vld [vmem:[%s185 + $0xc0] sm:$0xff]
        %v219 = vld [vmem:[%s185 + $0xc8] sm:$0xff]
        %v220 = vld [vmem:[%s185 + $0xd0] sm:$0xff]
        %v221 = vld [vmem:[%s185 + $0xd8] sm:$0xff]
        %v222 = vld [vmem:[%s185 + $0xe0] sm:$0xff]
        %v223 = vld [vmem:[%s185 + $0xe8] sm:$0xff]
        %v224 = vld [vmem:[%s185 + $0xf0] sm:$0xff]
        %v225 = vld [vmem:[%s185 + $0xf8] sm:$0xff]
        %v226 = vld [vmem:[%s191] sm:$0xff]
        %v227 = vld [vmem:[%s191 + $0x8] sm:$0xff]
        %v228 = vld [vmem:[%s191 + $0x10] sm:$0xff]
        %v229 = vld [vmem:[%s191 + $0x18] sm:$0xff]
        %v230 = vld [vmem:[%s191 + $0x20] sm:$0xff]
        %v231 = vld [vmem:[%s191 + $0x28] sm:$0xff]
        %v232 = vld [vmem:[%s191 + $0x30] sm:$0xff]
        %v233 = vld [vmem:[%s191 + $0x38] sm:$0xff]
        %v234 = vld [vmem:[%s191 + $0x40] sm:$0xff]
        %v235 = vld [vmem:[%s191 + $0x48] sm:$0xff]
        %v236 = vld [vmem:[%s191 + $0x50] sm:$0xff]
        %v237 = vld [vmem:[%s191 + $0x58] sm:$0xff]
        %v238 = vld [vmem:[%s191 + $0x60] sm:$0xff]
        %v239 = vld [vmem:[%s191 + $0x68] sm:$0xff]
        %v240 = vld [vmem:[%s191 + $0x70] sm:$0xff]
        %v241 = vld [vmem:[%s191 + $0x78] sm:$0xff]
        %v242 = vld [vmem:[%s191 + $0x80] sm:$0xff]
        %v243 = vld [vmem:[%s191 + $0x88] sm:$0xff]
        %v244 = vld [vmem:[%s191 + $0x90] sm:$0xff]
        %v245 = vld [vmem:[%s191 + $0x98] sm:$0xff]
        %v246 = vld [vmem:[%s191 + $0xa0] sm:$0xff]
        %v247 = vld [vmem:[%s191 + $0xa8] sm:$0xff]
        %v248 = vld [vmem:[%s191 + $0xb0] sm:$0xff]
        %v249 = vld [vmem:[%s191 + $0xb8] sm:$0xff]
        %v250 = vld [vmem:[%s191 + $0xc0] sm:$0xff]
        %v251 = vld [vmem:[%s191 + $0xc8] sm:$0xff]
        %v252 = vld [vmem:[%s191 + $0xd0] sm:$0xff]
        %v253 = vld [vmem:[%s191 + $0xd8] sm:$0xff]
        %v254 = vld [vmem:[%s191 + $0xe0] sm:$0xff]
        %v255 = vld [vmem:[%s191 + $0xe8] sm:$0xff]
        %v256 = vld [vmem:[%s191 + $0xf0] sm:$0xff]
        %v257 = vld [vmem:[%s191 + $0xf8] sm:$0xff]
        %v258 = vld [vmem:[%s2] sm:$0x1]
        %v259 = vld [vmem:[%s2 + $0x1] sm:$0x1]
        %v260 = vld [vmem:[%s2 + $0x2] sm:$0x1]
        %v261 = vld [vmem:[%s2 + $0x3] sm:$0x1]
        %v262 = vld [vmem:[%s2 + $0x4] sm:$0x1]
        %v263 = vld [vmem:[%s2 + $0x5] sm:$0x1]
        %v264 = vld [vmem:[%s2 + $0x6] sm:$0x1]
        %v265 = vsub.f32 1.0, %v226
        %v266 = vsub.f32 1.0, %v227
        %v267 = vsub.f32 1.0, %v228
        %v268 = vsub.f32 1.0, %v229
        %v269 = vsub.f32 1.0, %v230
        %v270 = vsub.f32 1.0, %v231
        %v271 = vsub.f32 1.0, %v232
        %v272 = vsub.f32 1.0, %v233
        %v273 = vsub.f32 1.0, %v234
        %v274 = vsub.f32 1.0, %v235
        %v275 = vsub.f32 1.0, %v236
        %v276 = vsub.f32 1.0, %v237
        %v277 = vsub.f32 1.0, %v238
        %v278 = vsub.f32 1.0, %v239
        %v279 = vsub.f32 1.0, %v240
        %v280 = vsub.f32 1.0, %v241
        %v281 = vsub.f32 1.0, %v242
        %v282 = vsub.f32 1.0, %v243
        %v283 = vsub.f32 1.0, %v244
        %v284 = vsub.f32 1.0, %v245
        %v285 = vsub.f32 1.0, %v246
        %v286 = vsub.f32 1.0, %v247
        %v287 = vsub.f32 1.0, %v248
        %v288 = vsub.f32 1.0, %v249
        %v289 = vsub.f32 1.0, %v250
        %v290 = vsub.f32 1.0, %v251
        %v291 = vsub.f32 1.0, %v252
        %v292 = vsub.f32 1.0, %v253
        %v293 = vsub.f32 1.0, %v254
        %v294 = vsub.f32 1.0, %v255
        %v295 = vsub.f32 1.0, %v256
        %v296 = vsub.f32 1.0, %v257
        %v297 = vlaneseq
        %v298 = vshrl.u32 %v297, 7
        %v299 = vsub.s32 0, %v298
        %v300 = vrot.slane %v259, %v299
        %v301 = vsub.f32 %v194, %v300
        %v302 = vsub.f32 %v195, %v300
        %v303 = vsub.f32 %v196, %v300
        %v304 = vsub.f32 %v197, %v300
        %v305 = vsub.f32 %v198, %v300
        %v306 = vsub.f32 %v199, %v300
        %v307 = vsub.f32 %v200, %v300
        %v308 = vsub.f32 %v201, %v300
        %v309 = vsub.f32 %v202, %v300
        %v310 = vsub.f32 %v203, %v300
        %v311 = vsub.f32 %v204, %v300
        %v312 = vsub.f32 %v205, %v300
        %v313 = vsub.f32 %v206, %v300
        %v314 = vsub.f32 %v207, %v300
        %v315 = vsub.f32 %v208, %v300
        %v316 = vsub.f32 %v209, %v300
        %v317 = vsub.f32 %v210, %v300
        %v318 = vsub.f32 %v211, %v300
        %v319 = vsub.f32 %v212, %v300
        %v320 = vsub.f32 %v213, %v300
        %v321 = vsub.f32 %v214, %v300
        %v322 = vsub.f32 %v215, %v300
        %v323 = vsub.f32 %v216, %v300
        %v324 = vsub.f32 %v217, %v300
        %v325 = vsub.f32 %v218, %v300
        %v326 = vsub.f32 %v219, %v300
        %v327 = vsub.f32 %v220, %v300
        %v328 = vsub.f32 %v221, %v300
        %v329 = vsub.f32 %v222, %v300
        %v330 = vsub.f32 %v223, %v300
        %v331 = vsub.f32 %v224, %v300
        %v332 = vsub.f32 %v225, %v300
        %v333 = vlaneseq
        %v334 = vshrl.u32 %v333, 7
        %v335 = vsub.s32 0, %v334
        %v336 = vrot.slane %v258, %v335
        %v337 = vmul.f32 %v336, %v301
        %v338 = vmul.f32 %v336, %v302
        %v339 = vmul.f32 %v336, %v303
        %v340 = vmul.f32 %v336, %v304
        %v341 = vmul.f32 %v336, %v305
        %v342 = vmul.f32 %v336, %v306
        %v343 = vmul.f32 %v336, %v307
        %v344 = vmul.f32 %v336, %v308
        %v345 = vmul.f32 %v336, %v309
        %v346 = vmul.f32 %v336, %v310
        %v347 = vmul.f32 %v336, %v311
        %v348 = vmul.f32 %v336, %v312
        %v349 = vmul.f32 %v336, %v313
        %v350 = vmul.f32 %v336, %v314
        %v351 = vmul.f32 %v336, %v315
        %v352 = vmul.f32 %v336, %v316
        %v353 = vmul.f32 %v336, %v317
        %v354 = vmul.f32 %v336, %v318
        %v355 = vmul.f32 %v336, %v319
        %v356 = vmul.f32 %v336, %v320
        %v357 = vmul.f32 %v336, %v321
        %v358 = vmul.f32 %v336, %v322
        %v359 = vmul.f32 %v336, %v323
        %v360 = vmul.f32 %v336, %v324
        %v361 = vmul.f32 %v336, %v325
        %v362 = vmul.f32 %v336, %v326
        %v363 = vmul.f32 %v336, %v327
        %v364 = vmul.f32 %v336, %v328
        %v365 = vmul.f32 %v336, %v329
        %v366 = vmul.f32 %v336, %v330
        %v367 = vmul.f32 %v336, %v331
        %v368 = vmul.f32 %v336, %v332
        %370 = vset.pattern.permute.xlu0 0
        %371 = vperm.xlu0 %370, %v226
        %v372 = vpop.permute.xlu0 %371
        %375 = vset.pattern.permute.xlu0 0
        %376 = vperm.xlu0 %375, %v227
        %v377 = vpop.permute.xlu0 %376
        %380 = vset.pattern.permute.xlu0 0
        %381 = vperm.xlu0 %380, %v228
        %v382 = vpop.permute.xlu0 %381
        %385 = vset.pattern.permute.xlu0 0
        %386 = vperm.xlu0 %385, %v229
        %v387 = vpop.permute.xlu0 %386
        %390 = vset.pattern.permute.xlu0 0
        %391 = vperm.xlu0 %390, %v230
        %v392 = vpop.permute.xlu0 %391
        %395 = vset.pattern.permute.xlu0 0
        %396 = vperm.xlu0 %395, %v231
        %v397 = vpop.permute.xlu0 %396
        %400 = vset.pattern.permute.xlu0 0
        %401 = vperm.xlu0 %400, %v232
        %v402 = vpop.permute.xlu0 %401
        %405 = vset.pattern.permute.xlu0 0
        %406 = vperm.xlu0 %405, %v233
        %v407 = vpop.permute.xlu0 %406
        %410 = vset.pattern.permute.xlu0 0
        %411 = vperm.xlu0 %410, %v234
        %v412 = vpop.permute.xlu0 %411
        %415 = vset.pattern.permute.xlu0 0
        %416 = vperm.xlu0 %415, %v235
        %v417 = vpop.permute.xlu0 %416
        %420 = vset.pattern.permute.xlu0 0
        %421 = vperm.xlu0 %420, %v236
        %v422 = vpop.permute.xlu0 %421
        %425 = vset.pattern.permute.xlu0 0
        %426 = vperm.xlu0 %425, %v237
        %v427 = vpop.permute.xlu0 %426
        %430 = vset.pattern.permute.xlu0 0
        %431 = vperm.xlu0 %430, %v238
        %v432 = vpop.permute.xlu0 %431
        %435 = vset.pattern.permute.xlu0 0
        %436 = vperm.xlu0 %435, %v239
        %v437 = vpop.permute.xlu0 %436
        %440 = vset.pattern.permute.xlu0 0
        %441 = vperm.xlu0 %440, %v240
        %v442 = vpop.permute.xlu0 %441
        %445 = vset.pattern.permute.xlu0 0
        %446 = vperm.xlu0 %445, %v241
        %v447 = vpop.permute.xlu0 %446
        %450 = vset.pattern.permute.xlu0 0
        %451 = vperm.xlu0 %450, %v242
        %v452 = vpop.permute.xlu0 %451
        %455 = vset.pattern.permute.xlu0 0
        %456 = vperm.xlu0 %455, %v243
        %v457 = vpop.permute.xlu0 %456
        %460 = vset.pattern.permute.xlu0 0
        %461 = vperm.xlu0 %460, %v244
        %v462 = vpop.permute.xlu0 %461
        %465 = vset.pattern.permute.xlu0 0
        %466 = vperm.xlu0 %465, %v245
        %v467 = vpop.permute.xlu0 %466
        %470 = vset.pattern.permute.xlu0 0
        %471 = vperm.xlu0 %470, %v246
        %v472 = vpop.permute.xlu0 %471
        %475 = vset.pattern.permute.xlu0 0
        %476 = vperm.xlu0 %475, %v247
        %v477 = vpop.permute.xlu0 %476
        %480 = vset.pattern.permute.xlu0 0
        %481 = vperm.xlu0 %480, %v248
        %v482 = vpop.permute.xlu0 %481
        %485 = vset.pattern.permute.xlu0 0
        %486 = vperm.xlu0 %485, %v249
        %v487 = vpop.permute.xlu0 %486
        %490 = vset.pattern.permute.xlu0 0
        %491 = vperm.xlu0 %490, %v250
        %v492 = vpop.permute.xlu0 %491
        %495 = vset.pattern.permute.xlu0 0
        %496 = vperm.xlu0 %495, %v251
        %v497 = vpop.permute.xlu0 %496
        %500 = vset.pattern.permute.xlu0 0
        %501 = vperm.xlu0 %500, %v252
        %v502 = vpop.permute.xlu0 %501
        %505 = vset.pattern.permute.xlu0 0
        %506 = vperm.xlu0 %505, %v253
        %v507 = vpop.permute.xlu0 %506
        %510 = vset.pattern.permute.xlu0 0
        %511 = vperm.xlu0 %510, %v254
        %v512 = vpop.permute.xlu0 %511
        %515 = vset.pattern.permute.xlu0 0
        %516 = vperm.xlu0 %515, %v255
        %v517 = vpop.permute.xlu0 %516
        %520 = vset.pattern.permute.xlu0 0
        %521 = vperm.xlu0 %520, %v256
        %v522 = vpop.permute.xlu0 %521
        %525 = vset.pattern.permute.xlu0 0
        %526 = vperm.xlu0 %525, %v257
        %v527 = vpop.permute.xlu0 %526
        %v529 = vmul.f32 %v372, %v337
        %v530 = vmul.f32 %v377, %v338
        %v531 = vmul.f32 %v382, %v339
        %v532 = vmul.f32 %v387, %v340
        %v533 = vmul.f32 %v392, %v341
        %v534 = vmul.f32 %v397, %v342
        %v535 = vmul.f32 %v402, %v343
        %v536 = vmul.f32 %v407, %v344
        %v537 = vmul.f32 %v412, %v345
        %v538 = vmul.f32 %v417, %v346
        %v539 = vmul.f32 %v422, %v347
        %v540 = vmul.f32 %v427, %v348
        %v541 = vmul.f32 %v432, %v349
        %v542 = vmul.f32 %v437, %v350
        %v543 = vmul.f32 %v442, %v351
        %v544 = vmul.f32 %v447, %v352
        %v545 = vmul.f32 %v452, %v353
        %v546 = vmul.f32 %v457, %v354
        %v547 = vmul.f32 %v462, %v355
        %v548 = vmul.f32 %v467, %v356
        %v549 = vmul.f32 %v472, %v357
        %v550 = vmul.f32 %v477, %v358
        %v551 = vmul.f32 %v482, %v359
        %v552 = vmul.f32 %v487, %v360
        %v553 = vmul.f32 %v492, %v361
        %v554 = vmul.f32 %v497, %v362
        %v555 = vmul.f32 %v502, %v363
        %v556 = vmul.f32 %v507, %v364
        %v557 = vmul.f32 %v512, %v365
        %v558 = vmul.f32 %v517, %v366
        %v559 = vmul.f32 %v522, %v367
        %v560 = vmul.f32 %v527, %v368
        %v561 = vlaneseq
        %v562 = vshrl.u32 %v561, 7
        %v563 = vsub.s32 0, %v562
        %v564 = vrot.slane %v261, %v563
        %v565 = vsub.f32 %v194, %v564
        %v566 = vsub.f32 %v195, %v564
        %v567 = vsub.f32 %v196, %v564
        %v568 = vsub.f32 %v197, %v564
        %v569 = vsub.f32 %v198, %v564
        %v570 = vsub.f32 %v199, %v564
        %v571 = vsub.f32 %v200, %v564
        %v572 = vsub.f32 %v201, %v564
        %v573 = vsub.f32 %v202, %v564
        %v574 = vsub.f32 %v203, %v564
        %v575 = vsub.f32 %v204, %v564
        %v576 = vsub.f32 %v205, %v564
        %v577 = vsub.f32 %v206, %v564
        %v578 = vsub.f32 %v207, %v564
        %v579 = vsub.f32 %v208, %v564
        %v580 = vsub.f32 %v209, %v564
        %v581 = vsub.f32 %v210, %v564
        %v582 = vsub.f32 %v211, %v564
        %v583 = vsub.f32 %v212, %v564
        %v584 = vsub.f32 %v213, %v564
        %v585 = vsub.f32 %v214, %v564
        %v586 = vsub.f32 %v215, %v564
        %v587 = vsub.f32 %v216, %v564
        %v588 = vsub.f32 %v217, %v564
        %v589 = vsub.f32 %v218, %v564
        %v590 = vsub.f32 %v219, %v564
        %v591 = vsub.f32 %v220, %v564
        %v592 = vsub.f32 %v221, %v564
        %v593 = vsub.f32 %v222, %v564
        %v594 = vsub.f32 %v223, %v564
        %v595 = vsub.f32 %v224, %v564
        %v596 = vsub.f32 %v225, %v564
        %v597 = vlaneseq
        %v598 = vshrl.u32 %v597, 7
        %v599 = vsub.s32 0, %v598
        %v600 = vrot.slane %v260, %v599
        %v601 = vmul.f32 %v600, %v565
        %v602 = vmul.f32 %v600, %v566
        %v603 = vmul.f32 %v600, %v567
        %v604 = vmul.f32 %v600, %v568
        %v605 = vmul.f32 %v600, %v569
        %v606 = vmul.f32 %v600, %v570
        %v607 = vmul.f32 %v600, %v571
        %v608 = vmul.f32 %v600, %v572
        %v609 = vmul.f32 %v600, %v573
        %v610 = vmul.f32 %v600, %v574
        %v611 = vmul.f32 %v600, %v575
        %v612 = vmul.f32 %v600, %v576
        %v613 = vmul.f32 %v600, %v577
        %v614 = vmul.f32 %v600, %v578
        %v615 = vmul.f32 %v600, %v579
        %v616 = vmul.f32 %v600, %v580
        %v617 = vmul.f32 %v600, %v581
        %v618 = vmul.f32 %v600, %v582
        %v619 = vmul.f32 %v600, %v583
        %v620 = vmul.f32 %v600, %v584
        %v621 = vmul.f32 %v600, %v585
        %v622 = vmul.f32 %v600, %v586
        %v623 = vmul.f32 %v600, %v587
        %v624 = vmul.f32 %v600, %v588
        %v625 = vmul.f32 %v600, %v589
        %v626 = vmul.f32 %v600, %v590
        %v627 = vmul.f32 %v600, %v591
        %v628 = vmul.f32 %v600, %v592
        %v629 = vmul.f32 %v600, %v593
        %v630 = vmul.f32 %v600, %v594
        %v631 = vmul.f32 %v600, %v595
        %v632 = vmul.f32 %v600, %v596
        %634 = vset.pattern.permute.xlu0 0
        %635 = vperm.xlu0 %634, %v265
        %v636 = vpop.permute.xlu0 %635
        %639 = vset.pattern.permute.xlu0 0
        %640 = vperm.xlu0 %639, %v266
        %v641 = vpop.permute.xlu0 %640
        %644 = vset.pattern.permute.xlu0 0
        %645 = vperm.xlu0 %644, %v267
        %v646 = vpop.permute.xlu0 %645
        %649 = vset.pattern.permute.xlu0 0
        %650 = vperm.xlu0 %649, %v268
        %v651 = vpop.permute.xlu0 %650
        %654 = vset.pattern.permute.xlu0 0
        %655 = vperm.xlu0 %654, %v269
        %v656 = vpop.permute.xlu0 %655
        %659 = vset.pattern.permute.xlu0 0
        %660 = vperm.xlu0 %659, %v270
        %v661 = vpop.permute.xlu0 %660
        %664 = vset.pattern.permute.xlu0 0
        %665 = vperm.xlu0 %664, %v271
        %v666 = vpop.permute.xlu0 %665
        %669 = vset.pattern.permute.xlu0 0
        %670 = vperm.xlu0 %669, %v272
        %v671 = vpop.permute.xlu0 %670
        %674 = vset.pattern.permute.xlu0 0
        %675 = vperm.xlu0 %674, %v273
        %v676 = vpop.permute.xlu0 %675
        %679 = vset.pattern.permute.xlu0 0
        %680 = vperm.xlu0 %679, %v274
        %v681 = vpop.permute.xlu0 %680
        %684 = vset.pattern.permute.xlu0 0
        %685 = vperm.xlu0 %684, %v275
        %v686 = vpop.permute.xlu0 %685
        %689 = vset.pattern.permute.xlu0 0
        %690 = vperm.xlu0 %689, %v276
        %v691 = vpop.permute.xlu0 %690
        %694 = vset.pattern.permute.xlu0 0
        %695 = vperm.xlu0 %694, %v277
        %v696 = vpop.permute.xlu0 %695
        %699 = vset.pattern.permute.xlu0 0
        %700 = vperm.xlu0 %699, %v278
        %v701 = vpop.permute.xlu0 %700
        %704 = vset.pattern.permute.xlu0 0
        %705 = vperm.xlu0 %704, %v279
        %v706 = vpop.permute.xlu0 %705
        %709 = vset.pattern.permute.xlu0 0
        %710 = vperm.xlu0 %709, %v280
        %v711 = vpop.permute.xlu0 %710
        %714 = vset.pattern.permute.xlu0 0
        %715 = vperm.xlu0 %714, %v281
        %v716 = vpop.permute.xlu0 %715
        %719 = vset.pattern.permute.xlu0 0
        %720 = vperm.xlu0 %719, %v282
        %v721 = vpop.permute.xlu0 %720
        %724 = vset.pattern.permute.xlu0 0
        %725 = vperm.xlu0 %724, %v283
        %v726 = vpop.permute.xlu0 %725
        %729 = vset.pattern.permute.xlu0 0
        %730 = vperm.xlu0 %729, %v284
        %v731 = vpop.permute.xlu0 %730
        %734 = vset.pattern.permute.xlu0 0
        %735 = vperm.xlu0 %734, %v285
        %v736 = vpop.permute.xlu0 %735
        %739 = vset.pattern.permute.xlu0 0
        %740 = vperm.xlu0 %739, %v286
        %v741 = vpop.permute.xlu0 %740
        %744 = vset.pattern.permute.xlu0 0
        %745 = vperm.xlu0 %744, %v287
        %v746 = vpop.permute.xlu0 %745
        %749 = vset.pattern.permute.xlu0 0
        %750 = vperm.xlu0 %749, %v288
        %v751 = vpop.permute.xlu0 %750
        %754 = vset.pattern.permute.xlu0 0
        %755 = vperm.xlu0 %754, %v289
        %v756 = vpop.permute.xlu0 %755
        %759 = vset.pattern.permute.xlu0 0
        %760 = vperm.xlu0 %759, %v290
        %v761 = vpop.permute.xlu0 %760
        %764 = vset.pattern.permute.xlu0 0
        %765 = vperm.xlu0 %764, %v291
        %v766 = vpop.permute.xlu0 %765
        %769 = vset.pattern.permute.xlu0 0
        %770 = vperm.xlu0 %769, %v292
        %v771 = vpop.permute.xlu0 %770
        %774 = vset.pattern.permute.xlu0 0
        %775 = vperm.xlu0 %774, %v293
        %v776 = vpop.permute.xlu0 %775
        %779 = vset.pattern.permute.xlu0 0
        %780 = vperm.xlu0 %779, %v294
        %v781 = vpop.permute.xlu0 %780
        %784 = vset.pattern.permute.xlu0 0
        %785 = vperm.xlu0 %784, %v295
        %v786 = vpop.permute.xlu0 %785
        %789 = vset.pattern.permute.xlu0 0
        %790 = vperm.xlu0 %789, %v296
        %v791 = vpop.permute.xlu0 %790
        %v793 = vmul.f32 %v636, %v601
        %v794 = vmul.f32 %v641, %v602
        %v795 = vmul.f32 %v646, %v603
        %v796 = vmul.f32 %v651, %v604
        %v797 = vmul.f32 %v656, %v605
        %v798 = vmul.f32 %v661, %v606
        %v799 = vmul.f32 %v666, %v607
        %v800 = vmul.f32 %v671, %v608
        %v801 = vmul.f32 %v676, %v609
        %v802 = vmul.f32 %v681, %v610
        %v803 = vmul.f32 %v686, %v611
        %v804 = vmul.f32 %v691, %v612
        %v805 = vmul.f32 %v696, %v613
        %v806 = vmul.f32 %v701, %v614
        %v807 = vmul.f32 %v706, %v615
        %v808 = vmul.f32 %v711, %v616
        %v809 = vmul.f32 %v716, %v617
        %v810 = vmul.f32 %v721, %v618
        %v811 = vmul.f32 %v726, %v619
        %v812 = vmul.f32 %v731, %v620
        %v813 = vmul.f32 %v736, %v621
        %v814 = vmul.f32 %v741, %v622
        %v815 = vmul.f32 %v746, %v623
        %v816 = vmul.f32 %v751, %v624
        %v817 = vmul.f32 %v756, %v625
        %v818 = vmul.f32 %v761, %v626
        %v819 = vmul.f32 %v766, %v627
        %v820 = vmul.f32 %v771, %v628
        %v821 = vmul.f32 %v776, %v629
        %v822 = vmul.f32 %v781, %v630
        %v823 = vmul.f32 %v786, %v631
        %v824 = vmul.f32 %v791, %v632
        %v825 = vadd.f32 %v529, %v793
        %v826 = vadd.f32 %v530, %v794
        %v827 = vadd.f32 %v531, %v795
        %v828 = vadd.f32 %v532, %v796
        %v829 = vadd.f32 %v533, %v797
        %v830 = vadd.f32 %v534, %v798
        %v831 = vadd.f32 %v535, %v799
        %v832 = vadd.f32 %v536, %v800
        %v833 = vadd.f32 %v537, %v801
        %v834 = vadd.f32 %v538, %v802
        %v835 = vadd.f32 %v539, %v803
        %v836 = vadd.f32 %v540, %v804
        %v837 = vadd.f32 %v541, %v805
        %v838 = vadd.f32 %v542, %v806
        %v839 = vadd.f32 %v543, %v807
        %v840 = vadd.f32 %v544, %v808
        %v841 = vadd.f32 %v545, %v809
        %v842 = vadd.f32 %v546, %v810
        %v843 = vadd.f32 %v547, %v811
        %v844 = vadd.f32 %v548, %v812
        %v845 = vadd.f32 %v549, %v813
        %v846 = vadd.f32 %v550, %v814
        %v847 = vadd.f32 %v551, %v815
        %v848 = vadd.f32 %v552, %v816
        %v849 = vadd.f32 %v553, %v817
        %v850 = vadd.f32 %v554, %v818
        %v851 = vadd.f32 %v555, %v819
        %v852 = vadd.f32 %v556, %v820
        %v853 = vadd.f32 %v557, %v821
        %v854 = vadd.f32 %v558, %v822
        %v855 = vadd.f32 %v559, %v823
        %v856 = vadd.f32 %v560, %v824
        %v857 = vlaneseq
        %v858 = vshrl.u32 %v857, 7
        %v859 = vsub.s32 0, %v858
        %v860 = vrot.slane %v262, %v859
        %v861 = vmul.f32 %v372, %v860
        %v862 = vmul.f32 %v377, %v860
        %v863 = vmul.f32 %v382, %v860
        %v864 = vmul.f32 %v387, %v860
        %v865 = vmul.f32 %v392, %v860
        %v866 = vmul.f32 %v397, %v860
        %v867 = vmul.f32 %v402, %v860
        %v868 = vmul.f32 %v407, %v860
        %v869 = vmul.f32 %v412, %v860
        %v870 = vmul.f32 %v417, %v860
        %v871 = vmul.f32 %v422, %v860
        %v872 = vmul.f32 %v427, %v860
        %v873 = vmul.f32 %v432, %v860
        %v874 = vmul.f32 %v437, %v860
        %v875 = vmul.f32 %v442, %v860
        %v876 = vmul.f32 %v447, %v860
        %v877 = vmul.f32 %v452, %v860
        %v878 = vmul.f32 %v457, %v860
        %v879 = vmul.f32 %v462, %v860
        %v880 = vmul.f32 %v467, %v860
        %v881 = vmul.f32 %v472, %v860
        %v882 = vmul.f32 %v477, %v860
        %v883 = vmul.f32 %v482, %v860
        %v884 = vmul.f32 %v487, %v860
        %v885 = vmul.f32 %v492, %v860
        %v886 = vmul.f32 %v497, %v860
        %v887 = vmul.f32 %v502, %v860
        %v888 = vmul.f32 %v507, %v860
        %v889 = vmul.f32 %v512, %v860
        %v890 = vmul.f32 %v517, %v860
        %v891 = vmul.f32 %v522, %v860
        %v892 = vmul.f32 %v527, %v860
        %v893 = vlaneseq
        %v894 = vshrl.u32 %v893, 7
        %v895 = vsub.s32 0, %v894
        %v896 = vrot.slane %v263, %v895
        %v897 = vmul.f32 %v636, %v896
        %v898 = vmul.f32 %v641, %v896
        %v899 = vmul.f32 %v646, %v896
        %v900 = vmul.f32 %v651, %v896
        %v901 = vmul.f32 %v656, %v896
        %v902 = vmul.f32 %v661, %v896
        %v903 = vmul.f32 %v666, %v896
        %v904 = vmul.f32 %v671, %v896
        %v905 = vmul.f32 %v676, %v896
        %v906 = vmul.f32 %v681, %v896
        %v907 = vmul.f32 %v686, %v896
        %v908 = vmul.f32 %v691, %v896
        %v909 = vmul.f32 %v696, %v896
        %v910 = vmul.f32 %v701, %v896
        %v911 = vmul.f32 %v706, %v896
        %v912 = vmul.f32 %v711, %v896
        %v913 = vmul.f32 %v716, %v896
        %v914 = vmul.f32 %v721, %v896
        %v915 = vmul.f32 %v726, %v896
        %v916 = vmul.f32 %v731, %v896
        %v917 = vmul.f32 %v736, %v896
        %v918 = vmul.f32 %v741, %v896
        %v919 = vmul.f32 %v746, %v896
        %v920 = vmul.f32 %v751, %v896
        %v921 = vmul.f32 %v756, %v896
        %v922 = vmul.f32 %v761, %v896
        %v923 = vmul.f32 %v766, %v896
        %v924 = vmul.f32 %v771, %v896
        %v925 = vmul.f32 %v776, %v896
        %v926 = vmul.f32 %v781, %v896
        %v927 = vmul.f32 %v786, %v896
        %v928 = vmul.f32 %v791, %v896
        %v929 = vadd.f32 %v861, %v897
        %v930 = vadd.f32 %v862, %v898
        %v931 = vadd.f32 %v863, %v899
        %v932 = vadd.f32 %v864, %v900
        %v933 = vadd.f32 %v865, %v901
        %v934 = vadd.f32 %v866, %v902
        %v935 = vadd.f32 %v867, %v903
        %v936 = vadd.f32 %v868, %v904
        %v937 = vadd.f32 %v869, %v905
        %v938 = vadd.f32 %v870, %v906
        %v939 = vadd.f32 %v871, %v907
        %v940 = vadd.f32 %v872, %v908
        %v941 = vadd.f32 %v873, %v909
        %v942 = vadd.f32 %v874, %v910
        %v943 = vadd.f32 %v875, %v911
        %v944 = vadd.f32 %v876, %v912
        %v945 = vadd.f32 %v877, %v913
        %v946 = vadd.f32 %v878, %v914
        %v947 = vadd.f32 %v879, %v915
        %v948 = vadd.f32 %v880, %v916
        %v949 = vadd.f32 %v881, %v917
        %v950 = vadd.f32 %v882, %v918
        %v951 = vadd.f32 %v883, %v919
        %v952 = vadd.f32 %v884, %v920
        %v953 = vadd.f32 %v885, %v921
        %v954 = vadd.f32 %v886, %v922
        %v955 = vadd.f32 %v887, %v923
        %v956 = vadd.f32 %v888, %v924
        %v957 = vadd.f32 %v889, %v925
        %v958 = vadd.f32 %v890, %v926
        %v959 = vadd.f32 %v891, %v927
        %v960 = vadd.f32 %v892, %v928
        %v961 = vmul.f32 %v825, %v929
        %v962 = vmul.f32 %v826, %v930
        %v963 = vmul.f32 %v827, %v931
        %v964 = vmul.f32 %v828, %v932
        %v965 = vmul.f32 %v829, %v933
        %v966 = vmul.f32 %v830, %v934
        %v967 = vmul.f32 %v831, %v935
        %v968 = vmul.f32 %v832, %v936
        %v969 = vmul.f32 %v833, %v937
        %v970 = vmul.f32 %v834, %v938
        %v971 = vmul.f32 %v835, %v939
        %v972 = vmul.f32 %v836, %v940
        %v973 = vmul.f32 %v837, %v941
        %v974 = vmul.f32 %v838, %v942
        %v975 = vmul.f32 %v839, %v943
        %v976 = vmul.f32 %v840, %v944
        %v977 = vmul.f32 %v841, %v945
        %v978 = vmul.f32 %v842, %v946
        %v979 = vmul.f32 %v843, %v947
        %v980 = vmul.f32 %v844, %v948
        %v981 = vmul.f32 %v845, %v949
        %v982 = vmul.f32 %v846, %v950
        %v983 = vmul.f32 %v847, %v951
        %v984 = vmul.f32 %v848, %v952
        %v985 = vmul.f32 %v849, %v953
        %v986 = vmul.f32 %v850, %v954
        %v987 = vmul.f32 %v851, %v955
        %v988 = vmul.f32 %v852, %v956
        %v989 = vmul.f32 %v853, %v957
        %v990 = vmul.f32 %v854, %v958
        %v991 = vmul.f32 %v855, %v959
        %v992 = vmul.f32 %v856, %v960
        %v993 = vlaneseq
        %v994 = vshrl.u32 %v993, 7
        %v995 = vsub.s32 0, %v994
        %v996 = vrot.slane %v264, %v995
        %v997 = vadd.f32 %v961, %v996
        %v998 = vadd.f32 %v962, %v996
        %v999 = vadd.f32 %v963, %v996
        %v1000 = vadd.f32 %v964, %v996
        %v1001 = vadd.f32 %v965, %v996
        %v1002 = vadd.f32 %v966, %v996
        %v1003 = vadd.f32 %v967, %v996
        %v1004 = vadd.f32 %v968, %v996
        %v1005 = vadd.f32 %v969, %v996
        %v1006 = vadd.f32 %v970, %v996
        %v1007 = vadd.f32 %v971, %v996
        %v1008 = vadd.f32 %v972, %v996
        %v1009 = vadd.f32 %v973, %v996
        %v1010 = vadd.f32 %v974, %v996
        %v1011 = vadd.f32 %v975, %v996
        %v1012 = vadd.f32 %v976, %v996
        %v1013 = vadd.f32 %v977, %v996
        %v1014 = vadd.f32 %v978, %v996
        %v1015 = vadd.f32 %v979, %v996
        %v1016 = vadd.f32 %v980, %v996
        %v1017 = vadd.f32 %v981, %v996
        %v1018 = vadd.f32 %v982, %v996
        %v1019 = vadd.f32 %v983, %v996
        %v1020 = vadd.f32 %v984, %v996
        %v1021 = vadd.f32 %v985, %v996
        %v1022 = vadd.f32 %v986, %v996
        %v1023 = vadd.f32 %v987, %v996
        %v1024 = vadd.f32 %v988, %v996
        %v1025 = vadd.f32 %v989, %v996
        %v1026 = vadd.f32 %v990, %v996
        %v1027 = vadd.f32 %v991, %v996
        %v1028 = vadd.f32 %v992, %v996
        %vm1029 = vcmp.ge.f32.partialorder %v997, 0.0
        %vm1030 = vcmp.ge.f32.partialorder %v998, 0.0
        %vm1031 = vcmp.ge.f32.partialorder %v999, 0.0
        %vm1032 = vcmp.ge.f32.partialorder %v1000, 0.0
        %vm1033 = vcmp.ge.f32.partialorder %v1001, 0.0
        %vm1034 = vcmp.ge.f32.partialorder %v1002, 0.0
        %vm1035 = vcmp.ge.f32.partialorder %v1003, 0.0
        %vm1036 = vcmp.ge.f32.partialorder %v1004, 0.0
        %vm1037 = vcmp.ge.f32.partialorder %v1005, 0.0
        %vm1038 = vcmp.ge.f32.partialorder %v1006, 0.0
        %vm1039 = vcmp.ge.f32.partialorder %v1007, 0.0
        %vm1040 = vcmp.ge.f32.partialorder %v1008, 0.0
        %vm1041 = vcmp.ge.f32.partialorder %v1009, 0.0
        %vm1042 = vcmp.ge.f32.partialorder %v1010, 0.0
        %vm1043 = vcmp.ge.f32.partialorder %v1011, 0.0
        %vm1044 = vcmp.ge.f32.partialorder %v1012, 0.0
        %vm1045 = vcmp.ge.f32.partialorder %v1013, 0.0
        %vm1046 = vcmp.ge.f32.partialorder %v1014, 0.0
        %vm1047 = vcmp.ge.f32.partialorder %v1015, 0.0
        %vm1048 = vcmp.ge.f32.partialorder %v1016, 0.0
        %vm1049 = vcmp.ge.f32.partialorder %v1017, 0.0
        %vm1050 = vcmp.ge.f32.partialorder %v1018, 0.0
        %vm1051 = vcmp.ge.f32.partialorder %v1019, 0.0
        %vm1052 = vcmp.ge.f32.partialorder %v1020, 0.0
        %vm1053 = vcmp.ge.f32.partialorder %v1021, 0.0
        %vm1054 = vcmp.ge.f32.partialorder %v1022, 0.0
        %vm1055 = vcmp.ge.f32.partialorder %v1023, 0.0
        %vm1056 = vcmp.ge.f32.partialorder %v1024, 0.0
        %vm1057 = vcmp.ge.f32.partialorder %v1025, 0.0
        %vm1058 = vcmp.ge.f32.partialorder %v1026, 0.0
        %vm1059 = vcmp.ge.f32.partialorder %v1027, 0.0
        %vm1060 = vcmp.ge.f32.partialorder %v1028, 0.0
        %v1061 = vmul.f32 %v997, 0.2
        %v1062 = vmul.f32 %v998, 0.2
        %v1063 = vmul.f32 %v999, 0.2
        %v1064 = vmul.f32 %v1000, 0.2
        %v1065 = vmul.f32 %v1001, 0.2
        %v1066 = vmul.f32 %v1002, 0.2
        %v1067 = vmul.f32 %v1003, 0.2
        %v1068 = vmul.f32 %v1004, 0.2
        %v1069 = vmul.f32 %v1005, 0.2
        %v1070 = vmul.f32 %v1006, 0.2
        %v1071 = vmul.f32 %v1007, 0.2
        %v1072 = vmul.f32 %v1008, 0.2
        %v1073 = vmul.f32 %v1009, 0.2
        %v1074 = vmul.f32 %v1010, 0.2
        %v1075 = vmul.f32 %v1011, 0.2
        %v1076 = vmul.f32 %v1012, 0.2
        %v1077 = vmul.f32 %v1013, 0.2
        %v1078 = vmul.f32 %v1014, 0.2
        %v1079 = vmul.f32 %v1015, 0.2
        %v1080 = vmul.f32 %v1016, 0.2
        %v1081 = vmul.f32 %v1017, 0.2
        %v1082 = vmul.f32 %v1018, 0.2
        %v1083 = vmul.f32 %v1019, 0.2
        %v1084 = vmul.f32 %v1020, 0.2
        %v1085 = vmul.f32 %v1021, 0.2
        %v1086 = vmul.f32 %v1022, 0.2
        %v1087 = vmul.f32 %v1023, 0.2
        %v1088 = vmul.f32 %v1024, 0.2
        %v1089 = vmul.f32 %v1025, 0.2
        %v1090 = vmul.f32 %v1026, 0.2
        %v1091 = vmul.f32 %v1027, 0.2
        %v1092 = vmul.f32 %v1028, 0.2
        %v1093 = vsel %vm1029, %v997, %v1061
        %v1094 = vsel %vm1030, %v998, %v1062
        %v1095 = vsel %vm1031, %v999, %v1063
        %v1096 = vsel %vm1032, %v1000, %v1064
        %v1097 = vsel %vm1033, %v1001, %v1065
        %v1098 = vsel %vm1034, %v1002, %v1066
        %v1099 = vsel %vm1035, %v1003, %v1067
        %v1100 = vsel %vm1036, %v1004, %v1068
        %v1101 = vsel %vm1037, %v1005, %v1069
        %v1102 = vsel %vm1038, %v1006, %v1070
        %v1103 = vsel %vm1039, %v1007, %v1071
        %v1104 = vsel %vm1040, %v1008, %v1072
        %v1105 = vsel %vm1041, %v1009, %v1073
        %v1106 = vsel %vm1042, %v1010, %v1074
        %v1107 = vsel %vm1043, %v1011, %v1075
        %v1108 = vsel %vm1044, %v1012, %v1076
        %v1109 = vsel %vm1045, %v1013, %v1077
        %v1110 = vsel %vm1046, %v1014, %v1078
        %v1111 = vsel %vm1047, %v1015, %v1079
        %v1112 = vsel %vm1048, %v1016, %v1080
        %v1113 = vsel %vm1049, %v1017, %v1081
        %v1114 = vsel %vm1050, %v1018, %v1082
        %v1115 = vsel %vm1051, %v1019, %v1083
        %v1116 = vsel %vm1052, %v1020, %v1084
        %v1117 = vsel %vm1053, %v1021, %v1085
        %v1118 = vsel %vm1054, %v1022, %v1086
        %v1119 = vsel %vm1055, %v1023, %v1087
        %v1120 = vsel %vm1056, %v1024, %v1088
        %v1121 = vsel %vm1057, %v1025, %v1089
        %v1122 = vsel %vm1058, %v1026, %v1090
        %v1123 = vsel %vm1059, %v1027, %v1091
        %v1124 = vsel %vm1060, %v1028, %v1092
        %1125 = vst [vmem:[%s180] sm:$0xff] %v1093
        %1126 = vst [vmem:[%s180 + $0x8] sm:$0xff] %v1094
        %1127 = vst [vmem:[%s180 + $0x10] sm:$0xff] %v1095
        %1128 = vst [vmem:[%s180 + $0x18] sm:$0xff] %v1096
        %1129 = vst [vmem:[%s180 + $0x20] sm:$0xff] %v1097
        %1130 = vst [vmem:[%s180 + $0x28] sm:$0xff] %v1098
        %1131 = vst [vmem:[%s180 + $0x30] sm:$0xff] %v1099
        %1132 = vst [vmem:[%s180 + $0x38] sm:$0xff] %v1100
        %1133 = vst [vmem:[%s180 + $0x40] sm:$0xff] %v1101
        %1134 = vst [vmem:[%s180 + $0x48] sm:$0xff] %v1102
        %1135 = vst [vmem:[%s180 + $0x50] sm:$0xff] %v1103
        %1136 = vst [vmem:[%s180 + $0x58] sm:$0xff] %v1104
        %1137 = vst [vmem:[%s180 + $0x60] sm:$0xff] %v1105
        %1138 = vst [vmem:[%s180 + $0x68] sm:$0xff] %v1106
        %1139 = vst [vmem:[%s180 + $0x70] sm:$0xff] %v1107
        %1140 = vst [vmem:[%s180 + $0x78] sm:$0xff] %v1108
        %1141 = vst [vmem:[%s180 + $0x80] sm:$0xff] %v1109
        %1142 = vst [vmem:[%s180 + $0x88] sm:$0xff] %v1110
        %1143 = vst [vmem:[%s180 + $0x90] sm:$0xff] %v1111
        %1144 = vst [vmem:[%s180 + $0x98] sm:$0xff] %v1112
        %1145 = vst [vmem:[%s180 + $0xa0] sm:$0xff] %v1113
        %1146 = vst [vmem:[%s180 + $0xa8] sm:$0xff] %v1114
        %1147 = vst [vmem:[%s180 + $0xb0] sm:$0xff] %v1115
        %1148 = vst [vmem:[%s180 + $0xb8] sm:$0xff] %v1116
        %1149 = vst [vmem:[%s180 + $0xc0] sm:$0xff] %v1117
        %1150 = vst [vmem:[%s180 + $0xc8] sm:$0xff] %v1118
        %1151 = vst [vmem:[%s180 + $0xd0] sm:$0xff] %v1119
        %1152 = vst [vmem:[%s180 + $0xd8] sm:$0xff] %v1120
        %1153 = vst [vmem:[%s180 + $0xe0] sm:$0xff] %v1121
        %1154 = vst [vmem:[%s180 + $0xe8] sm:$0xff] %v1122
        %1155 = vst [vmem:[%s180 + $0xf0] sm:$0xff] %v1123
        %1156 = vst [vmem:[%s180 + $0xf8] sm:$0xff] %v1124
        %s1157 = sand.u32 %s98, 1
        %s1158 = scalar_lea.sflag [#allocation3], %s1157
        %s1159 = sand.u32 %s98, 1
        %s1160 = smul.addr %s1159, 256
        %s1161 = scalar_lea.vmem [#allocation2], %s1160
        // Predicated region
        $region33: #{pconv_layer_forward.3} parent=31 // pred_check
          %p1162 = pneg %p108
        $region34: #{pconv_layer_forward.3} parent=31 // pred_check_branch
          %1164 = sbr.rel (%p1162) target = $region36
        $region35: #{pconv_layer_forward.3} parent=31 // pred_region
          %s1165 = smul.u32 32, %s17
          %s1167 = ssub.s32 4096, 4096
          %1168 = vsyncadd %s1158, %s1167
          %s1169 = smul.addr %s1165, 128
          %s1170 = scalar_lea.hbm %s3, %s1169
          %s1171 = sshll.u32 %s1161, 4
          %s1172 = int_to_ptr.vmem [resolvable:$true] %s1171
          %1177 = dma.vmem_to_hbm [thread:$0]  %s1172, 4096, %s1170, %s1158, 128, 128, 8
        $region36: #{pconv_layer_forward.3} parent=31 // pred_fallthru
          _
      $region32: #{pconv_layer_forward.3} parent=5 // pred_fallthru
        _
      %p1178 = scmp.le.s32.totalorder 2, %s12
      // Predicated region
      $region37: #{pconv_layer_forward.3} parent=5 // pred_check
        %p1179 = pneg %p1178
      $region38: #{pconv_layer_forward.3} parent=5 // pred_check_branch
        %1181 = sbr.rel (%p1179) target = $region40
      $region39: #{pconv_layer_forward.3} parent=5 // pred_region
        %s1182 = ssub.s32 %s12, 2
        // Predicated region
        $region41: #{pconv_layer_forward.3} parent=39 // pred_check
          %p1183 = pneg %p114
        $region42: #{pconv_layer_forward.3} parent=39 // pred_check_branch
          %1185 = sbr.rel (%p1183) target = $region44
        $region43: #{pconv_layer_forward.3} parent=39 // pred_region
          %s1186 = sand.u32 %s99, 1
          %s1187 = scalar_lea.sflag [#allocation3], %s1186
          %s1188 = sand.u32 %s99, 1
          %s1189 = smul.addr %s1188, 256
          %s1190 = scalar_lea.vmem [#allocation2], %s1189
          %1191 = dma.done %s1187, 4096
        $region44: #{pconv_layer_forward.3} parent=39 // pred_fallthru
          _
      $region40: #{pconv_layer_forward.3} parent=5 // pred_fallthru
        _
    $region6: #{pconv_layer_forward.3} parent=1 // loop_footer
      %s16 = sadd.s32 1, %s12
    $region7: #{pconv_layer_forward.3} parent=1 // loop_footer_branch
      %11 = sbr.rel target = $region3
    $region8: #{pconv_layer_forward.3} parent=1 // loop_exit
      _
    %1192 = vsyncpa [#allocation3], 1
    %s1193 = scalar_lea.sflag [#allocation3], 1
    %1194 = vsyncpa %s1193, 1

// kernel: pconv_layer_forward.2
$region0: #{pconv_layer_forward.2}
  #allocation0 [shape = 'u32[]', space=smem, size = 0x4, offset = 0x4, fixed_abs, tag = 'smem constant byte address 0x4 - core index']
  #allocation1 [shape = 'u32[144,128]{1,0:T(1,128)}', space=vmem, size = 0x12000, scoped, tag = 'internal scratch']
  #allocation2 [shape = 'f32[256,128]{1,0:T(8,128)}', space=vmem, size = 0x20000, scoped, tag = 'scratch operand']
  %s0 = inlined_call_operand.vmem [shape: bf16[512,128], index: 0, kind: input, shape index: {}]
  %s1 = inlined_call_operand.vmem [shape: bf16[128,128], index: 1, kind: input, shape index: {}]
  %s2 = inlined_call_operand.vmem [shape: f32[512,1], index: 2, kind: input, shape index: {}]
  %s3 = inlined_call_operand.vmem [shape: f32[512,1], index: 3, kind: input, shape index: {}]
  %s4 = inlined_call_operand.vmem [shape: f32[512,128], index: 4, kind: output, shape index: {0}]
  %s5 = inlined_call_operand.vmem [shape: f32[16,128], index: 5, kind: output, shape index: {1}]
  %6 = xla_tuple %s4, %s5
  %s7 = sld [smem:[#allocation0]]
  $region65: #{pconv_layer_forward.2} parent=0
    _
  %s9 = ssub.s32 1, %s7
  %s10 = scalar_select 0, %s9, %s7
  loop: start=0, step=1, limit=4
  $region2: #{pconv_layer_forward.2} parent=0 // loop_pre_header
    _
  $region3: #{pconv_layer_forward.2} parent=0 // loop_header
    %s12 = sphi 0, %s16
    %p13 = scmp.ge.s32.totalorder %s12, 4
    %s19 = sphi 0, %s31
    %s20 = sphi 0, %s27
    %s21 = sphi 0, %s19
    %s22 = sphi 0, %s20
    %s23 = sphi 0, %s21
    %s24 = sphi 0, %s22
    %s36 = sphi 0, %s38
    %s39 = sphi 0, %s36
    %s40 = sphi 0, %s39
    %s56 = sphi 0, %s40
    %s62 = sphi 0, %s64
    %s65 = sphi 0, %s62
    %s66 = sphi 0, %s65
    %s82 = sphi 0, %s66
    %s88 = sphi 0, %s90
    %s91 = sphi 0, %s88
    %s92 = sphi 0, %s91
    %s108 = sphi 0, %s92
    %s114 = sphi 0, %s116
    %s117 = sphi 0, %s114
    %s118 = sphi 0, %s117
    %s134 = sphi 0, %s118
    %s140 = sphi 0, %s142
    %s143 = sphi 0, %s140
    %s144 = sphi 0, %s143
    %s160 = sphi 0, %s144
    %s166 = sphi 0, %s168
    %s169 = sphi 0, %s166
    %s170 = sphi 0, %s169
    %s186 = sphi 0, %s170
  $region4: #{pconv_layer_forward.2} parent=0 // loop_header_branch
    %15 = sbr.rel (%p13) target = $region8
  $region5: #{pconv_layer_forward.2} parent=0 // loop_body
    %s17 = ssub.s32 %s12, 1
    %s18 = ssub.s32 %s12, 2
    %s25 = sadd.s32 1, %s20
    %p26 = scmp.ge.s32.totalorder %s25, 1
    %s27 = scalar_select %p26, 0, %s25
    %s28 = sadd.s32 1, %s19
    %s29 = scalar_select %p26, %s28, %s19
    %p30 = scmp.ge.s32.totalorder %s29, 2
    %s31 = scalar_select %p30, 0, %s29
    %s32 = ssub.s32 %s19, %s31
    %s33 = ssub.s32 %s20, %s27
    %s34 = sor.u32 %s32, %s33
    %p35 = scmp.eq.s32.totalorder %s34, 0
    %s37 = sadd.s32 %s36, 1
    %s38 = scalar_select %p35, %s36, %s37
    %p41 = pneg %p35
    %p42 = scmp.eq.s32.totalorder %s12, 1
    %p43 = por %p41, %p42
    %p44 = scmp.ne.s32.totalorder %s36, %s39
    %p45 = scmp.eq.s32.totalorder %s12, 0
    %p46 = por %p44, %p45
    %p47 = scmp.ne.s32.totalorder %s36, %s39
    %p48 = scmp.eq.s32.totalorder %s17, 1
    %p49 = por %p47, %p48
    %p50 = scmp.ne.s32.totalorder %s39, %s40
    %p51 = scmp.eq.s32.totalorder %s17, 0
    %p52 = por %p50, %p51
    %p53 = scmp.ne.s32.totalorder %s39, %s40
    %p54 = scmp.eq.s32.totalorder %s18, 1
    %p55 = por %p53, %p54
    %p57 = scmp.ne.s32.totalorder %s40, %s56
    %p58 = scmp.eq.s32.totalorder %s18, 0
    %p59 = por %p57, %p58
    %s60 = ssub.s32 %s20, %s27
    %p61 = scmp.eq.s32.totalorder %s60, 0
    %s63 = sadd.s32 %s62, 1
    %s64 = scalar_select %p61, %s62, %s63
    %p67 = pneg %p61
    %p68 = scmp.eq.s32.totalorder %s12, 1
    %p69 = por %p67, %p68
    %p70 = scmp.ne.s32.totalorder %s62, %s65
    %p71 = scmp.eq.s32.totalorder %s12, 0
    %p72 = por %p70, %p71
    %p73 = scmp.ne.s32.totalorder %s62, %s65
    %p74 = scmp.eq.s32.totalorder %s17, 1
    %p75 = por %p73, %p74
    %p76 = scmp.ne.s32.totalorder %s65, %s66
    %p77 = scmp.eq.s32.totalorder %s17, 0
    %p78 = por %p76, %p77
    %p79 = scmp.ne.s32.totalorder %s65, %s66
    %p80 = scmp.eq.s32.totalorder %s18, 1
    %p81 = por %p79, %p80
    %p83 = scmp.ne.s32.totalorder %s66, %s82
    %p84 = scmp.eq.s32.totalorder %s18, 0
    %p85 = por %p83, %p84
    %s86 = ssub.s32 %s19, %s31
    %p87 = scmp.eq.s32.totalorder %s86, 0
    %s89 = sadd.s32 %s88, 1
    %s90 = scalar_select %p87, %s88, %s89
    %p93 = pneg %p87
    %p94 = scmp.eq.s32.totalorder %s12, 1
    %p95 = por %p93, %p94
    %p96 = scmp.ne.s32.totalorder %s88, %s91
    %p97 = scmp.eq.s32.totalorder %s12, 0
    %p98 = por %p96, %p97
    %p99 = scmp.ne.s32.totalorder %s88, %s91
    %p100 = scmp.eq.s32.totalorder %s17, 1
    %p101 = por %p99, %p100
    %p102 = scmp.ne.s32.totalorder %s91, %s92
    %p103 = scmp.eq.s32.totalorder %s17, 0
    %p104 = por %p102, %p103
    %p105 = scmp.ne.s32.totalorder %s91, %s92
    %p106 = scmp.eq.s32.totalorder %s18, 1
    %p107 = por %p105, %p106
    %p109 = scmp.ne.s32.totalorder %s92, %s108
    %p110 = scmp.eq.s32.totalorder %s18, 0
    %p111 = por %p109, %p110
    %s112 = ssub.s32 %s19, %s31
    %p113 = scmp.eq.s32.totalorder %s112, 0
    %s115 = sadd.s32 %s114, 1
    %s116 = scalar_select %p113, %s114, %s115
    %p119 = pneg %p113
    %p120 = scmp.eq.s32.totalorder %s12, 1
    %p121 = por %p119, %p120
    %p122 = scmp.ne.s32.totalorder %s114, %s117
    %p123 = scmp.eq.s32.totalorder %s12, 0
    %p124 = por %p122, %p123
    %p125 = scmp.ne.s32.totalorder %s114, %s117
    %p126 = scmp.eq.s32.totalorder %s17, 1
    %p127 = por %p125, %p126
    %p128 = scmp.ne.s32.totalorder %s117, %s118
    %p129 = scmp.eq.s32.totalorder %s17, 0
    %p130 = por %p128, %p129
    %p131 = scmp.ne.s32.totalorder %s117, %s118
    %p132 = scmp.eq.s32.totalorder %s18, 1
    %p133 = por %p131, %p132
    %p135 = scmp.ne.s32.totalorder %s118, %s134
    %p136 = scmp.eq.s32.totalorder %s18, 0
    %p137 = por %p135, %p136
    %s138 = ssub.s32 %s19, %s31
    %p139 = scmp.eq.s32.totalorder %s138, 0
    %s141 = sadd.s32 %s140, 1
    %s142 = scalar_select %p139, %s140, %s141
    %p145 = pneg %p139
    %p146 = scmp.eq.s32.totalorder %s12, 1
    %p147 = por %p145, %p146
    %p148 = scmp.ne.s32.totalorder %s140, %s143
    %p149 = scmp.eq.s32.totalorder %s12, 0
    %p150 = por %p148, %p149
    %p151 = scmp.ne.s32.totalorder %s140, %s143
    %p152 = scmp.eq.s32.totalorder %s17, 1
    %p153 = por %p151, %p152
    %p154 = scmp.ne.s32.totalorder %s143, %s144
    %p155 = scmp.eq.s32.totalorder %s17, 0
    %p156 = por %p154, %p155
    %p157 = scmp.ne.s32.totalorder %s143, %s144
    %p158 = scmp.eq.s32.totalorder %s18, 1
    %p159 = por %p157, %p158
    %p161 = scmp.ne.s32.totalorder %s144, %s160
    %p162 = scmp.eq.s32.totalorder %s18, 0
    %p163 = por %p161, %p162
    %s164 = ssub.s32 %s19, %s31
    %p165 = scmp.eq.s32.totalorder %s164, 0
    %s167 = sadd.s32 %s166, 1
    %s168 = scalar_select %p165, %s166, %s167
    %p171 = pneg %p165
    %p172 = scmp.eq.s32.totalorder %s12, 1
    %p173 = por %p171, %p172
    %p174 = scmp.ne.s32.totalorder %s166, %s169
    %p175 = scmp.eq.s32.totalorder %s12, 0
    %p176 = por %p174, %p175
    %p177 = scmp.ne.s32.totalorder %s166, %s169
    %p178 = scmp.eq.s32.totalorder %s17, 1
    %p179 = por %p177, %p178
    %p180 = scmp.ne.s32.totalorder %s169, %s170
    %p181 = scmp.eq.s32.totalorder %s17, 0
    %p182 = por %p180, %p181
    %p183 = scmp.ne.s32.totalorder %s169, %s170
    %p184 = scmp.eq.s32.totalorder %s18, 1
    %p185 = por %p183, %p184
    %p187 = scmp.ne.s32.totalorder %s170, %s186
    %p188 = scmp.eq.s32.totalorder %s18, 0
    %p189 = por %p187, %p188
    %p190 = scmp.le.s32.totalorder 1, %s12
    %p191 = scmp.lt.s32.totalorder %s12, 3
    %p192 = pnand %p190, %p191
    %p193 = pneg %p192
    // Predicated region
    $region9: #{pconv_layer_forward.2} parent=5 // pred_check
      _
    $region10: #{pconv_layer_forward.2} parent=5 // pred_check_branch
      %195 = sbr.rel (%p192) target = $region12
    $region11: #{pconv_layer_forward.2} parent=5 // pred_region
      %s196 = ssub.s32 %s12, 1
      // Predicated region
      $region13: #{pconv_layer_forward.2} parent=11 // pred_check
        %p197 = pneg %p78
      $region14: #{pconv_layer_forward.2} parent=11 // pred_check_branch
        %199 = sbr.rel (%p197) target = $region16
      $region15: #{pconv_layer_forward.2} parent=11 // pred_region
        %s200 = smul.u32 16, %s22
        %p201 = scmp.lt.s32.totalorder %s200, 15
        %s202 = scalar_select %p201, %s200, 15
        %s203 = smul.addr %s202, 4
        %s204 = scalar_lea.vmem %s1, %s203
        %s205 = smul.u32 16, %s22
      $region16: #{pconv_layer_forward.2} parent=11 // pred_fallthru
        _
    $region12: #{pconv_layer_forward.2} parent=5 // pred_fallthru
      _
    %p206 = scmp.lt.s32.totalorder %s12, 2
    // Predicated region
    $region17: #{pconv_layer_forward.2} parent=5 // pred_check
      %p207 = pneg %p206
    $region18: #{pconv_layer_forward.2} parent=5 // pred_check_branch
      %209 = sbr.rel (%p207) target = $region20
    $region19: #{pconv_layer_forward.2} parent=5 // pred_region
      // Predicated region
      $region21: #{pconv_layer_forward.2} parent=19 // pred_check
        %p210 = pneg %p46
      $region22: #{pconv_layer_forward.2} parent=19 // pred_check_branch
        %212 = sbr.rel (%p210) target = $region24
      $region23: #{pconv_layer_forward.2} parent=19 // pred_region
        %s213 = smul.u32 32, %s19
        %p214 = scmp.lt.s32.totalorder %s213, 63
        %s215 = scalar_select %p214, %s213, 63
        %p216 = scmp.lt.s32.totalorder %s20, 0
        %s217 = scalar_select %p216, %s20, 0
        %s218 = sadd.s32 %s217, %s215
        %s219 = smul.addr %s218, 4
        %s220 = scalar_lea.vmem %s0, %s219
        %s221 = smul.u32 32, %s19
      $region24: #{pconv_layer_forward.2} parent=19 // pred_fallthru
        _
      // Predicated region
      $region25: #{pconv_layer_forward.2} parent=19 // pred_check
        %p222 = pneg %p98
      $region26: #{pconv_layer_forward.2} parent=19 // pred_check_branch
        %224 = sbr.rel (%p222) target = $region28
      $region27: #{pconv_layer_forward.2} parent=19 // pred_region
        %s225 = smul.u32 32, %s19
        %p226 = scmp.lt.s32.totalorder %s225, 63
        %s227 = scalar_select %p226, %s225, 63
        %s228 = smul.addr %s227, 8
        %s229 = scalar_lea.vmem %s2, %s228
        %s230 = smul.u32 32, %s19
      $region28: #{pconv_layer_forward.2} parent=19 // pred_fallthru
        _
      // Predicated region
      $region29: #{pconv_layer_forward.2} parent=19 // pred_check
        %p231 = pneg %p124
      $region30: #{pconv_layer_forward.2} parent=19 // pred_check_branch
        %233 = sbr.rel (%p231) target = $region32
      $region31: #{pconv_layer_forward.2} parent=19 // pred_region
        %s234 = smul.u32 32, %s19
        %p235 = scmp.lt.s32.totalorder %s234, 63
        %s236 = scalar_select %p235, %s234, 63
        %s237 = smul.addr %s236, 8
        %s238 = scalar_lea.vmem %s3, %s237
        %s239 = smul.u32 32, %s19
      $region32: #{pconv_layer_forward.2} parent=19 // pred_fallthru
        _
    $region20: #{pconv_layer_forward.2} parent=5 // pred_fallthru
      _
    %p240 = scmp.le.s32.totalorder 1, %s12
    %p241 = scmp.lt.s32.totalorder %s12, 3
    %p242 = pnand %p240, %p241
    %p243 = pneg %p242
    // Predicated region
    $region33: #{pconv_layer_forward.2} parent=5 // pred_check
      _
    $region34: #{pconv_layer_forward.2} parent=5 // pred_check_branch
      %245 = sbr.rel (%p242) target = $region36
    $region35: #{pconv_layer_forward.2} parent=5 // pred_region
      %s246 = ssub.s32 %s12, 1
      %s247 = smul.u32 32, %s21
      %p248 = scmp.lt.s32.totalorder %s247, 63
      %s249 = scalar_select %p248, %s247, 63
      %p250 = scmp.lt.s32.totalorder %s22, 0
      %s251 = scalar_select %p250, %s22, 0
      %s252 = sadd.s32 %s251, %s249
      %s253 = smul.addr %s252, 4
      %s254 = scalar_lea.vmem %s0, %s253
      %p255 = pneg %p52
      %p256 = pneg %p49
      %s257 = smul.u32 16, %s22
      %p258 = scmp.lt.s32.totalorder %s257, 15
      %s259 = scalar_select %p258, %s257, 15
      %s260 = smul.addr %s259, 4
      %s261 = scalar_lea.vmem %s1, %s260
      %p262 = pneg %p78
      %p263 = pneg %p75
      %s264 = smul.u32 32, %s21
      %p265 = scmp.lt.s32.totalorder %s264, 63
      %s266 = scalar_select %p265, %s264, 63
      %s267 = smul.addr %s266, 8
      %s268 = scalar_lea.vmem %s2, %s267
      %p269 = pneg %p104
      %p270 = pneg %p101
      %s271 = smul.u32 32, %s21
      %p272 = scmp.lt.s32.totalorder %s271, 63
      %s273 = scalar_select %p272, %s271, 63
      %s274 = smul.addr %s273, 8
      %s275 = scalar_lea.vmem %s3, %s274
      %p276 = pneg %p130
      %p277 = pneg %p127
      %p278 = pneg %p156
      %p279 = pneg %p153
      %s280 = smul.u32 32, %s21
      %p281 = scmp.lt.s32.totalorder %s280, 63
      %s282 = scalar_select %p281, %s280, 63
      %s283 = smul.addr %s282, 8
      %s284 = scalar_lea.vmem %s4, %s283
      %p285 = pneg %p182
      %p286 = pneg %p179
      %p287 = scmp.lt.s32.totalorder %s21, 1
      %s288 = scalar_select %p287, %s21, 1
      %s289 = smul.addr %s288, 8
      %s290 = scalar_lea.vmem %s5, %s289
      %s291 = smul.u32 32, %s21
      %p292 = scmp.lt.s32.totalorder %s291, 63
      %s293 = scalar_select %p292, %s291, 63
      %p294 = scmp.lt.s32.totalorder %s22, 0
      %s295 = scalar_select %p294, %s22, 0
      %s296 = sadd.s32 %s295, %s293
      %s297 = smul.addr %s296, 4
      %s298 = scalar_lea.vmem %s0, %s297
      %s299 = smul.u32 32, %s21
      %s300 = smul.u32 16, %s22
      %p301 = scmp.lt.s32.totalorder %s300, 15
      %s302 = scalar_select %p301, %s300, 15
      %s303 = smul.addr %s302, 4
      %s304 = scalar_lea.vmem %s1, %s303
      %s305 = smul.u32 16, %s22
      %s306 = smul.u32 32, %s21
      %p307 = scmp.lt.s32.totalorder %s306, 63
      %s308 = scalar_select %p307, %s306, 63
      %s309 = smul.addr %s308, 8
      %s310 = scalar_lea.vmem %s2, %s309
      %s311 = smul.u32 32, %s21
      %s312 = smul.u32 32, %s21
      %p313 = scmp.lt.s32.totalorder %s312, 63
      %s314 = scalar_select %p313, %s312, 63
      %s315 = smul.addr %s314, 8
      %s316 = scalar_lea.vmem %s3, %s315
      %s317 = smul.u32 32, %s21
      %s318 = smul.u32 32, %s21
      %p319 = scmp.lt.s32.totalorder %s318, 63
      %s320 = scalar_select %p319, %s318, 63
      %s321 = smul.addr %s320, 8
      %s322 = scalar_lea.vmem %s4, %s321
      %s323 = smul.u32 32, %s21
      %p324 = scmp.lt.s32.totalorder %s21, 1
      %s325 = scalar_select %p324, %s21, 1
      %s326 = smul.addr %s325, 8
      %s327 = scalar_lea.vmem %s5, %s326
      %p329 = scmp.eq.s32.totalorder %s22, 0
      // Predicated region
      $region37: #{pconv_layer_forward.2} parent=35 // pred_check
        %p330 = pneg %p329
      $region38: #{pconv_layer_forward.2} parent=35 // pred_check_branch
        %332 = sbr.rel (%p330) target = $region40
      $region39: #{pconv_layer_forward.2} parent=35 // pred_region
        %333 = vst [vmem:[#allocation2] sm:$0xff] 0.0
        %334 = vst [vmem:[#allocation2 + $0x8] sm:$0xff] 0.0
        %335 = vst [vmem:[#allocation2 + $0x10] sm:$0xff] 0.0
        %336 = vst [vmem:[#allocation2 + $0x18] sm:$0xff] 0.0
        %337 = vst [vmem:[#allocation2 + $0x20] sm:$0xff] 0.0
        %338 = vst [vmem:[#allocation2 + $0x28] sm:$0xff] 0.0
        %339 = vst [vmem:[#allocation2 + $0x30] sm:$0xff] 0.0
        %340 = vst [vmem:[#allocation2 + $0x38] sm:$0xff] 0.0
        %341 = vst [vmem:[#allocation2 + $0x40] sm:$0xff] 0.0
        %342 = vst [vmem:[#allocation2 + $0x48] sm:$0xff] 0.0
        %343 = vst [vmem:[#allocation2 + $0x50] sm:$0xff] 0.0
        %344 = vst [vmem:[#allocation2 + $0x58] sm:$0xff] 0.0
        %345 = vst [vmem:[#allocation2 + $0x60] sm:$0xff] 0.0
        %346 = vst [vmem:[#allocation2 + $0x68] sm:$0xff] 0.0
        %347 = vst [vmem:[#allocation2 + $0x70] sm:$0xff] 0.0
        %348 = vst [vmem:[#allocation2 + $0x78] sm:$0xff] 0.0
        %349 = vst [vmem:[#allocation2 + $0x80] sm:$0xff] 0.0
        %350 = vst [vmem:[#allocation2 + $0x88] sm:$0xff] 0.0
        %351 = vst [vmem:[#allocation2 + $0x90] sm:$0xff] 0.0
        %352 = vst [vmem:[#allocation2 + $0x98] sm:$0xff] 0.0
        %353 = vst [vmem:[#allocation2 + $0xa0] sm:$0xff] 0.0
        %354 = vst [vmem:[#allocation2 + $0xa8] sm:$0xff] 0.0
        %355 = vst [vmem:[#allocation2 + $0xb0] sm:$0xff] 0.0
        %356 = vst [vmem:[#allocation2 + $0xb8] sm:$0xff] 0.0
        %357 = vst [vmem:[#allocation2 + $0xc0] sm:$0xff] 0.0
        %358 = vst [vmem:[#allocation2 + $0xc8] sm:$0xff] 0.0
        %359 = vst [vmem:[#allocation2 + $0xd0] sm:$0xff] 0.0
        %360 = vst [vmem:[#allocation2 + $0xd8] sm:$0xff] 0.0
        %361 = vst [vmem:[#allocation2 + $0xe0] sm:$0xff] 0.0
        %362 = vst [vmem:[#allocation2 + $0xe8] sm:$0xff] 0.0
        %363 = vst [vmem:[#allocation2 + $0xf0] sm:$0xff] 0.0
        %364 = vst [vmem:[#allocation2 + $0xf8] sm:$0xff] 0.0
      $region40: #{pconv_layer_forward.2} parent=35 // pred_fallthru
        _
      %v365 = vld [vmem:[#allocation2] sm:$0xff]
      %v366 = vld [vmem:[#allocation2 + $0x8] sm:$0xff]
      %v367 = vld [vmem:[#allocation2 + $0x10] sm:$0xff]
      %v368 = vld [vmem:[#allocation2 + $0x18] sm:$0xff]
      %v369 = vld [vmem:[#allocation2 + $0x20] sm:$0xff]
      %v370 = vld [vmem:[#allocation2 + $0x28] sm:$0xff]
      %v371 = vld [vmem:[#allocation2 + $0x30] sm:$0xff]
      %v372 = vld [vmem:[#allocation2 + $0x38] sm:$0xff]
      %v373 = vld [vmem:[#allocation2 + $0x40] sm:$0xff]
      %v374 = vld [vmem:[#allocation2 + $0x48] sm:$0xff]
      %v375 = vld [vmem:[#allocation2 + $0x50] sm:$0xff]
      %v376 = vld [vmem:[#allocation2 + $0x58] sm:$0xff]
      %v377 = vld [vmem:[#allocation2 + $0x60] sm:$0xff]
      %v378 = vld [vmem:[#allocation2 + $0x68] sm:$0xff]
      %v379 = vld [vmem:[#allocation2 + $0x70] sm:$0xff]
      %v380 = vld [vmem:[#allocation2 + $0x78] sm:$0xff]
      %v381 = vld [vmem:[#allocation2 + $0x80] sm:$0xff]
      %v382 = vld [vmem:[#allocation2 + $0x88] sm:$0xff]
      %v383 = vld [vmem:[#allocation2 + $0x90] sm:$0xff]
      %v384 = vld [vmem:[#allocation2 + $0x98] sm:$0xff]
      %v385 = vld [vmem:[#allocation2 + $0xa0] sm:$0xff]
      %v386 = vld [vmem:[#allocation2 + $0xa8] sm:$0xff]
      %v387 = vld [vmem:[#allocation2 + $0xb0] sm:$0xff]
      %v388 = vld [vmem:[#allocation2 + $0xb8] sm:$0xff]
      %v389 = vld [vmem:[#allocation2 + $0xc0] sm:$0xff]
      %v390 = vld [vmem:[#allocation2 + $0xc8] sm:$0xff]
      %v391 = vld [vmem:[#allocation2 + $0xd0] sm:$0xff]
      %v392 = vld [vmem:[#allocation2 + $0xd8] sm:$0xff]
      %v393 = vld [vmem:[#allocation2 + $0xe0] sm:$0xff]
      %v394 = vld [vmem:[#allocation2 + $0xe8] sm:$0xff]
      %v395 = vld [vmem:[#allocation2 + $0xf0] sm:$0xff]
      %v396 = vld [vmem:[#allocation2 + $0xf8] sm:$0xff]
      %v397 = vld [vmem:[%s298] sm:$0xf]
      %v398 = vld [vmem:[%s298 + $0x4] sm:$0xf]
      %v399 = vld [vmem:[%s298 + $0x8] sm:$0xf]
      %v400 = vld [vmem:[%s298 + $0xc] sm:$0xf]
      %v401 = vld [vmem:[%s298 + $0x10] sm:$0xf]
      %v402 = vld [vmem:[%s298 + $0x14] sm:$0xf]
      %v403 = vld [vmem:[%s298 + $0x18] sm:$0xf]
      %v404 = vld [vmem:[%s298 + $0x1c] sm:$0xf]
      %v405 = vld [vmem:[%s298 + $0x20] sm:$0xf]
      %v406 = vld [vmem:[%s298 + $0x24] sm:$0xf]
      %v407 = vld [vmem:[%s298 + $0x28] sm:$0xf]
      %v408 = vld [vmem:[%s298 + $0x2c] sm:$0xf]
      %v409 = vld [vmem:[%s298 + $0x30] sm:$0xf]
      %v410 = vld [vmem:[%s298 + $0x34] sm:$0xf]
      %v411 = vld [vmem:[%s298 + $0x38] sm:$0xf]
      %v412 = vld [vmem:[%s298 + $0x3c] sm:$0xf]
      %v413 = vld [vmem:[%s298 + $0x40] sm:$0xf]
      %v414 = vld [vmem:[%s298 + $0x44] sm:$0xf]
      %v415 = vld [vmem:[%s298 + $0x48] sm:$0xf]
      %v416 = vld [vmem:[%s298 + $0x4c] sm:$0xf]
      %v417 = vld [vmem:[%s298 + $0x50] sm:$0xf]
      %v418 = vld [vmem:[%s298 + $0x54] sm:$0xf]
      %v419 = vld [vmem:[%s298 + $0x58] sm:$0xf]
      %v420 = vld [vmem:[%s298 + $0x5c] sm:$0xf]
      %v421 = vld [vmem:[%s298 + $0x60] sm:$0xf]
      %v422 = vld [vmem:[%s298 + $0x64] sm:$0xf]
      %v423 = vld [vmem:[%s298 + $0x68] sm:$0xf]
      %v424 = vld [vmem:[%s298 + $0x6c] sm:$0xf]
      %v425 = vld [vmem:[%s298 + $0x70] sm:$0xf]
      %v426 = vld [vmem:[%s298 + $0x74] sm:$0xf]
      %v427 = vld [vmem:[%s298 + $0x78] sm:$0xf]
      %v428 = vld [vmem:[%s298 + $0x7c] sm:$0xf]
      %v429 = vld [vmem:[%s304] sm:$0xf]
      %v430 = vld [vmem:[%s304 + $0x4] sm:$0xf]
      %v431 = vld [vmem:[%s304 + $0x8] sm:$0xf]
      %v432 = vld [vmem:[%s304 + $0xc] sm:$0xf]
      %v433 = vld [vmem:[%s304 + $0x10] sm:$0xf]
      %v434 = vld [vmem:[%s304 + $0x14] sm:$0xf]
      %v435 = vld [vmem:[%s304 + $0x18] sm:$0xf]
      %v436 = vld [vmem:[%s304 + $0x1c] sm:$0xf]
      %v437 = vld [vmem:[%s304 + $0x20] sm:$0xf]
      %v438 = vld [vmem:[%s304 + $0x24] sm:$0xf]
      %v439 = vld [vmem:[%s304 + $0x28] sm:$0xf]
      %v440 = vld [vmem:[%s304 + $0x2c] sm:$0xf]
      %v441 = vld [vmem:[%s304 + $0x30] sm:$0xf]
      %v442 = vld [vmem:[%s304 + $0x34] sm:$0xf]
      %v443 = vld [vmem:[%s304 + $0x38] sm:$0xf]
      %v444 = vld [vmem:[%s304 + $0x3c] sm:$0xf]
      %v477 = vunpack.c.l.b16 %v397
      %v478 = vunpack.c.l.b16 %v398
      %v479 = vunpack.c.l.b16 %v399
      %v480 = vunpack.c.l.b16 %v400
      %v481 = vunpack.c.l.b16 %v401
      %v482 = vunpack.c.l.b16 %v402
      %v483 = vunpack.c.l.b16 %v403
      %v484 = vunpack.c.l.b16 %v404
      %v485 = vunpack.c.l.b16 %v405
      %v486 = vunpack.c.l.b16 %v406
      %v487 = vunpack.c.l.b16 %v407
      %v488 = vunpack.c.l.b16 %v408
      %v489 = vunpack.c.l.b16 %v409
      %v490 = vunpack.c.l.b16 %v410
      %v491 = vunpack.c.l.b16 %v411
      %v492 = vunpack.c.l.b16 %v412
      %v493 = vunpack.c.l.b16 %v413
      %v494 = vunpack.c.l.b16 %v414
      %v495 = vunpack.c.l.b16 %v415
      %v496 = vunpack.c.l.b16 %v416
      %v497 = vunpack.c.l.b16 %v417
      %v498 = vunpack.c.l.b16 %v418
      %v499 = vunpack.c.l.b16 %v419
      %v500 = vunpack.c.l.b16 %v420
      %v501 = vunpack.c.l.b16 %v421
      %v502 = vunpack.c.l.b16 %v422
      %v503 = vunpack.c.l.b16 %v423
      %v504 = vunpack.c.l.b16 %v424
      %v505 = vunpack.c.l.b16 %v425
      %v506 = vunpack.c.l.b16 %v426
      %v507 = vunpack.c.l.b16 %v427
      %v508 = vunpack.c.l.b16 %v428
      %v509 = vpack.c.b16 %v478, %v477
      %v510 = vpack.c.b16 %v480, %v479
      %v511 = vpack.c.b16 %v482, %v481
      %v512 = vpack.c.b16 %v484, %v483
      %v513 = vpack.c.b16 %v486, %v485
      %v514 = vpack.c.b16 %v488, %v487
      %v515 = vpack.c.b16 %v490, %v489
      %v516 = vpack.c.b16 %v492, %v491
      %v517 = vpack.c.b16 %v494, %v493
      %v518 = vpack.c.b16 %v496, %v495
      %v519 = vpack.c.b16 %v498, %v497
      %v520 = vpack.c.b16 %v500, %v499
      %v521 = vpack.c.b16 %v502, %v501
      %v522 = vpack.c.b16 %v504, %v503
      %v523 = vpack.c.b16 %v506, %v505
      %v524 = vpack.c.b16 %v508, %v507
      %v557 = vunpack.c.l.b16 %v429
      %v558 = vunpack.c.l.b16 %v430
      %v559 = vunpack.c.l.b16 %v431
      %v560 = vunpack.c.l.b16 %v432
      %v561 = vunpack.c.l.b16 %v433
      %v562 = vunpack.c.l.b16 %v434
      %v563 = vunpack.c.l.b16 %v435
      %v564 = vunpack.c.l.b16 %v436
      %v565 = vunpack.c.l.b16 %v437
      %v566 = vunpack.c.l.b16 %v438
      %v567 = vunpack.c.l.b16 %v439
      %v568 = vunpack.c.l.b16 %v440
      %v569 = vunpack.c.l.b16 %v441
      %v570 = vunpack.c.l.b16 %v442
      %v571 = vunpack.c.l.b16 %v443
      %v572 = vunpack.c.l.b16 %v444
      %v573 = vpack.c.b16 %v558, %v557
      %v574 = vpack.c.b16 %v560, %v559
      %v575 = vpack.c.b16 %v562, %v561
      %v576 = vpack.c.b16 %v564, %v563
      %v577 = vpack.c.b16 %v566, %v565
      %v578 = vpack.c.b16 %v568, %v567
      %v579 = vpack.c.b16 %v570, %v569
      %v580 = vpack.c.b16 %v572, %v571
      %589 = vmatprep.subr.bf16.mxu0 0
      %590 = vmatpush1.bf16.msra.mxu0 %v573
      %591 = vmatprep.subr.bf16.mxu0 0
      %592 = vmatpush1.bf16.msra.mxu0 %v574
      %593 = vmatprep.subr.bf16.mxu0 0
      %594 = vmatpush1.bf16.msra.mxu0 %v575
      %595 = vmatprep.subr.bf16.mxu0 0
      %596 = vmatpush1.bf16.msra.mxu0 %v576
      %597 = vmatprep.subr.bf16.mxu0 0
      %598 = vmatpush1.bf16.msra.mxu0 %v577
      %599 = vmatprep.subr.bf16.mxu0 0
      %600 = vmatpush1.bf16.msra.mxu0 %v578
      %601 = vmatprep.subr.bf16.mxu0 0
      %602 = vmatpush1.bf16.msra.mxu0 %v579
      %603 = vmatprep.subr.bf16.mxu0 0
      %604 = vmatpush1.bf16.msra.mxu0 %v580
      %605 = vmatprep.subr.bf16.mxu0 0
      %606 = vmatpush1.bf16.msra.mxu0 0
      %607 = vmatprep.subr.bf16.mxu0 0
      %608 = vmatpush1.bf16.msra.mxu0 0
      %609 = vmatprep.subr.bf16.mxu0 0
      %610 = vmatpush1.bf16.msra.mxu0 0
      %611 = vmatprep.subr.bf16.mxu0 0
      %612 = vmatpush1.bf16.msra.mxu0 0
      %613 = vmatprep.subr.bf16.mxu0 0
      %614 = vmatpush1.bf16.msra.mxu0 0
      %615 = vmatprep.subr.bf16.mxu0 0
      %616 = vmatpush1.bf16.msra.mxu0 0
      %617 = vmatprep.subr.bf16.mxu0 0
      %618 = vmatpush1.bf16.msra.mxu0 0
      %619 = vmatprep.subr.bf16.mxu0 0
      %620 = vmatpush1.bf16.msra.mxu0 0
      %621 = vmatprep.mubr.bf16.mxu0 0
      %622 = vmatmul.mubr.bf16.gmra.mrb[0].mxu0 %v509
      %v623 = vpop.f32.mrb[0].mxu0
      %v624 = vadd.f32 0.0, %v623
      %v625 = vpop.f32.mrb[0].mxu0
      %v626 = vpop.f32.mrb[0].mxu0
      %v627 = vadd.f32 0.0, %v626
      %v628 = vpop.f32.mrb[0].mxu0
      %629 = vmatprep.mubr.bf16.mxu0 0
      %630 = vmatmul.mubr.bf16.gmra.mrb[0].mxu0 %v510
      %v631 = vpop.f32.mrb[0].mxu0
      %v632 = vadd.f32 0.0, %v631
      %v633 = vpop.f32.mrb[0].mxu0
      %v634 = vpop.f32.mrb[0].mxu0
      %v635 = vadd.f32 0.0, %v634
      %v636 = vpop.f32.mrb[0].mxu0
      %637 = vmatprep.mubr.bf16.mxu0 0
      %638 = vmatmul.mubr.bf16.gmra.mrb[0].mxu0 %v511
      %v639 = vpop.f32.mrb[0].mxu0
      %v640 = vadd.f32 0.0, %v639
      %v641 = vpop.f32.mrb[0].mxu0
      %v642 = vpop.f32.mrb[0].mxu0
      %v643 = vadd.f32 0.0, %v642
      %v644 = vpop.f32.mrb[0].mxu0
      %645 = vmatprep.mubr.bf16.mxu0 0
      %646 = vmatmul.mubr.bf16.gmra.mrb[0].mxu0 %v512
      %v647 = vpop.f32.mrb[0].mxu0
      %v648 = vadd.f32 0.0, %v647
      %v649 = vpop.f32.mrb[0].mxu0
      %v650 = vpop.f32.mrb[0].mxu0
      %v651 = vadd.f32 0.0, %v650
      %v652 = vpop.f32.mrb[0].mxu0
      %653 = vmatprep.mubr.bf16.mxu0 0
      %654 = vmatmul.mubr.bf16.gmra.mrb[0].mxu0 %v513
      %v655 = vpop.f32.mrb[0].mxu0
      %v656 = vadd.f32 0.0, %v655
      %v657 = vpop.f32.mrb[0].mxu0
      %v658 = vpop.f32.mrb[0].mxu0
      %v659 = vadd.f32 0.0, %v658
      %v660 = vpop.f32.mrb[0].mxu0
      %661 = vmatprep.mubr.bf16.mxu0 0
      %662 = vmatmul.mubr.bf16.gmra.mrb[0].mxu0 %v514
      %v663 = vpop.f32.mrb[0].mxu0
      %v664 = vadd.f32 0.0, %v663
      %v665 = vpop.f32.mrb[0].mxu0
      %v666 = vpop.f32.mrb[0].mxu0
      %v667 = vadd.f32 0.0, %v666
      %v668 = vpop.f32.mrb[0].mxu0
      %669 = vmatprep.mubr.bf16.mxu0 0
      %670 = vmatmul.mubr.bf16.gmra.mrb[0].mxu0 %v515
      %v671 = vpop.f32.mrb[0].mxu0
      %v672 = vadd.f32 0.0, %v671
      %v673 = vpop.f32.mrb[0].mxu0
      %v674 = vpop.f32.mrb[0].mxu0
      %v675 = vadd.f32 0.0, %v674
      %v676 = vpop.f32.mrb[0].mxu0
      %677 = vmatprep.mubr.bf16.mxu0 0
      %678 = vmatmul.mubr.bf16.gmra.mrb[0].mxu0 %v516
      %v679 = vpop.f32.mrb[0].mxu0
      %v680 = vadd.f32 0.0, %v679
      %v681 = vpop.f32.mrb[0].mxu0
      %v682 = vpop.f32.mrb[0].mxu0
      %v683 = vadd.f32 0.0, %v682
      %v684 = vpop.f32.mrb[0].mxu0
      %685 = vmatprep.mubr.bf16.mxu0 0
      %686 = vmatmul.mubr.bf16.gmra.mrb[0].mxu0 %v517
      %v687 = vpop.f32.mrb[0].mxu0
      %v688 = vadd.f32 0.0, %v687
      %v689 = vpop.f32.mrb[0].mxu0
      %v690 = vpop.f32.mrb[0].mxu0
      %v691 = vadd.f32 0.0, %v690
      %v692 = vpop.f32.mrb[0].mxu0
      %693 = vmatprep.mubr.bf16.mxu0 0
      %694 = vmatmul.mubr.bf16.gmra.mrb[0].mxu0 %v518
      %v695 = vpop.f32.mrb[0].mxu0
      %v696 = vadd.f32 0.0, %v695
      %v697 = vpop.f32.mrb[0].mxu0
      %v698 = vpop.f32.mrb[0].mxu0
      %v699 = vadd.f32 0.0, %v698
      %v700 = vpop.f32.mrb[0].mxu0
      %701 = vmatprep.mubr.bf16.mxu0 0
      %702 = vmatmul.mubr.bf16.gmra.mrb[0].mxu0 %v519
      %v703 = vpop.f32.mrb[0].mxu0
      %v704 = vadd.f32 0.0, %v703
      %v705 = vpop.f32.mrb[0].mxu0
      %v706 = vpop.f32.mrb[0].mxu0
      %v707 = vadd.f32 0.0, %v706
      %v708 = vpop.f32.mrb[0].mxu0
      %709 = vmatprep.mubr.bf16.mxu0 0
      %710 = vmatmul.mubr.bf16.gmra.mrb[0].mxu0 %v520
      %v711 = vpop.f32.mrb[0].mxu0
      %v712 = vadd.f32 0.0, %v711
      %v713 = vpop.f32.mrb[0].mxu0
      %v714 = vpop.f32.mrb[0].mxu0
      %v715 = vadd.f32 0.0, %v714
      %v716 = vpop.f32.mrb[0].mxu0
      %717 = vmatprep.mubr.bf16.mxu0 0
      %718 = vmatmul.mubr.bf16.gmra.mrb[0].mxu0 %v521
      %v719 = vpop.f32.mrb[0].mxu0
      %v720 = vadd.f32 0.0, %v719
      %v721 = vpop.f32.mrb[0].mxu0
      %v722 = vpop.f32.mrb[0].mxu0
      %v723 = vadd.f32 0.0, %v722
      %v724 = vpop.f32.mrb[0].mxu0
      %725 = vmatprep.mubr.bf16.mxu0 0
      %726 = vmatmul.mubr.bf16.gmra.mrb[0].mxu0 %v522
      %v727 = vpop.f32.mrb[0].mxu0
      %v728 = vadd.f32 0.0, %v727
      %v729 = vpop.f32.mrb[0].mxu0
      %v730 = vpop.f32.mrb[0].mxu0
      %v731 = vadd.f32 0.0, %v730
      %v732 = vpop.f32.mrb[0].mxu0
      %733 = vmatprep.mubr.bf16.mxu0 0
      %734 = vmatmul.mubr.bf16.gmra.mrb[0].mxu0 %v523
      %v735 = vpop.f32.mrb[0].mxu0
      %v736 = vadd.f32 0.0, %v735
      %v737 = vpop.f32.mrb[0].mxu0
      %v738 = vpop.f32.mrb[0].mxu0
      %v739 = vadd.f32 0.0, %v738
      %v740 = vpop.f32.mrb[0].mxu0
      %741 = vmatprep.mubr.bf16.mxu0 0
      %742 = vmatmul.mubr.bf16.gmra.mrb[0].mxu0 %v524
      %v743 = vpop.f32.mrb[0].mxu0
      %v744 = vadd.f32 0.0, %v743
      %v745 = vpop.f32.mrb[0].mxu0
      %v746 = vpop.f32.mrb[0].mxu0
      %v747 = vadd.f32 0.0, %v746
      %v748 = vpop.f32.mrb[0].mxu0
      %749 = vdwg.mxu0
      %v750 = vadd.f32 %v365, %v624
      %v751 = vadd.f32 %v366, %v627
      %v752 = vadd.f32 %v367, %v632
      %v753 = vadd.f32 %v368, %v635
      %v754 = vadd.f32 %v369, %v640
      %v755 = vadd.f32 %v370, %v643
      %v756 = vadd.f32 %v371, %v648
      %v757 = vadd.f32 %v372, %v651
      %v758 = vadd.f32 %v373, %v656
      %v759 = vadd.f32 %v374, %v659
      %v760 = vadd.f32 %v375, %v664
      %v761 = vadd.f32 %v376, %v667
      %v762 = vadd.f32 %v377, %v672
      %v763 = vadd.f32 %v378, %v675
      %v764 = vadd.f32 %v379, %v680
      %v765 = vadd.f32 %v380, %v683
      %v766 = vadd.f32 %v381, %v688
      %v767 = vadd.f32 %v382, %v691
      %v768 = vadd.f32 %v383, %v696
      %v769 = vadd.f32 %v384, %v699
      %v770 = vadd.f32 %v385, %v704
      %v771 = vadd.f32 %v386, %v707
      %v772 = vadd.f32 %v387, %v712
      %v773 = vadd.f32 %v388, %v715
      %v774 = vadd.f32 %v389, %v720
      %v775 = vadd.f32 %v390, %v723
      %v776 = vadd.f32 %v391, %v728
      %v777 = vadd.f32 %v392, %v731
      %v778 = vadd.f32 %v393, %v736
      %v779 = vadd.f32 %v394, %v739
      %v780 = vadd.f32 %v395, %v744
      %v781 = vadd.f32 %v396, %v747
      %782 = vst [vmem:[#allocation2] sm:$0xff] %v750
      %783 = vst [vmem:[#allocation2 + $0x8] sm:$0xff] %v751
      %784 = vst [vmem:[#allocation2 + $0x10] sm:$0xff] %v752
      %785 = vst [vmem:[#allocation2 + $0x18] sm:$0xff] %v753
      %786 = vst [vmem:[#allocation2 + $0x20] sm:$0xff] %v754
      %787 = vst [vmem:[#allocation2 + $0x28] sm:$0xff] %v755
      %788 = vst [vmem:[#allocation2 + $0x30] sm:$0xff] %v756
      %789 = vst [vmem:[#allocation2 + $0x38] sm:$0xff] %v757
      %790 = vst [vmem:[#allocation2 + $0x40] sm:$0xff] %v758
      %791 = vst [vmem:[#allocation2 + $0x48] sm:$0xff] %v759
      %792 = vst [vmem:[#allocation2 + $0x50] sm:$0xff] %v760
      %793 = vst [vmem:[#allocation2 + $0x58] sm:$0xff] %v761
      %794 = vst [vmem:[#allocation2 + $0x60] sm:$0xff] %v762
      %795 = vst [vmem:[#allocation2 + $0x68] sm:$0xff] %v763
      %796 = vst [vmem:[#allocation2 + $0x70] sm:$0xff] %v764
      %797 = vst [vmem:[#allocation2 + $0x78] sm:$0xff] %v765
      %798 = vst [vmem:[#allocation2 + $0x80] sm:$0xff] %v766
      %799 = vst [vmem:[#allocation2 + $0x88] sm:$0xff] %v767
      %800 = vst [vmem:[#allocation2 + $0x90] sm:$0xff] %v768
      %801 = vst [vmem:[#allocation2 + $0x98] sm:$0xff] %v769
      %802 = vst [vmem:[#allocation2 + $0xa0] sm:$0xff] %v770
      %803 = vst [vmem:[#allocation2 + $0xa8] sm:$0xff] %v771
      %804 = vst [vmem:[#allocation2 + $0xb0] sm:$0xff] %v772
      %805 = vst [vmem:[#allocation2 + $0xb8] sm:$0xff] %v773
      %806 = vst [vmem:[#allocation2 + $0xc0] sm:$0xff] %v774
      %807 = vst [vmem:[#allocation2 + $0xc8] sm:$0xff] %v775
      %808 = vst [vmem:[#allocation2 + $0xd0] sm:$0xff] %v776
      %809 = vst [vmem:[#allocation2 + $0xd8] sm:$0xff] %v777
      %810 = vst [vmem:[#allocation2 + $0xe0] sm:$0xff] %v778
      %811 = vst [vmem:[#allocation2 + $0xe8] sm:$0xff] %v779
      %812 = vst [vmem:[#allocation2 + $0xf0] sm:$0xff] %v780
      %813 = vst [vmem:[#allocation2 + $0xf8] sm:$0xff] %v781
      // Predicated region
      $region41: #{pconv_layer_forward.2} parent=35 // pred_check
        %p814 = pneg %p329
      $region42: #{pconv_layer_forward.2} parent=35 // pred_check_branch
        %816 = sbr.rel (%p814) target = $region44
      $region43: #{pconv_layer_forward.2} parent=35 // pred_region
        %v817 = vld [vmem:[#allocation2] sm:$0xff]
        %v818 = vld [vmem:[#allocation2 + $0x8] sm:$0xff]
        %v819 = vld [vmem:[#allocation2 + $0x10] sm:$0xff]
        %v820 = vld [vmem:[#allocation2 + $0x18] sm:$0xff]
        %v821 = vld [vmem:[#allocation2 + $0x20] sm:$0xff]
        %v822 = vld [vmem:[#allocation2 + $0x28] sm:$0xff]
        %v823 = vld [vmem:[#allocation2 + $0x30] sm:$0xff]
        %v824 = vld [vmem:[#allocation2 + $0x38] sm:$0xff]
        %v825 = vld [vmem:[#allocation2 + $0x40] sm:$0xff]
        %v826 = vld [vmem:[#allocation2 + $0x48] sm:$0xff]
        %v827 = vld [vmem:[#allocation2 + $0x50] sm:$0xff]
        %v828 = vld [vmem:[#allocation2 + $0x58] sm:$0xff]
        %v829 = vld [vmem:[#allocation2 + $0x60] sm:$0xff]
        %v830 = vld [vmem:[#allocation2 + $0x68] sm:$0xff]
        %v831 = vld [vmem:[#allocation2 + $0x70] sm:$0xff]
        %v832 = vld [vmem:[#allocation2 + $0x78] sm:$0xff]
        %v833 = vld [vmem:[#allocation2 + $0x80] sm:$0xff]
        %v834 = vld [vmem:[#allocation2 + $0x88] sm:$0xff]
        %v835 = vld [vmem:[#allocation2 + $0x90] sm:$0xff]
        %v836 = vld [vmem:[#allocation2 + $0x98] sm:$0xff]
        %v837 = vld [vmem:[#allocation2 + $0xa0] sm:$0xff]
        %v838 = vld [vmem:[#allocation2 + $0xa8] sm:$0xff]
        %v839 = vld [vmem:[#allocation2 + $0xb0] sm:$0xff]
        %v840 = vld [vmem:[#allocation2 + $0xb8] sm:$0xff]
        %v841 = vld [vmem:[#allocation2 + $0xc0] sm:$0xff]
        %v842 = vld [vmem:[#allocation2 + $0xc8] sm:$0xff]
        %v843 = vld [vmem:[#allocation2 + $0xd0] sm:$0xff]
        %v844 = vld [vmem:[#allocation2 + $0xd8] sm:$0xff]
        %v845 = vld [vmem:[#allocation2 + $0xe0] sm:$0xff]
        %v846 = vld [vmem:[#allocation2 + $0xe8] sm:$0xff]
        %v847 = vld [vmem:[#allocation2 + $0xf0] sm:$0xff]
        %v848 = vld [vmem:[#allocation2 + $0xf8] sm:$0xff]
        %v849 = vld [vmem:[%s310] sm:$0xff]
        %v850 = vld [vmem:[%s310 + $0x8] sm:$0xff]
        %v851 = vld [vmem:[%s310 + $0x10] sm:$0xff]
        %v852 = vld [vmem:[%s310 + $0x18] sm:$0xff]
        %v853 = vld [vmem:[%s310 + $0x20] sm:$0xff]
        %v854 = vld [vmem:[%s310 + $0x28] sm:$0xff]
        %v855 = vld [vmem:[%s310 + $0x30] sm:$0xff]
        %v856 = vld [vmem:[%s310 + $0x38] sm:$0xff]
        %v857 = vld [vmem:[%s310 + $0x40] sm:$0xff]
        %v858 = vld [vmem:[%s310 + $0x48] sm:$0xff]
        %v859 = vld [vmem:[%s310 + $0x50] sm:$0xff]
        %v860 = vld [vmem:[%s310 + $0x58] sm:$0xff]
        %v861 = vld [vmem:[%s310 + $0x60] sm:$0xff]
        %v862 = vld [vmem:[%s310 + $0x68] sm:$0xff]
        %v863 = vld [vmem:[%s310 + $0x70] sm:$0xff]
        %v864 = vld [vmem:[%s310 + $0x78] sm:$0xff]
        %v865 = vld [vmem:[%s310 + $0x80] sm:$0xff]
        %v866 = vld [vmem:[%s310 + $0x88] sm:$0xff]
        %v867 = vld [vmem:[%s310 + $0x90] sm:$0xff]
        %v868 = vld [vmem:[%s310 + $0x98] sm:$0xff]
        %v869 = vld [vmem:[%s310 + $0xa0] sm:$0xff]
        %v870 = vld [vmem:[%s310 + $0xa8] sm:$0xff]
        %v871 = vld [vmem:[%s310 + $0xb0] sm:$0xff]
        %v872 = vld [vmem:[%s310 + $0xb8] sm:$0xff]
        %v873 = vld [vmem:[%s310 + $0xc0] sm:$0xff]
        %v874 = vld [vmem:[%s310 + $0xc8] sm:$0xff]
        %v875 = vld [vmem:[%s310 + $0xd0] sm:$0xff]
        %v876 = vld [vmem:[%s310 + $0xd8] sm:$0xff]
        %v877 = vld [vmem:[%s310 + $0xe0] sm:$0xff]
        %v878 = vld [vmem:[%s310 + $0xe8] sm:$0xff]
        %v879 = vld [vmem:[%s310 + $0xf0] sm:$0xff]
        %v880 = vld [vmem:[%s310 + $0xf8] sm:$0xff]
        %882 = vset.pattern.permute.xlu0 0
        %883 = vperm.xlu0 %882, %v849
        %v884 = vpop.permute.xlu0 %883
        %887 = vset.pattern.permute.xlu0 0
        %888 = vperm.xlu0 %887, %v850
        %v889 = vpop.permute.xlu0 %888
        %892 = vset.pattern.permute.xlu0 0
        %893 = vperm.xlu0 %892, %v851
        %v894 = vpop.permute.xlu0 %893
        %897 = vset.pattern.permute.xlu0 0
        %898 = vperm.xlu0 %897, %v852
        %v899 = vpop.permute.xlu0 %898
        %902 = vset.pattern.permute.xlu0 0
        %903 = vperm.xlu0 %902, %v853
        %v904 = vpop.permute.xlu0 %903
        %907 = vset.pattern.permute.xlu0 0
        %908 = vperm.xlu0 %907, %v854
        %v909 = vpop.permute.xlu0 %908
        %912 = vset.pattern.permute.xlu0 0
        %913 = vperm.xlu0 %912, %v855
        %v914 = vpop.permute.xlu0 %913
        %917 = vset.pattern.permute.xlu0 0
        %918 = vperm.xlu0 %917, %v856
        %v919 = vpop.permute.xlu0 %918
        %922 = vset.pattern.permute.xlu0 0
        %923 = vperm.xlu0 %922, %v857
        %v924 = vpop.permute.xlu0 %923
        %927 = vset.pattern.permute.xlu0 0
        %928 = vperm.xlu0 %927, %v858
        %v929 = vpop.permute.xlu0 %928
        %932 = vset.pattern.permute.xlu0 0
        %933 = vperm.xlu0 %932, %v859
        %v934 = vpop.permute.xlu0 %933
        %937 = vset.pattern.permute.xlu0 0
        %938 = vperm.xlu0 %937, %v860
        %v939 = vpop.permute.xlu0 %938
        %942 = vset.pattern.permute.xlu0 0
        %943 = vperm.xlu0 %942, %v861
        %v944 = vpop.permute.xlu0 %943
        %947 = vset.pattern.permute.xlu0 0
        %948 = vperm.xlu0 %947, %v862
        %v949 = vpop.permute.xlu0 %948
        %952 = vset.pattern.permute.xlu0 0
        %953 = vperm.xlu0 %952, %v863
        %v954 = vpop.permute.xlu0 %953
        %957 = vset.pattern.permute.xlu0 0
        %958 = vperm.xlu0 %957, %v864
        %v959 = vpop.permute.xlu0 %958
        %962 = vset.pattern.permute.xlu0 0
        %963 = vperm.xlu0 %962, %v865
        %v964 = vpop.permute.xlu0 %963
        %967 = vset.pattern.permute.xlu0 0
        %968 = vperm.xlu0 %967, %v866
        %v969 = vpop.permute.xlu0 %968
        %972 = vset.pattern.permute.xlu0 0
        %973 = vperm.xlu0 %972, %v867
        %v974 = vpop.permute.xlu0 %973
        %977 = vset.pattern.permute.xlu0 0
        %978 = vperm.xlu0 %977, %v868
        %v979 = vpop.permute.xlu0 %978
        %982 = vset.pattern.permute.xlu0 0
        %983 = vperm.xlu0 %982, %v869
        %v984 = vpop.permute.xlu0 %983
        %987 = vset.pattern.permute.xlu0 0
        %988 = vperm.xlu0 %987, %v870
        %v989 = vpop.permute.xlu0 %988
        %992 = vset.pattern.permute.xlu0 0
        %993 = vperm.xlu0 %992, %v871
        %v994 = vpop.permute.xlu0 %993
        %997 = vset.pattern.permute.xlu0 0
        %998 = vperm.xlu0 %997, %v872
        %v999 = vpop.permute.xlu0 %998
        %1002 = vset.pattern.permute.xlu0 0
        %1003 = vperm.xlu0 %1002, %v873
        %v1004 = vpop.permute.xlu0 %1003
        %1007 = vset.pattern.permute.xlu0 0
        %1008 = vperm.xlu0 %1007, %v874
        %v1009 = vpop.permute.xlu0 %1008
        %1012 = vset.pattern.permute.xlu0 0
        %1013 = vperm.xlu0 %1012, %v875
        %v1014 = vpop.permute.xlu0 %1013
        %1017 = vset.pattern.permute.xlu0 0
        %1018 = vperm.xlu0 %1017, %v876
        %v1019 = vpop.permute.xlu0 %1018
        %1022 = vset.pattern.permute.xlu0 0
        %1023 = vperm.xlu0 %1022, %v877
        %v1024 = vpop.permute.xlu0 %1023
        %1027 = vset.pattern.permute.xlu0 0
        %1028 = vperm.xlu0 %1027, %v878
        %v1029 = vpop.permute.xlu0 %1028
        %1032 = vset.pattern.permute.xlu0 0
        %1033 = vperm.xlu0 %1032, %v879
        %v1034 = vpop.permute.xlu0 %1033
        %1037 = vset.pattern.permute.xlu0 0
        %1038 = vperm.xlu0 %1037, %v880
        %v1039 = vpop.permute.xlu0 %1038
        %v1041 = vmul.f32 %v817, %v884
        %v1042 = vmul.f32 %v818, %v889
        %v1043 = vmul.f32 %v819, %v894
        %v1044 = vmul.f32 %v820, %v899
        %v1045 = vmul.f32 %v821, %v904
        %v1046 = vmul.f32 %v822, %v909
        %v1047 = vmul.f32 %v823, %v914
        %v1048 = vmul.f32 %v824, %v919
        %v1049 = vmul.f32 %v825, %v924
        %v1050 = vmul.f32 %v826, %v929
        %v1051 = vmul.f32 %v827, %v934
        %v1052 = vmul.f32 %v828, %v939
        %v1053 = vmul.f32 %v829, %v944
        %v1054 = vmul.f32 %v830, %v949
        %v1055 = vmul.f32 %v831, %v954
        %v1056 = vmul.f32 %v832, %v959
        %v1057 = vmul.f32 %v833, %v964
        %v1058 = vmul.f32 %v834, %v969
        %v1059 = vmul.f32 %v835, %v974
        %v1060 = vmul.f32 %v836, %v979
        %v1061 = vmul.f32 %v837, %v984
        %v1062 = vmul.f32 %v838, %v989
        %v1063 = vmul.f32 %v839, %v994
        %v1064 = vmul.f32 %v840, %v999
        %v1065 = vmul.f32 %v841, %v1004
        %v1066 = vmul.f32 %v842, %v1009
        %v1067 = vmul.f32 %v843, %v1014
        %v1068 = vmul.f32 %v844, %v1019
        %v1069 = vmul.f32 %v845, %v1024
        %v1070 = vmul.f32 %v846, %v1029
        %v1071 = vmul.f32 %v847, %v1034
        %v1072 = vmul.f32 %v848, %v1039
        %1073 = vst [vmem:[%s322] sm:$0xff] %v1041
        %1074 = vst [vmem:[%s322 + $0x8] sm:$0xff] %v1042
        %1075 = vst [vmem:[%s322 + $0x10] sm:$0xff] %v1043
        %1076 = vst [vmem:[%s322 + $0x18] sm:$0xff] %v1044
        %1077 = vst [vmem:[%s322 + $0x20] sm:$0xff] %v1045
        %1078 = vst [vmem:[%s322 + $0x28] sm:$0xff] %v1046
        %1079 = vst [vmem:[%s322 + $0x30] sm:$0xff] %v1047
        %1080 = vst [vmem:[%s322 + $0x38] sm:$0xff] %v1048
        %1081 = vst [vmem:[%s322 + $0x40] sm:$0xff] %v1049
        %1082 = vst [vmem:[%s322 + $0x48] sm:$0xff] %v1050
        %1083 = vst [vmem:[%s322 + $0x50] sm:$0xff] %v1051
        %1084 = vst [vmem:[%s322 + $0x58] sm:$0xff] %v1052
        %1085 = vst [vmem:[%s322 + $0x60] sm:$0xff] %v1053
        %1086 = vst [vmem:[%s322 + $0x68] sm:$0xff] %v1054
        %1087 = vst [vmem:[%s322 + $0x70] sm:$0xff] %v1055
        %1088 = vst [vmem:[%s322 + $0x78] sm:$0xff] %v1056
        %1089 = vst [vmem:[%s322 + $0x80] sm:$0xff] %v1057
        %1090 = vst [vmem:[%s322 + $0x88] sm:$0xff] %v1058
        %1091 = vst [vmem:[%s322 + $0x90] sm:$0xff] %v1059
        %1092 = vst [vmem:[%s322 + $0x98] sm:$0xff] %v1060
        %1093 = vst [vmem:[%s322 + $0xa0] sm:$0xff] %v1061
        %1094 = vst [vmem:[%s322 + $0xa8] sm:$0xff] %v1062
        %1095 = vst [vmem:[%s322 + $0xb0] sm:$0xff] %v1063
        %1096 = vst [vmem:[%s322 + $0xb8] sm:$0xff] %v1064
        %1097 = vst [vmem:[%s322 + $0xc0] sm:$0xff] %v1065
        %1098 = vst [vmem:[%s322 + $0xc8] sm:$0xff] %v1066
        %1099 = vst [vmem:[%s322 + $0xd0] sm:$0xff] %v1067
        %1100 = vst [vmem:[%s322 + $0xd8] sm:$0xff] %v1068
        %1101 = vst [vmem:[%s322 + $0xe0] sm:$0xff] %v1069
        %1102 = vst [vmem:[%s322 + $0xe8] sm:$0xff] %v1070
        %1103 = vst [vmem:[%s322 + $0xf0] sm:$0xff] %v1071
        %1104 = vst [vmem:[%s322 + $0xf8] sm:$0xff] %v1072
        %v1105 = vld [vmem:[%s316] sm:$0xff]
        %v1106 = vld [vmem:[%s316 + $0x8] sm:$0xff]
        %v1107 = vld [vmem:[%s316 + $0x10] sm:$0xff]
        %v1108 = vld [vmem:[%s316 + $0x18] sm:$0xff]
        %v1109 = vld [vmem:[%s316 + $0x20] sm:$0xff]
        %v1110 = vld [vmem:[%s316 + $0x28] sm:$0xff]
        %v1111 = vld [vmem:[%s316 + $0x30] sm:$0xff]
        %v1112 = vld [vmem:[%s316 + $0x38] sm:$0xff]
        %v1113 = vld [vmem:[%s316 + $0x40] sm:$0xff]
        %v1114 = vld [vmem:[%s316 + $0x48] sm:$0xff]
        %v1115 = vld [vmem:[%s316 + $0x50] sm:$0xff]
        %v1116 = vld [vmem:[%s316 + $0x58] sm:$0xff]
        %v1117 = vld [vmem:[%s316 + $0x60] sm:$0xff]
        %v1118 = vld [vmem:[%s316 + $0x68] sm:$0xff]
        %v1119 = vld [vmem:[%s316 + $0x70] sm:$0xff]
        %v1120 = vld [vmem:[%s316 + $0x78] sm:$0xff]
        %v1121 = vld [vmem:[%s316 + $0x80] sm:$0xff]
        %v1122 = vld [vmem:[%s316 + $0x88] sm:$0xff]
        %v1123 = vld [vmem:[%s316 + $0x90] sm:$0xff]
        %v1124 = vld [vmem:[%s316 + $0x98] sm:$0xff]
        %v1125 = vld [vmem:[%s316 + $0xa0] sm:$0xff]
        %v1126 = vld [vmem:[%s316 + $0xa8] sm:$0xff]
        %v1127 = vld [vmem:[%s316 + $0xb0] sm:$0xff]
        %v1128 = vld [vmem:[%s316 + $0xb8] sm:$0xff]
        %v1129 = vld [vmem:[%s316 + $0xc0] sm:$0xff]
        %v1130 = vld [vmem:[%s316 + $0xc8] sm:$0xff]
        %v1131 = vld [vmem:[%s316 + $0xd0] sm:$0xff]
        %v1132 = vld [vmem:[%s316 + $0xd8] sm:$0xff]
        %v1133 = vld [vmem:[%s316 + $0xe0] sm:$0xff]
        %v1134 = vld [vmem:[%s316 + $0xe8] sm:$0xff]
        %v1135 = vld [vmem:[%s316 + $0xf0] sm:$0xff]
        %v1136 = vld [vmem:[%s316 + $0xf8] sm:$0xff]
        %1138 = vset.pattern.permute.xlu0 0
        %1139 = vperm.xlu0 %1138, %v1105
        %v1140 = vpop.permute.xlu0 %1139
        %1143 = vset.pattern.permute.xlu0 0
        %1144 = vperm.xlu0 %1143, %v1106
        %v1145 = vpop.permute.xlu0 %1144
        %1148 = vset.pattern.permute.xlu0 0
        %1149 = vperm.xlu0 %1148, %v1107
        %v1150 = vpop.permute.xlu0 %1149
        %1153 = vset.pattern.permute.xlu0 0
        %1154 = vperm.xlu0 %1153, %v1108
        %v1155 = vpop.permute.xlu0 %1154
        %1158 = vset.pattern.permute.xlu0 0
        %1159 = vperm.xlu0 %1158, %v1109
        %v1160 = vpop.permute.xlu0 %1159
        %1163 = vset.pattern.permute.xlu0 0
        %1164 = vperm.xlu0 %1163, %v1110
        %v1165 = vpop.permute.xlu0 %1164
        %1168 = vset.pattern.permute.xlu0 0
        %1169 = vperm.xlu0 %1168, %v1111
        %v1170 = vpop.permute.xlu0 %1169
        %1173 = vset.pattern.permute.xlu0 0
        %1174 = vperm.xlu0 %1173, %v1112
        %v1175 = vpop.permute.xlu0 %1174
        %1178 = vset.pattern.permute.xlu0 0
        %1179 = vperm.xlu0 %1178, %v1113
        %v1180 = vpop.permute.xlu0 %1179
        %1183 = vset.pattern.permute.xlu0 0
        %1184 = vperm.xlu0 %1183, %v1114
        %v1185 = vpop.permute.xlu0 %1184
        %1188 = vset.pattern.permute.xlu0 0
        %1189 = vperm.xlu0 %1188, %v1115
        %v1190 = vpop.permute.xlu0 %1189
        %1193 = vset.pattern.permute.xlu0 0
        %1194 = vperm.xlu0 %1193, %v1116
        %v1195 = vpop.permute.xlu0 %1194
        %1198 = vset.pattern.permute.xlu0 0
        %1199 = vperm.xlu0 %1198, %v1117
        %v1200 = vpop.permute.xlu0 %1199
        %1203 = vset.pattern.permute.xlu0 0
        %1204 = vperm.xlu0 %1203, %v1118
        %v1205 = vpop.permute.xlu0 %1204
        %1208 = vset.pattern.permute.xlu0 0
        %1209 = vperm.xlu0 %1208, %v1119
        %v1210 = vpop.permute.xlu0 %1209
        %1213 = vset.pattern.permute.xlu0 0
        %1214 = vperm.xlu0 %1213, %v1120
        %v1215 = vpop.permute.xlu0 %1214
        %1218 = vset.pattern.permute.xlu0 0
        %1219 = vperm.xlu0 %1218, %v1121
        %v1220 = vpop.permute.xlu0 %1219
        %1223 = vset.pattern.permute.xlu0 0
        %1224 = vperm.xlu0 %1223, %v1122
        %v1225 = vpop.permute.xlu0 %1224
        %1228 = vset.pattern.permute.xlu0 0
        %1229 = vperm.xlu0 %1228, %v1123
        %v1230 = vpop.permute.xlu0 %1229
        %1233 = vset.pattern.permute.xlu0 0
        %1234 = vperm.xlu0 %1233, %v1124
        %v1235 = vpop.permute.xlu0 %1234
        %1238 = vset.pattern.permute.xlu0 0
        %1239 = vperm.xlu0 %1238, %v1125
        %v1240 = vpop.permute.xlu0 %1239
        %1243 = vset.pattern.permute.xlu0 0
        %1244 = vperm.xlu0 %1243, %v1126
        %v1245 = vpop.permute.xlu0 %1244
        %1248 = vset.pattern.permute.xlu0 0
        %1249 = vperm.xlu0 %1248, %v1127
        %v1250 = vpop.permute.xlu0 %1249
        %1253 = vset.pattern.permute.xlu0 0
        %1254 = vperm.xlu0 %1253, %v1128
        %v1255 = vpop.permute.xlu0 %1254
        %1258 = vset.pattern.permute.xlu0 0
        %1259 = vperm.xlu0 %1258, %v1129
        %v1260 = vpop.permute.xlu0 %1259
        %1263 = vset.pattern.permute.xlu0 0
        %1264 = vperm.xlu0 %1263, %v1130
        %v1265 = vpop.permute.xlu0 %1264
        %1268 = vset.pattern.permute.xlu0 0
        %1269 = vperm.xlu0 %1268, %v1131
        %v1270 = vpop.permute.xlu0 %1269
        %1273 = vset.pattern.permute.xlu0 0
        %1274 = vperm.xlu0 %1273, %v1132
        %v1275 = vpop.permute.xlu0 %1274
        %1278 = vset.pattern.permute.xlu0 0
        %1279 = vperm.xlu0 %1278, %v1133
        %v1280 = vpop.permute.xlu0 %1279
        %1283 = vset.pattern.permute.xlu0 0
        %1284 = vperm.xlu0 %1283, %v1134
        %v1285 = vpop.permute.xlu0 %1284
        %1288 = vset.pattern.permute.xlu0 0
        %1289 = vperm.xlu0 %1288, %v1135
        %v1290 = vpop.permute.xlu0 %1289
        %1293 = vset.pattern.permute.xlu0 0
        %1294 = vperm.xlu0 %1293, %v1136
        %v1295 = vpop.permute.xlu0 %1294
        %v1297 = vmul.f32 %v1041, %v1140
        %v1298 = vmul.f32 %v1042, %v1145
        %v1299 = vmul.f32 %v1043, %v1150
        %v1300 = vmul.f32 %v1044, %v1155
        %v1301 = vmul.f32 %v1045, %v1160
        %v1302 = vmul.f32 %v1046, %v1165
        %v1303 = vmul.f32 %v1047, %v1170
        %v1304 = vmul.f32 %v1048, %v1175
        %v1305 = vmul.f32 %v1049, %v1180
        %v1306 = vmul.f32 %v1050, %v1185
        %v1307 = vmul.f32 %v1051, %v1190
        %v1308 = vmul.f32 %v1052, %v1195
        %v1309 = vmul.f32 %v1053, %v1200
        %v1310 = vmul.f32 %v1054, %v1205
        %v1311 = vmul.f32 %v1055, %v1210
        %v1312 = vmul.f32 %v1056, %v1215
        %v1313 = vmul.f32 %v1057, %v1220
        %v1314 = vmul.f32 %v1058, %v1225
        %v1315 = vmul.f32 %v1059, %v1230
        %v1316 = vmul.f32 %v1060, %v1235
        %v1317 = vmul.f32 %v1061, %v1240
        %v1318 = vmul.f32 %v1062, %v1245
        %v1319 = vmul.f32 %v1063, %v1250
        %v1320 = vmul.f32 %v1064, %v1255
        %v1321 = vmul.f32 %v1065, %v1260
        %v1322 = vmul.f32 %v1066, %v1265
        %v1323 = vmul.f32 %v1067, %v1270
        %v1324 = vmul.f32 %v1068, %v1275
        %v1325 = vmul.f32 %v1069, %v1280
        %v1326 = vmul.f32 %v1070, %v1285
        %v1327 = vmul.f32 %v1071, %v1290
        %v1328 = vmul.f32 %v1072, %v1295
        %v1329 = vsub.f32 %v1041, %v1297
        %v1330 = vsub.f32 %v1042, %v1298
        %v1331 = vsub.f32 %v1043, %v1299
        %v1332 = vsub.f32 %v1044, %v1300
        %v1333 = vsub.f32 %v1045, %v1301
        %v1334 = vsub.f32 %v1046, %v1302
        %v1335 = vsub.f32 %v1047, %v1303
        %v1336 = vsub.f32 %v1048, %v1304
        %v1337 = vsub.f32 %v1049, %v1305
        %v1338 = vsub.f32 %v1050, %v1306
        %v1339 = vsub.f32 %v1051, %v1307
        %v1340 = vsub.f32 %v1052, %v1308
        %v1341 = vsub.f32 %v1053, %v1309
        %v1342 = vsub.f32 %v1054, %v1310
        %v1343 = vsub.f32 %v1055, %v1311
        %v1344 = vsub.f32 %v1056, %v1312
        %v1345 = vsub.f32 %v1057, %v1313
        %v1346 = vsub.f32 %v1058, %v1314
        %v1347 = vsub.f32 %v1059, %v1315
        %v1348 = vsub.f32 %v1060, %v1316
        %v1349 = vsub.f32 %v1061, %v1317
        %v1350 = vsub.f32 %v1062, %v1318
        %v1351 = vsub.f32 %v1063, %v1319
        %v1352 = vsub.f32 %v1064, %v1320
        %v1353 = vsub.f32 %v1065, %v1321
        %v1354 = vsub.f32 %v1066, %v1322
        %v1355 = vsub.f32 %v1067, %v1323
        %v1356 = vsub.f32 %v1068, %v1324
        %v1357 = vsub.f32 %v1069, %v1325
        %v1358 = vsub.f32 %v1070, %v1326
        %v1359 = vsub.f32 %v1071, %v1327
        %v1360 = vsub.f32 %v1072, %v1328
        %v1361 = vadd.f32 %v1297, %v1298
        %v1362 = vadd.f32 %v1361, %v1299
        %v1363 = vadd.f32 %v1362, %v1300
        %v1364 = vadd.f32 %v1363, %v1301
        %v1365 = vadd.f32 %v1364, %v1302
        %v1366 = vadd.f32 %v1365, %v1303
        %v1367 = vadd.f32 %v1366, %v1304
        %v1368 = vadd.f32 %v1367, %v1305
        %v1369 = vadd.f32 %v1368, %v1306
        %v1370 = vadd.f32 %v1369, %v1307
        %v1371 = vadd.f32 %v1370, %v1308
        %v1372 = vadd.f32 %v1371, %v1309
        %v1373 = vadd.f32 %v1372, %v1310
        %v1374 = vadd.f32 %v1373, %v1311
        %v1375 = vadd.f32 %v1374, %v1312
        %v1376 = vadd.f32 %v1375, %v1313
        %v1377 = vadd.f32 %v1376, %v1314
        %v1378 = vadd.f32 %v1377, %v1315
        %v1379 = vadd.f32 %v1378, %v1316
        %v1380 = vadd.f32 %v1379, %v1317
        %v1381 = vadd.f32 %v1380, %v1318
        %v1382 = vadd.f32 %v1381, %v1319
        %v1383 = vadd.f32 %v1382, %v1320
        %v1384 = vadd.f32 %v1383, %v1321
        %v1385 = vadd.f32 %v1384, %v1322
        %v1386 = vadd.f32 %v1385, %v1323
        %v1387 = vadd.f32 %v1386, %v1324
        %v1388 = vadd.f32 %v1387, %v1325
        %v1389 = vadd.f32 %v1388, %v1326
        %v1390 = vadd.f32 %v1389, %v1327
        %v1391 = vadd.f32 %v1390, %v1328
        %v1392 = vrot.slane %v1391, 4
        %v1393 = vadd.f32 %v1391, %v1392
        %v1394 = vrot.slane %v1393, 2
        %v1395 = vadd.f32 %v1393, %v1394
        %v1396 = vrot.slane %v1395, 1
        %v1397 = vadd.f32 %v1395, %v1396
        %v1398 = vmul.f32 %v1297, %v1297
        %v1399 = vmul.f32 %v1298, %v1298
        %v1400 = vmul.f32 %v1299, %v1299
        %v1401 = vmul.f32 %v1300, %v1300
        %v1402 = vmul.f32 %v1301, %v1301
        %v1403 = vmul.f32 %v1302, %v1302
        %v1404 = vmul.f32 %v1303, %v1303
        %v1405 = vmul.f32 %v1304, %v1304
        %v1406 = vmul.f32 %v1305, %v1305
        %v1407 = vmul.f32 %v1306, %v1306
        %v1408 = vmul.f32 %v1307, %v1307
        %v1409 = vmul.f32 %v1308, %v1308
        %v1410 = vmul.f32 %v1309, %v1309
        %v1411 = vmul.f32 %v1310, %v1310
        %v1412 = vmul.f32 %v1311, %v1311
        %v1413 = vmul.f32 %v1312, %v1312
        %v1414 = vmul.f32 %v1313, %v1313
        %v1415 = vmul.f32 %v1314, %v1314
        %v1416 = vmul.f32 %v1315, %v1315
        %v1417 = vmul.f32 %v1316, %v1316
        %v1418 = vmul.f32 %v1317, %v1317
        %v1419 = vmul.f32 %v1318, %v1318
        %v1420 = vmul.f32 %v1319, %v1319
        %v1421 = vmul.f32 %v1320, %v1320
        %v1422 = vmul.f32 %v1321, %v1321
        %v1423 = vmul.f32 %v1322, %v1322
        %v1424 = vmul.f32 %v1323, %v1323
        %v1425 = vmul.f32 %v1324, %v1324
        %v1426 = vmul.f32 %v1325, %v1325
        %v1427 = vmul.f32 %v1326, %v1326
        %v1428 = vmul.f32 %v1327, %v1327
        %v1429 = vmul.f32 %v1328, %v1328
        %v1430 = vadd.f32 %v1398, %v1399
        %v1431 = vadd.f32 %v1430, %v1400
        %v1432 = vadd.f32 %v1431, %v1401
        %v1433 = vadd.f32 %v1432, %v1402
        %v1434 = vadd.f32 %v1433, %v1403
        %v1435 = vadd.f32 %v1434, %v1404
        %v1436 = vadd.f32 %v1435, %v1405
        %v1437 = vadd.f32 %v1436, %v1406
        %v1438 = vadd.f32 %v1437, %v1407
        %v1439 = vadd.f32 %v1438, %v1408
        %v1440 = vadd.f32 %v1439, %v1409
        %v1441 = vadd.f32 %v1440, %v1410
        %v1442 = vadd.f32 %v1441, %v1411
        %v1443 = vadd.f32 %v1442, %v1412
        %v1444 = vadd.f32 %v1443, %v1413
        %v1445 = vadd.f32 %v1444, %v1414
        %v1446 = vadd.f32 %v1445, %v1415
        %v1447 = vadd.f32 %v1446, %v1416
        %v1448 = vadd.f32 %v1447, %v1417
        %v1449 = vadd.f32 %v1448, %v1418
        %v1450 = vadd.f32 %v1449, %v1419
        %v1451 = vadd.f32 %v1450, %v1420
        %v1452 = vadd.f32 %v1451, %v1421
        %v1453 = vadd.f32 %v1452, %v1422
        %v1454 = vadd.f32 %v1453, %v1423
        %v1455 = vadd.f32 %v1454, %v1424
        %v1456 = vadd.f32 %v1455, %v1425
        %v1457 = vadd.f32 %v1456, %v1426
        %v1458 = vadd.f32 %v1457, %v1427
        %v1459 = vadd.f32 %v1458, %v1428
        %v1460 = vadd.f32 %v1459, %v1429
        %v1461 = vrot.slane %v1460, 4
        %v1462 = vadd.f32 %v1460, %v1461
        %v1463 = vrot.slane %v1462, 2
        %v1464 = vadd.f32 %v1462, %v1463
        %v1465 = vrot.slane %v1464, 1
        %v1466 = vadd.f32 %v1464, %v1465
        %v1467 = vadd.f32 %v1329, %v1330
        %v1468 = vadd.f32 %v1467, %v1331
        %v1469 = vadd.f32 %v1468, %v1332
        %v1470 = vadd.f32 %v1469, %v1333
        %v1471 = vadd.f32 %v1470, %v1334
        %v1472 = vadd.f32 %v1471, %v1335
        %v1473 = vadd.f32 %v1472, %v1336
        %v1474 = vadd.f32 %v1473, %v1337
        %v1475 = vadd.f32 %v1474, %v1338
        %v1476 = vadd.f32 %v1475, %v1339
        %v1477 = vadd.f32 %v1476, %v1340
        %v1478 = vadd.f32 %v1477, %v1341
        %v1479 = vadd.f32 %v1478, %v1342
        %v1480 = vadd.f32 %v1479, %v1343
        %v1481 = vadd.f32 %v1480, %v1344
        %v1482 = vadd.f32 %v1481, %v1345
        %v1483 = vadd.f32 %v1482, %v1346
        %v1484 = vadd.f32 %v1483, %v1347
        %v1485 = vadd.f32 %v1484, %v1348
        %v1486 = vadd.f32 %v1485, %v1349
        %v1487 = vadd.f32 %v1486, %v1350
        %v1488 = vadd.f32 %v1487, %v1351
        %v1489 = vadd.f32 %v1488, %v1352
        %v1490 = vadd.f32 %v1489, %v1353
        %v1491 = vadd.f32 %v1490, %v1354
        %v1492 = vadd.f32 %v1491, %v1355
        %v1493 = vadd.f32 %v1492, %v1356
        %v1494 = vadd.f32 %v1493, %v1357
        %v1495 = vadd.f32 %v1494, %v1358
        %v1496 = vadd.f32 %v1495, %v1359
        %v1497 = vadd.f32 %v1496, %v1360
        %v1498 = vrot.slane %v1497, 4
        %v1499 = vadd.f32 %v1497, %v1498
        %v1500 = vrot.slane %v1499, 2
        %v1501 = vadd.f32 %v1499, %v1500
        %v1502 = vrot.slane %v1501, 1
        %v1503 = vadd.f32 %v1501, %v1502
        %v1504 = vmul.f32 %v1329, %v1329
        %v1505 = vmul.f32 %v1330, %v1330
        %v1506 = vmul.f32 %v1331, %v1331
        %v1507 = vmul.f32 %v1332, %v1332
        %v1508 = vmul.f32 %v1333, %v1333
        %v1509 = vmul.f32 %v1334, %v1334
        %v1510 = vmul.f32 %v1335, %v1335
        %v1511 = vmul.f32 %v1336, %v1336
        %v1512 = vmul.f32 %v1337, %v1337
        %v1513 = vmul.f32 %v1338, %v1338
        %v1514 = vmul.f32 %v1339, %v1339
        %v1515 = vmul.f32 %v1340, %v1340
        %v1516 = vmul.f32 %v1341, %v1341
        %v1517 = vmul.f32 %v1342, %v1342
        %v1518 = vmul.f32 %v1343, %v1343
        %v1519 = vmul.f32 %v1344, %v1344
        %v1520 = vmul.f32 %v1345, %v1345
        %v1521 = vmul.f32 %v1346, %v1346
        %v1522 = vmul.f32 %v1347, %v1347
        %v1523 = vmul.f32 %v1348, %v1348
        %v1524 = vmul.f32 %v1349, %v1349
        %v1525 = vmul.f32 %v1350, %v1350
        %v1526 = vmul.f32 %v1351, %v1351
        %v1527 = vmul.f32 %v1352, %v1352
        %v1528 = vmul.f32 %v1353, %v1353
        %v1529 = vmul.f32 %v1354, %v1354
        %v1530 = vmul.f32 %v1355, %v1355
        %v1531 = vmul.f32 %v1356, %v1356
        %v1532 = vmul.f32 %v1357, %v1357
        %v1533 = vmul.f32 %v1358, %v1358
        %v1534 = vmul.f32 %v1359, %v1359
        %v1535 = vmul.f32 %v1360, %v1360
        %v1536 = vadd.f32 %v1504, %v1505
        %v1537 = vadd.f32 %v1536, %v1506
        %v1538 = vadd.f32 %v1537, %v1507
        %v1539 = vadd.f32 %v1538, %v1508
        %v1540 = vadd.f32 %v1539, %v1509
        %v1541 = vadd.f32 %v1540, %v1510
        %v1542 = vadd.f32 %v1541, %v1511
        %v1543 = vadd.f32 %v1542, %v1512
        %v1544 = vadd.f32 %v1543, %v1513
        %v1545 = vadd.f32 %v1544, %v1514
        %v1546 = vadd.f32 %v1545, %v1515
        %v1547 = vadd.f32 %v1546, %v1516
        %v1548 = vadd.f32 %v1547, %v1517
        %v1549 = vadd.f32 %v1548, %v1518
        %v1550 = vadd.f32 %v1549, %v1519
        %v1551 = vadd.f32 %v1550, %v1520
        %v1552 = vadd.f32 %v1551, %v1521
        %v1553 = vadd.f32 %v1552, %v1522
        %v1554 = vadd.f32 %v1553, %v1523
        %v1555 = vadd.f32 %v1554, %v1524
        %v1556 = vadd.f32 %v1555, %v1525
        %v1557 = vadd.f32 %v1556, %v1526
        %v1558 = vadd.f32 %v1557, %v1527
        %v1559 = vadd.f32 %v1558, %v1528
        %v1560 = vadd.f32 %v1559, %v1529
        %v1561 = vadd.f32 %v1560, %v1530
        %v1562 = vadd.f32 %v1561, %v1531
        %v1563 = vadd.f32 %v1562, %v1532
        %v1564 = vadd.f32 %v1563, %v1533
        %v1565 = vadd.f32 %v1564, %v1534
        %v1566 = vadd.f32 %v1565, %v1535
        %v1567 = vrot.slane %v1566, 4
        %v1568 = vadd.f32 %v1566, %v1567
        %v1569 = vrot.slane %v1568, 2
        %v1570 = vadd.f32 %v1568, %v1569
        %v1571 = vrot.slane %v1570, 1
        %v1572 = vadd.f32 %v1570, %v1571
        %v1573 = vmul.f32 %v1140, %v1297
        %v1574 = vmul.f32 %v1145, %v1298
        %v1575 = vmul.f32 %v1150, %v1299
        %v1576 = vmul.f32 %v1155, %v1300
        %v1577 = vmul.f32 %v1160, %v1301
        %v1578 = vmul.f32 %v1165, %v1302
        %v1579 = vmul.f32 %v1170, %v1303
        %v1580 = vmul.f32 %v1175, %v1304
        %v1581 = vmul.f32 %v1180, %v1305
        %v1582 = vmul.f32 %v1185, %v1306
        %v1583 = vmul.f32 %v1190, %v1307
        %v1584 = vmul.f32 %v1195, %v1308
        %v1585 = vmul.f32 %v1200, %v1309
        %v1586 = vmul.f32 %v1205, %v1310
        %v1587 = vmul.f32 %v1210, %v1311
        %v1588 = vmul.f32 %v1215, %v1312
        %v1589 = vmul.f32 %v1220, %v1313
        %v1590 = vmul.f32 %v1225, %v1314
        %v1591 = vmul.f32 %v1230, %v1315
        %v1592 = vmul.f32 %v1235, %v1316
        %v1593 = vmul.f32 %v1240, %v1317
        %v1594 = vmul.f32 %v1245, %v1318
        %v1595 = vmul.f32 %v1250, %v1319
        %v1596 = vmul.f32 %v1255, %v1320
        %v1597 = vmul.f32 %v1260, %v1321
        %v1598 = vmul.f32 %v1265, %v1322
        %v1599 = vmul.f32 %v1270, %v1323
        %v1600 = vmul.f32 %v1275, %v1324
        %v1601 = vmul.f32 %v1280, %v1325
        %v1602 = vmul.f32 %v1285, %v1326
        %v1603 = vmul.f32 %v1290, %v1327
        %v1604 = vmul.f32 %v1295, %v1328
        %v1605 = vadd.f32 %v1573, %v1574
        %v1606 = vadd.f32 %v1605, %v1575
        %v1607 = vadd.f32 %v1606, %v1576
        %v1608 = vadd.f32 %v1607, %v1577
        %v1609 = vadd.f32 %v1608, %v1578
        %v1610 = vadd.f32 %v1609, %v1579
        %v1611 = vadd.f32 %v1610, %v1580
        %v1612 = vadd.f32 %v1611, %v1581
        %v1613 = vadd.f32 %v1612, %v1582
        %v1614 = vadd.f32 %v1613, %v1583
        %v1615 = vadd.f32 %v1614, %v1584
        %v1616 = vadd.f32 %v1615, %v1585
        %v1617 = vadd.f32 %v1616, %v1586
        %v1618 = vadd.f32 %v1617, %v1587
        %v1619 = vadd.f32 %v1618, %v1588
        %v1620 = vadd.f32 %v1619, %v1589
        %v1621 = vadd.f32 %v1620, %v1590
        %v1622 = vadd.f32 %v1621, %v1591
        %v1623 = vadd.f32 %v1622, %v1592
        %v1624 = vadd.f32 %v1623, %v1593
        %v1625 = vadd.f32 %v1624, %v1594
        %v1626 = vadd.f32 %v1625, %v1595
        %v1627 = vadd.f32 %v1626, %v1596
        %v1628 = vadd.f32 %v1627, %v1597
        %v1629 = vadd.f32 %v1628, %v1598
        %v1630 = vadd.f32 %v1629, %v1599
        %v1631 = vadd.f32 %v1630, %v1600
        %v1632 = vadd.f32 %v1631, %v1601
        %v1633 = vadd.f32 %v1632, %v1602
        %v1634 = vadd.f32 %v1633, %v1603
        %v1635 = vadd.f32 %v1634, %v1604
        %v1636 = vrot.slane %v1635, 4
        %v1637 = vadd.f32 %v1635, %v1636
        %v1638 = vrot.slane %v1637, 2
        %v1639 = vadd.f32 %v1637, %v1638
        %v1640 = vrot.slane %v1639, 1
        %v1641 = vadd.f32 %v1639, %v1640
        %v1642 = vsub.f32 1.0, %v1105
        %v1643 = vsub.f32 1.0, %v1106
        %v1644 = vsub.f32 1.0, %v1107
        %v1645 = vsub.f32 1.0, %v1108
        %v1646 = vsub.f32 1.0, %v1109
        %v1647 = vsub.f32 1.0, %v1110
        %v1648 = vsub.f32 1.0, %v1111
        %v1649 = vsub.f32 1.0, %v1112
        %v1650 = vsub.f32 1.0, %v1113
        %v1651 = vsub.f32 1.0, %v1114
        %v1652 = vsub.f32 1.0, %v1115
        %v1653 = vsub.f32 1.0, %v1116
        %v1654 = vsub.f32 1.0, %v1117
        %v1655 = vsub.f32 1.0, %v1118
        %v1656 = vsub.f32 1.0, %v1119
        %v1657 = vsub.f32 1.0, %v1120
        %v1658 = vsub.f32 1.0, %v1121
        %v1659 = vsub.f32 1.0, %v1122
        %v1660 = vsub.f32 1.0, %v1123
        %v1661 = vsub.f32 1.0, %v1124
        %v1662 = vsub.f32 1.0, %v1125
        %v1663 = vsub.f32 1.0, %v1126
        %v1664 = vsub.f32 1.0, %v1127
        %v1665 = vsub.f32 1.0, %v1128
        %v1666 = vsub.f32 1.0, %v1129
        %v1667 = vsub.f32 1.0, %v1130
        %v1668 = vsub.f32 1.0, %v1131
        %v1669 = vsub.f32 1.0, %v1132
        %v1670 = vsub.f32 1.0, %v1133
        %v1671 = vsub.f32 1.0, %v1134
        %v1672 = vsub.f32 1.0, %v1135
        %v1673 = vsub.f32 1.0, %v1136
        %1675 = vset.pattern.permute.xlu0 0
        %1676 = vperm.xlu0 %1675, %v1642
        %v1677 = vpop.permute.xlu0 %1676
        %1680 = vset.pattern.permute.xlu0 0
        %1681 = vperm.xlu0 %1680, %v1643
        %v1682 = vpop.permute.xlu0 %1681
        %1685 = vset.pattern.permute.xlu0 0
        %1686 = vperm.xlu0 %1685, %v1644
        %v1687 = vpop.permute.xlu0 %1686
        %1690 = vset.pattern.permute.xlu0 0
        %1691 = vperm.xlu0 %1690, %v1645
        %v1692 = vpop.permute.xlu0 %1691
        %1695 = vset.pattern.permute.xlu0 0
        %1696 = vperm.xlu0 %1695, %v1646
        %v1697 = vpop.permute.xlu0 %1696
        %1700 = vset.pattern.permute.xlu0 0
        %1701 = vperm.xlu0 %1700, %v1647
        %v1702 = vpop.permute.xlu0 %1701
        %1705 = vset.pattern.permute.xlu0 0
        %1706 = vperm.xlu0 %1705, %v1648
        %v1707 = vpop.permute.xlu0 %1706
        %1710 = vset.pattern.permute.xlu0 0
        %1711 = vperm.xlu0 %1710, %v1649
        %v1712 = vpop.permute.xlu0 %1711
        %1715 = vset.pattern.permute.xlu0 0
        %1716 = vperm.xlu0 %1715, %v1650
        %v1717 = vpop.permute.xlu0 %1716
        %1720 = vset.pattern.permute.xlu0 0
        %1721 = vperm.xlu0 %1720, %v1651
        %v1722 = vpop.permute.xlu0 %1721
        %1725 = vset.pattern.permute.xlu0 0
        %1726 = vperm.xlu0 %1725, %v1652
        %v1727 = vpop.permute.xlu0 %1726
        %1730 = vset.pattern.permute.xlu0 0
        %1731 = vperm.xlu0 %1730, %v1653
        %v1732 = vpop.permute.xlu0 %1731
        %1735 = vset.pattern.permute.xlu0 0
        %1736 = vperm.xlu0 %1735, %v1654
        %v1737 = vpop.permute.xlu0 %1736
        %1740 = vset.pattern.permute.xlu0 0
        %1741 = vperm.xlu0 %1740, %v1655
        %v1742 = vpop.permute.xlu0 %1741
        %1745 = vset.pattern.permute.xlu0 0
        %1746 = vperm.xlu0 %1745, %v1656
        %v1747 = vpop.permute.xlu0 %1746
        %1750 = vset.pattern.permute.xlu0 0
        %1751 = vperm.xlu0 %1750, %v1657
        %v1752 = vpop.permute.xlu0 %1751
        %1755 = vset.pattern.permute.xlu0 0
        %1756 = vperm.xlu0 %1755, %v1658
        %v1757 = vpop.permute.xlu0 %1756
        %1760 = vset.pattern.permute.xlu0 0
        %1761 = vperm.xlu0 %1760, %v1659
        %v1762 = vpop.permute.xlu0 %1761
        %1765 = vset.pattern.permute.xlu0 0
        %1766 = vperm.xlu0 %1765, %v1660
        %v1767 = vpop.permute.xlu0 %1766
        %1770 = vset.pattern.permute.xlu0 0
        %1771 = vperm.xlu0 %1770, %v1661
        %v1772 = vpop.permute.xlu0 %1771
        %1775 = vset.pattern.permute.xlu0 0
        %1776 = vperm.xlu0 %1775, %v1662
        %v1777 = vpop.permute.xlu0 %1776
        %1780 = vset.pattern.permute.xlu0 0
        %1781 = vperm.xlu0 %1780, %v1663
        %v1782 = vpop.permute.xlu0 %1781
        %1785 = vset.pattern.permute.xlu0 0
        %1786 = vperm.xlu0 %1785, %v1664
        %v1787 = vpop.permute.xlu0 %1786
        %1790 = vset.pattern.permute.xlu0 0
        %1791 = vperm.xlu0 %1790, %v1665
        %v1792 = vpop.permute.xlu0 %1791
        %1795 = vset.pattern.permute.xlu0 0
        %1796 = vperm.xlu0 %1795, %v1666
        %v1797 = vpop.permute.xlu0 %1796
        %1800 = vset.pattern.permute.xlu0 0
        %1801 = vperm.xlu0 %1800, %v1667
        %v1802 = vpop.permute.xlu0 %1801
        %1805 = vset.pattern.permute.xlu0 0
        %1806 = vperm.xlu0 %1805, %v1668
        %v1807 = vpop.permute.xlu0 %1806
        %1810 = vset.pattern.permute.xlu0 0
        %1811 = vperm.xlu0 %1810, %v1669
        %v1812 = vpop.permute.xlu0 %1811
        %1815 = vset.pattern.permute.xlu0 0
        %1816 = vperm.xlu0 %1815, %v1670
        %v1817 = vpop.permute.xlu0 %1816
        %1820 = vset.pattern.permute.xlu0 0
        %1821 = vperm.xlu0 %1820, %v1671
        %v1822 = vpop.permute.xlu0 %1821
        %1825 = vset.pattern.permute.xlu0 0
        %1826 = vperm.xlu0 %1825, %v1672
        %v1827 = vpop.permute.xlu0 %1826
        %1830 = vset.pattern.permute.xlu0 0
        %1831 = vperm.xlu0 %1830, %v1673
        %v1832 = vpop.permute.xlu0 %1831
        %v1834 = vmul.f32 %v1677, %v1329
        %v1835 = vmul.f32 %v1682, %v1330
        %v1836 = vmul.f32 %v1687, %v1331
        %v1837 = vmul.f32 %v1692, %v1332
        %v1838 = vmul.f32 %v1697, %v1333
        %v1839 = vmul.f32 %v1702, %v1334
        %v1840 = vmul.f32 %v1707, %v1335
        %v1841 = vmul.f32 %v1712, %v1336
        %v1842 = vmul.f32 %v1717, %v1337
        %v1843 = vmul.f32 %v1722, %v1338
        %v1844 = vmul.f32 %v1727, %v1339
        %v1845 = vmul.f32 %v1732, %v1340
        %v1846 = vmul.f32 %v1737, %v1341
        %v1847 = vmul.f32 %v1742, %v1342
        %v1848 = vmul.f32 %v1747, %v1343
        %v1849 = vmul.f32 %v1752, %v1344
        %v1850 = vmul.f32 %v1757, %v1345
        %v1851 = vmul.f32 %v1762, %v1346
        %v1852 = vmul.f32 %v1767, %v1347
        %v1853 = vmul.f32 %v1772, %v1348
        %v1854 = vmul.f32 %v1777, %v1349
        %v1855 = vmul.f32 %v1782, %v1350
        %v1856 = vmul.f32 %v1787, %v1351
        %v1857 = vmul.f32 %v1792, %v1352
        %v1858 = vmul.f32 %v1797, %v1353
        %v1859 = vmul.f32 %v1802, %v1354
        %v1860 = vmul.f32 %v1807, %v1355
        %v1861 = vmul.f32 %v1812, %v1356
        %v1862 = vmul.f32 %v1817, %v1357
        %v1863 = vmul.f32 %v1822, %v1358
        %v1864 = vmul.f32 %v1827, %v1359
        %v1865 = vmul.f32 %v1832, %v1360
        %v1866 = vadd.f32 %v1834, %v1835
        %v1867 = vadd.f32 %v1866, %v1836
        %v1868 = vadd.f32 %v1867, %v1837
        %v1869 = vadd.f32 %v1868, %v1838
        %v1870 = vadd.f32 %v1869, %v1839
        %v1871 = vadd.f32 %v1870, %v1840
        %v1872 = vadd.f32 %v1871, %v1841
        %v1873 = vadd.f32 %v1872, %v1842
        %v1874 = vadd.f32 %v1873, %v1843
        %v1875 = vadd.f32 %v1874, %v1844
        %v1876 = vadd.f32 %v1875, %v1845
        %v1877 = vadd.f32 %v1876, %v1846
        %v1878 = vadd.f32 %v1877, %v1847
        %v1879 = vadd.f32 %v1878, %v1848
        %v1880 = vadd.f32 %v1879, %v1849
        %v1881 = vadd.f32 %v1880, %v1850
        %v1882 = vadd.f32 %v1881, %v1851
        %v1883 = vadd.f32 %v1882, %v1852
        %v1884 = vadd.f32 %v1883, %v1853
        %v1885 = vadd.f32 %v1884, %v1854
        %v1886 = vadd.f32 %v1885, %v1855
        %v1887 = vadd.f32 %v1886, %v1856
        %v1888 = vadd.f32 %v1887, %v1857
        %v1889 = vadd.f32 %v1888, %v1858
        %v1890 = vadd.f32 %v1889, %v1859
        %v1891 = vadd.f32 %v1890, %v1860
        %v1892 = vadd.f32 %v1891, %v1861
        %v1893 = vadd.f32 %v1892, %v1862
        %v1894 = vadd.f32 %v1893, %v1863
        %v1895 = vadd.f32 %v1894, %v1864
        %v1896 = vadd.f32 %v1895, %v1865
        %v1897 = vrot.slane %v1896, 4
        %v1898 = vadd.f32 %v1896, %v1897
        %v1899 = vrot.slane %v1898, 2
        %v1900 = vadd.f32 %v1898, %v1899
        %v1901 = vrot.slane %v1900, 1
        %v1902 = vadd.f32 %v1900, %v1901
        %vm1903 = vcmask 1040384
        %v1904 = vsel %vm1903, %v1397, %v1466
        %vm1905 = vcmask 1041408
        %v1906 = vsel %vm1905, %v1904, %v1503
        %vm1907 = vcmask 1042432
        %v1908 = vsel %vm1907, %v1906, %v1572
        %vm1909 = vcmask 1043456
        %v1910 = vsel %vm1909, %v1908, %v1641
        %vm1911 = vcmask 1044480
        %v1912 = vsel %vm1911, %v1910, %v1902
        %vm1913 = vcmask 1045504
        %v1914 = vsel %vm1913, %v1912, 0.0
        %vm1915 = vcmask 1046528
        %v1916 = vsel %vm1915, %v1914, 0.0
        %1917 = vst [vmem:[%s327] sm:$0xff] %v1916
      $region44: #{pconv_layer_forward.2} parent=35 // pred_fallthru
        _
      %s1918 = smul.u32 32, %s21
      %p1919 = scmp.lt.s32.totalorder %s1918, 63
      %s1920 = scalar_select %p1919, %s1918, 63
      %s1921 = smul.addr %s1920, 8
      %s1922 = scalar_lea.vmem %s4, %s1921
      %p1923 = scmp.lt.s32.totalorder %s21, 1
      %s1924 = scalar_select %p1923, %s21, 1
      %s1925 = smul.addr %s1924, 8
      %s1926 = scalar_lea.vmem %s5, %s1925
      // Predicated region
      $region45: #{pconv_layer_forward.2} parent=35 // pred_check
        %p1927 = pneg %p153
      $region46: #{pconv_layer_forward.2} parent=35 // pred_check_branch
        %1929 = sbr.rel (%p1927) target = $region48
      $region47: #{pconv_layer_forward.2} parent=35 // pred_region
        %s1930 = smul.u32 32, %s21
      $region48: #{pconv_layer_forward.2} parent=35 // pred_fallthru
        _
      // Predicated region
      $region49: #{pconv_layer_forward.2} parent=35 // pred_check
        %p1931 = pneg %p179
      $region50: #{pconv_layer_forward.2} parent=35 // pred_check_branch
        %1933 = sbr.rel (%p1931) target = $region52
      $region51: #{pconv_layer_forward.2} parent=35 // pred_region
        _
      $region52: #{pconv_layer_forward.2} parent=35 // pred_fallthru
        _
    $region36: #{pconv_layer_forward.2} parent=5 // pred_fallthru
      _
    %p1934 = scmp.le.s32.totalorder 2, %s12
    // Predicated region
    $region53: #{pconv_layer_forward.2} parent=5 // pred_check
      %p1935 = pneg %p1934
    $region54: #{pconv_layer_forward.2} parent=5 // pred_check_branch
      %1937 = sbr.rel (%p1935) target = $region56
    $region55: #{pconv_layer_forward.2} parent=5 // pred_region
      %s1938 = ssub.s32 %s12, 2
      // Predicated region
      $region57: #{pconv_layer_forward.2} parent=55 // pred_check
        %p1939 = pneg %p159
      $region58: #{pconv_layer_forward.2} parent=55 // pred_check_branch
        %1941 = sbr.rel (%p1939) target = $region60
      $region59: #{pconv_layer_forward.2} parent=55 // pred_region
        %s1942 = smul.u32 32, %s23
        %p1943 = scmp.lt.s32.totalorder %s1942, 63
        %s1944 = scalar_select %p1943, %s1942, 63
        %s1945 = smul.addr %s1944, 8
        %s1946 = scalar_lea.vmem %s4, %s1945
      $region60: #{pconv_layer_forward.2} parent=55 // pred_fallthru
        _
      // Predicated region
      $region61: #{pconv_layer_forward.2} parent=55 // pred_check
        %p1947 = pneg %p185
      $region62: #{pconv_layer_forward.2} parent=55 // pred_check_branch
        %1949 = sbr.rel (%p1947) target = $region64
      $region63: #{pconv_layer_forward.2} parent=55 // pred_region
        %p1950 = scmp.lt.s32.totalorder %s23, 1
        %s1951 = scalar_select %p1950, %s23, 1
        %s1952 = smul.addr %s1951, 8
        %s1953 = scalar_lea.vmem %s5, %s1952
      $region64: #{pconv_layer_forward.2} parent=55 // pred_fallthru
        _
    $region56: #{pconv_layer_forward.2} parent=5 // pred_fallthru
      _
  $region6: #{pconv_layer_forward.2} parent=0 // loop_footer
    %s16 = sadd.s32 1, %s12
  $region7: #{pconv_layer_forward.2} parent=0 // loop_footer_branch
    %11 = sbr.rel target = $region3
  $region8: #{pconv_layer_forward.2} parent=0 // loop_exit
    _

</llo_original>
